<compile_context>
chip_gen: v6e
topology: v6e:2x2x1
jax: 0.10.0
libtpu: 0.0.40
codegen_flags: <defaults>
</compile_context>

<pallas_src>
import jax
import jax.numpy as jnp
from jax.experimental import pallas as pl
from jax.experimental.pallas import tpu as pltpu


def _conv_v1_kernel(x_ref, w1e_ref, w1o_ref, b1_ref, m2e_ref, m2o_ref, b2_ref,
                    wfc_ref, bfc_ref, out_ref):
    hp = jax.lax.Precision.HIGHEST
    x = x_ref[...]                                        # (bt, L*cin), batch on sublanes

    # conv1 at even / odd output positions (pool-1 parity) as two MXU matmuls.
    y1e = jnp.dot(x, w1e_ref[...], preferred_element_type=jnp.float32, precision=hp)
    y1o = jnp.dot(x, w1o_ref[...], preferred_element_type=jnp.float32, precision=hp)
    # max_pool1d(2) folded with the monotone tanh and the shared per-channel
    # bias: max(tanh(a+b), tanh(c+b)) == tanh(max(a, c) + b).
    p1 = jnp.tanh(jnp.maximum(y1e, y1o) + b1_ref[...])    # (bt, 5*Lp1), channel-stacked

    # pool-1-indexed conv2 at even / odd positions (pool-2 parity).
    y2e = jnp.dot(p1, m2e_ref[...], preferred_element_type=jnp.float32, precision=hp)
    y2o = jnp.dot(p1, m2o_ref[...], preferred_element_type=jnp.float32, precision=hp)
    p2 = jnp.tanh(jnp.maximum(y2e, y2o) + b2_ref[...])    # (bt, 5*Lp2), torch flatten order

    # dropout(p=0.25): identity at inference.
    # TODO(synk): training-mode dropout would use pltpu.prng_seed / prng_random_bits.

    out_ref[...] = (jnp.dot(p2, wfc_ref[...], preferred_element_type=jnp.float32,
                            precision=hp) + bfc_ref[...])  # (bt, 2)


def conv_v1_forward(x, w1, b1, w2, b2, wfc, bfc, *, b_tile=2048):
    """x: (B, L, 4) float32.  Weights in PyTorch layout:
       w1 (5, 4, k1), b1 (5,), w2 (5, 5, k2), b2 (5,), wfc (2, 5*Lp2), bfc (2,)."""
    f32 = jnp.float32
    B, L, cin = x.shape
    k1 = w1.shape[2]
    k2 = w2.shape[2]
    L1 = L - k1 + 1
    Lp1 = L1 // 2
    L2 = Lp1 - k2 + 1
    Lp2 = L2 // 2

    # Batch tile on the sublane axis.  Default 2048 (sweepable to 4096): the
    # per-step working set stays at a few MiB, comfortably under every
    # generation's VMEM (incl. v7x's 64 MiB / 32 MiB default scoped limit),
    # while amortizing the fixed per-grid-step cost.  Don't over-pad tiny B.
    bt = max(128, min(int(b_tile), ((B + 127) // 128) * 128))
    bt = ((bt + 127) // 128) * 128
    num_tiles = (B + bt - 1) // bt
    Bp = num_tiles * bt

    # Only wrapper-side prep: free contiguous reshape (and a pad only when B
    # is not a tile multiple).  No HBM transpose/relayout of x.
    x2d = x.astype(f32).reshape(B, L * cin)
    if Bp != B:
        x2d = jnp.pad(x2d, ((0, Bp - B), (0, 0)))

    # One-hot parity gather tensors; each refolded matrix entry has at most a
    # single nonzero term, so the fold itself is exact at any precision.
    def parity_onehot(kk, n_out, n_src, odd):
        k_idx = jnp.arange(kk)[:, None, None]
        p_idx = jnp.arange(n_out)[None, :, None]
        s_idx = jnp.arange(n_src)[None, None, :]
        return (s_idx == (2 * p_idx + odd + k_idx)).astype(f32)   # (k, p, src)

    w1f = w1.astype(f32)
    w2f = w2.astype(f32)

    # conv1 + pool-1 parity: W1*[l*cin + c, o*Lp1 + p] = w1[o, c, k], l = 2p(+1)+k
    E1e = parity_onehot(k1, Lp1, L, 0)
    E1o = parity_onehot(k1, Lp1, L, 1)
    W1e = jnp.einsum('ock,kpl->lcop', w1f, E1e).reshape(L * cin, 5 * Lp1)
    W1o = jnp.einsum('ock,kpl->lcop', w1f, E1o).reshape(L * cin, 5 * Lp1)

    # conv2 (on pooled-1 features) + pool-2 parity:
    # M2*[c*Lp1 + q, o*Lp2 + p] = w2[o, c, k], q = 2p(+1)+k
    E2e = parity_onehot(k2, Lp2, Lp1, 0)
    E2o = parity_onehot(k2, Lp2, Lp1, 1)
    M2e = jnp.einsum('ock,kpq->cqop', w2f, E2e).reshape(5 * Lp1, 5 * Lp2)
    M2o = jnp.einsum('ock,kpq->cqop', w2f, E2o).reshape(5 * Lp1, 5 * Lp2)

    b1row = jnp.repeat(b1.astype(f32), Lp1)[None, :]      # (1, 5*Lp1)
    b2row = jnp.repeat(b2.astype(f32), Lp2)[None, :]      # (1, 5*Lp2)
    wfc_t = wfc.astype(f32).T                             # (5*Lp2, 2): torch channel-major flatten
    bfcrow = bfc.astype(f32)[None, :]                     # (1, 2)

    out = pl.pallas_call(
        _conv_v1_kernel,
        grid=(num_tiles,),
        in_specs=[
            pl.BlockSpec((bt, L * cin), lambda t: (t, 0)),        # x batch tile
            pl.BlockSpec((L * cin, 5 * Lp1), lambda t: (0, 0)),   # conv1 even fold
            pl.BlockSpec((L * cin, 5 * Lp1), lambda t: (0, 0)),   # conv1 odd fold
            pl.BlockSpec((1, 5 * Lp1), lambda t: (0, 0)),         # bias1 row
            pl.BlockSpec((5 * Lp1, 5 * Lp2), lambda t: (0, 0)),   # conv2 even fold
            pl.BlockSpec((5 * Lp1, 5 * Lp2), lambda t: (0, 0)),   # conv2 odd fold
            pl.BlockSpec((1, 5 * Lp2), lambda t: (0, 0)),         # bias2 row
            pl.BlockSpec((5 * Lp2, 2), lambda t: (0, 0)),         # fc weight (transposed)
            pl.BlockSpec((1, 2), lambda t: (0, 0)),               # fc bias row
        ],
        out_specs=pl.BlockSpec((bt, 2), lambda t: (t, 0)),
        out_shape=jax.ShapeDtypeStruct((Bp, 2), jnp.float32),
        compiler_params=pltpu.CompilerParams(
            dimension_semantics=("parallel",)),
    )(x2d, W1e, W1o, b1row, M2e, M2o, b2row, wfc_t, bfcrow)

    return out[:B]                                        # (B, 2), no transpose needed


def conv_v1_reference(x, w1, b1, w2, b2, wfc, bfc):
    """Pure-JAX reference mirroring the PyTorch forward (eval mode)."""
    hp = jax.lax.Precision.HIGHEST
    B, L, Cin = x.shape
    k1 = w1.shape[2]
    k2 = w2.shape[2]
    xc = jnp.transpose(x, (0, 2, 1))                              # (B, 4, L)

    L1 = L - k1 + 1
    y1 = sum(jnp.einsum('bcl,oc->bol', xc[:, :, k:k + L1], w1[:, :, k], precision=hp)
             for k in range(k1))
    y1 = jnp.tanh(y1 + b1[None, :, None])
    Lp1 = L1 // 2
    y1 = jnp.max(y1[:, :, :2 * Lp1].reshape(B, 5, Lp1, 2), axis=-1)

    L2 = Lp1 - k2 + 1
    y2 = sum(jnp.einsum('bcl,oc->bol', y1[:, :, k:k + L2], w2[:, :, k], precision=hp)
             for k in range(k2))
    y2 = jnp.tanh(y2 + b2[None, :, None])
    Lp2 = L2 // 2
    y2 = jnp.max(y2[:, :, :2 * Lp2].reshape(B, 5, Lp2, 2), axis=-1)

    flat = y2.reshape(B, -1)                                      # torch .view order
    return jnp.dot(flat, wfc.T, precision=hp) + bfc[None, :]


if __name__ == "__main__":
    B, L, Cin = 2, 16, 4
    k1, k2 = 3, 3
    L1 = L - k1 + 1          # 14
    Lp1 = L1 // 2            # 7
    L2 = Lp1 - k2 + 1        # 5
    Lp2 = L2 // 2            # 2
    fc_in = 5 * Lp2          # 10

    key = jax.random.PRNGKey(0)
    kx, kw1, kb1, kw2, kb2, kwf, kbf, kx2 = jax.random.split(key, 8)
    x = jax.random.normal(kx, (B, L, Cin), dtype=jnp.float32)
    w1 = 0.3 * jax.random.normal(kw1, (5, Cin, k1), dtype=jnp.float32)
    b1 = 0.1 * jax.random.normal(kb1, (5,), dtype=jnp.float32)
    w2 = 0.3 * jax.random.normal(kw2, (5, 5, k2), dtype=jnp.float32)
    b2 = 0.1 * jax.random.normal(kb2, (5,), dtype=jnp.float32)
    wfc = 0.3 * jax.random.normal(kwf, (2, fc_in), dtype=jnp.float32)
    bfc = 0.1 * jax.random.normal(kbf, (2,), dtype=jnp.float32)

    # Small-batch check (single padded tile, default tile size).
    out = conv_v1_forward(x, w1, b1, w2, b2, wfc, bfc)
    jax.block_until_ready(out)
    ref = conv_v1_reference(x, w1, b1, w2, b2, wfc, bfc)
    assert out.shape == (B, 2)
    assert jnp.allclose(out, ref, atol=1e-4, rtol=1e-4), (out, ref)

    # Multi-tile / padded-batch check (3 grid steps with b_tile=128).
    B2 = 300
    x2 = jax.random.normal(kx2, (B2, L, Cin), dtype=jnp.float32)
    out2 = conv_v1_forward(x2, w1, b1, w2, b2, wfc, bfc, b_tile=128)
    jax.block_until_ready(out2)
    ref2 = conv_v1_reference(x2, w1, b1, w2, b2, wfc, bfc)
    assert out2.shape == (B2, 2)
    assert jnp.allclose(out2, ref2, atol=1e-4, rtol=1e-4)

    print("KERNEL_OK")
</pallas_src>

<mosaic_0001>
module attributes {stable_mosaic.version = 11 : i64} {
  func.func @_conv_v1_kernel(%arg0: i32, %arg1: memref<128x64xf32, #tpu.memory_space<vmem>>, %arg2: memref<64x35xf32, #tpu.memory_space<vmem>>, %arg3: memref<64x35xf32, #tpu.memory_space<vmem>>, %arg4: memref<1x35xf32, #tpu.memory_space<vmem>>, %arg5: memref<35x10xf32, #tpu.memory_space<vmem>>, %arg6: memref<35x10xf32, #tpu.memory_space<vmem>>, %arg7: memref<1x10xf32, #tpu.memory_space<vmem>>, %arg8: memref<10x2xf32, #tpu.memory_space<vmem>>, %arg9: memref<1x2xf32, #tpu.memory_space<vmem>>, %arg10: memref<128x2xf32, #tpu.memory_space<vmem>>) attributes {dimension_semantics = [#tpu.dimension_semantics<parallel>], iteration_bounds = array<i64: 1>, scalar_prefetch = 0 : i64, scratch_operands = 0 : i64, tpu.core_type = #tpu.core_type<tc>, window_params = [{transform_indices = @transform_0, window_bounds = array<i64: 128, 64>}, {pipeline_mode = #tpu.pipeline_mode<synchronous>, transform_indices = @transform_1, window_bounds = array<i64: 64, 35>}, {pipeline_mode = #tpu.pipeline_mode<synchronous>, transform_indices = @transform_2, window_bounds = array<i64: 64, 35>}, {pipeline_mode = #tpu.pipeline_mode<synchronous>, transform_indices = @transform_3, window_bounds = array<i64: 1, 35>}, {pipeline_mode = #tpu.pipeline_mode<synchronous>, transform_indices = @transform_4, window_bounds = array<i64: 35, 10>}, {pipeline_mode = #tpu.pipeline_mode<synchronous>, transform_indices = @transform_5, window_bounds = array<i64: 35, 10>}, {pipeline_mode = #tpu.pipeline_mode<synchronous>, transform_indices = @transform_6, window_bounds = array<i64: 1, 10>}, {pipeline_mode = #tpu.pipeline_mode<synchronous>, transform_indices = @transform_7, window_bounds = array<i64: 10, 2>}, {pipeline_mode = #tpu.pipeline_mode<synchronous>, transform_indices = @transform_8, window_bounds = array<i64: 1, 2>}, {transform_indices = @transform_9, window_bounds = array<i64: 128, 2>}]} {
    %c0 = arith.constant 0 : index
    %c0_0 = arith.constant 0 : index
    %0 = vector.load %arg1[%c0, %c0_0] : memref<128x64xf32, #tpu.memory_space<vmem>>, vector<128x64xf32>
    %c0_1 = arith.constant 0 : index
    %c0_2 = arith.constant 0 : index
    %1 = vector.load %arg2[%c0_1, %c0_2] : memref<64x35xf32, #tpu.memory_space<vmem>>, vector<64x35xf32>
    %cst = arith.constant dense<0.000000e+00> : vector<128x35xf32>
    %2 = tpu.matmul %0, %1, %cst {dimension_numbers = #tpu.dot_dimension_numbers<[1], [0], [0], [1], [0, 0, 1, 1], [], []>, precision = #tpu.contract_precision<fp32>} : vector<128x64xf32>, vector<64x35xf32>, vector<128x35xf32> -> vector<128x35xf32>
    %c0_3 = arith.constant 0 : index
    %c0_4 = arith.constant 0 : index
    %3 = vector.load %arg3[%c0_3, %c0_4] : memref<64x35xf32, #tpu.memory_space<vmem>>, vector<64x35xf32>
    %cst_5 = arith.constant dense<0.000000e+00> : vector<128x35xf32>
    %4 = tpu.matmul %0, %3, %cst_5 {dimension_numbers = #tpu.dot_dimension_numbers<[1], [0], [0], [1], [0, 0, 1, 1], [], []>, precision = #tpu.contract_precision<fp32>} : vector<128x64xf32>, vector<64x35xf32>, vector<128x35xf32> -> vector<128x35xf32>
    %5 = arith.maximumf %2, %4 : vector<128x35xf32>
    %c0_6 = arith.constant 0 : index
    %c0_7 = arith.constant 0 : index
    %6 = vector.load %arg4[%c0_6, %c0_7] : memref<1x35xf32, #tpu.memory_space<vmem>>, vector<1x35xf32>
    %7 = vector.broadcast %6 : vector<1x35xf32> to vector<128x35xf32>
    %8 = arith.addf %5, %7 : vector<128x35xf32>
    %9 = math.tanh %8 : vector<128x35xf32>
    %c0_8 = arith.constant 0 : index
    %c0_9 = arith.constant 0 : index
    %10 = vector.load %arg5[%c0_8, %c0_9] : memref<35x10xf32, #tpu.memory_space<vmem>>, vector<35x10xf32>
    %cst_10 = arith.constant dense<0.000000e+00> : vector<128x10xf32>
    %11 = tpu.matmul %9, %10, %cst_10 {dimension_numbers = #tpu.dot_dimension_numbers<[1], [0], [0], [1], [0, 0, 1, 1], [], []>, precision = #tpu.contract_precision<fp32>} : vector<128x35xf32>, vector<35x10xf32>, vector<128x10xf32> -> vector<128x10xf32>
    %c0_11 = arith.constant 0 : index
    %c0_12 = arith.constant 0 : index
    %12 = vector.load %arg6[%c0_11, %c0_12] : memref<35x10xf32, #tpu.memory_space<vmem>>, vector<35x10xf32>
    %cst_13 = arith.constant dense<0.000000e+00> : vector<128x10xf32>
    %13 = tpu.matmul %9, %12, %cst_13 {dimension_numbers = #tpu.dot_dimension_numbers<[1], [0], [0], [1], [0, 0, 1, 1], [], []>, precision = #tpu.contract_precision<fp32>} : vector<128x35xf32>, vector<35x10xf32>, vector<128x10xf32> -> vector<128x10xf32>
    %14 = arith.maximumf %11, %13 : vector<128x10xf32>
    %c0_14 = arith.constant 0 : index
    %c0_15 = arith.constant 0 : index
    %15 = vector.load %arg7[%c0_14, %c0_15] : memref<1x10xf32, #tpu.memory_space<vmem>>, vector<1x10xf32>
    %16 = vector.broadcast %15 : vector<1x10xf32> to vector<128x10xf32>
    %17 = arith.addf %14, %16 : vector<128x10xf32>
    %18 = math.tanh %17 : vector<128x10xf32>
    %c0_16 = arith.constant 0 : index
    %c0_17 = arith.constant 0 : index
    %19 = vector.load %arg8[%c0_16, %c0_17] : memref<10x2xf32, #tpu.memory_space<vmem>>, vector<10x2xf32>
    %cst_18 = arith.constant dense<0.000000e+00> : vector<128x2xf32>
    %20 = tpu.matmul %18, %19, %cst_18 {dimension_numbers = #tpu.dot_dimension_numbers<[1], [0], [0], [1], [0, 0, 1, 1], [], []>, precision = #tpu.contract_precision<fp32>} : vector<128x10xf32>, vector<10x2xf32>, vector<128x2xf32> -> vector<128x2xf32>
    %c0_19 = arith.constant 0 : index
    %c0_20 = arith.constant 0 : index
    %21 = vector.load %arg9[%c0_19, %c0_20] : memref<1x2xf32, #tpu.memory_space<vmem>>, vector<1x2xf32>
    %22 = vector.broadcast %21 : vector<1x2xf32> to vector<128x2xf32>
    %23 = arith.addf %20, %22 : vector<128x2xf32>
    %c0_21 = arith.constant 0 : index
    %c0_22 = arith.constant 0 : index
    %24 = vector.load %arg10[%c0_21, %c0_22] : memref<128x2xf32, #tpu.memory_space<vmem>>, vector<128x2xf32>
    tpu.vector_store %arg10[%c0_21, %c0_22], %23 {strides = array<i32>} : memref<128x2xf32, #tpu.memory_space<vmem>>, vector<128x2xf32>,
    return
  }
  func.func @transform_0(%arg0: i32) -> (i32, i32) {
    %c0_i32 = arith.constant 0 : i32
    %c0_i32_0 = arith.constant 0 : i32
    return %arg0, %c0_i32 : i32, i32
  }
  func.func @transform_1(%arg0: i32) -> (i32, i32) {
    %c0_i32 = arith.constant 0 : i32
    %c0_i32_0 = arith.constant 0 : i32
    %c0_i32_1 = arith.constant 0 : i32
    return %c0_i32, %c0_i32_0 : i32, i32
  }
  func.func @transform_2(%arg0: i32) -> (i32, i32) {
    %c0_i32 = arith.constant 0 : i32
    %c0_i32_0 = arith.constant 0 : i32
    %c0_i32_1 = arith.constant 0 : i32
    return %c0_i32, %c0_i32_0 : i32, i32
  }
  func.func @transform_3(%arg0: i32) -> (i32, i32) {
    %c0_i32 = arith.constant 0 : i32
    %c0_i32_0 = arith.constant 0 : i32
    %c0_i32_1 = arith.constant 0 : i32
    return %c0_i32, %c0_i32_0 : i32, i32
  }
  func.func @transform_4(%arg0: i32) -> (i32, i32) {
    %c0_i32 = arith.constant 0 : i32
    %c0_i32_0 = arith.constant 0 : i32
    %c0_i32_1 = arith.constant 0 : i32
    return %c0_i32, %c0_i32_0 : i32, i32
  }
  func.func @transform_5(%arg0: i32) -> (i32, i32) {
    %c0_i32 = arith.constant 0 : i32
    %c0_i32_0 = arith.constant 0 : i32
    %c0_i32_1 = arith.constant 0 : i32
    return %c0_i32, %c0_i32_0 : i32, i32
  }
  func.func @transform_6(%arg0: i32) -> (i32, i32) {
    %c0_i32 = arith.constant 0 : i32
    %c0_i32_0 = arith.constant 0 : i32
    %c0_i32_1 = arith.constant 0 : i32
    return %c0_i32, %c0_i32_0 : i32, i32
  }
  func.func @transform_7(%arg0: i32) -> (i32, i32) {
    %c0_i32 = arith.constant 0 : i32
    %c0_i32_0 = arith.constant 0 : i32
    %c0_i32_1 = arith.constant 0 : i32
    return %c0_i32, %c0_i32_0 : i32, i32
  }
  func.func @transform_8(%arg0: i32) -> (i32, i32) {
    %c0_i32 = arith.constant 0 : i32
    %c0_i32_0 = arith.constant 0 : i32
    %c0_i32_1 = arith.constant 0 : i32
    return %c0_i32, %c0_i32_0 : i32, i32
  }
  func.func @transform_9(%arg0: i32) -> (i32, i32) {
    %c0_i32 = arith.constant 0 : i32
    %c0_i32_0 = arith.constant 0 : i32
    return %arg0, %c0_i32 : i32, i32
  }
}

</mosaic_0001>

<llo_original>
// kernel: tpu_custom_call.1
$region0: #{tpu_custom_call.1}
  #allocation0 [shape = 'u32[]', space=smem, size = 0x4, offset = 0x4, fixed_abs, tag = 'smem constant byte address 0x4 - core index']
  #allocation1 [shape = 'u32[144,128]{1,0:T(1,128)}', space=vmem, size = 0x12000, scoped, tag = 'internal scratch']
  %s0 = inlined_call_operand.vmem [shape: f32[128,64], index: 0, kind: input, shape index: {}]
  %s1 = inlined_call_operand.vmem [shape: f32[64,35], index: 1, kind: input, shape index: {}]
  %s2 = inlined_call_operand.vmem [shape: f32[64,35], index: 2, kind: input, shape index: {}]
  %s3 = inlined_call_operand.vmem [shape: f32[1,35], index: 3, kind: input, shape index: {}]
  %s4 = inlined_call_operand.vmem [shape: f32[35,10], index: 4, kind: input, shape index: {}]
  %s5 = inlined_call_operand.vmem [shape: f32[35,10], index: 5, kind: input, shape index: {}]
  %s6 = inlined_call_operand.vmem [shape: f32[1,10], index: 6, kind: input, shape index: {}]
  %s7 = inlined_call_operand.vmem [shape: f32[10,2], index: 7, kind: input, shape index: {}]
  %s8 = inlined_call_operand.vmem [shape: f32[1,2], index: 8, kind: input, shape index: {}]
  %s9 = inlined_call_operand.vmem [shape: f32[128,2], index: 9, kind: output, shape index: {}]
  %s10 = sld [smem:[#allocation0]]
  $region46: #{tpu_custom_call.1} parent=0
    _
  %s12 = ssub.s32 1, %s10
  %s13 = scalar_select 0, %s12, %s10
  // Predicated region
  $region2: #{tpu_custom_call.1} parent=0 // pred_check
    _
  $region3: #{tpu_custom_call.1} parent=0 // pred_check_branch
    %15 = sbr.rel (0) target = $region5
  $region4: #{tpu_custom_call.1} parent=0 // pred_region
    _
  $region5: #{tpu_custom_call.1} parent=0 // pred_fallthru
    _
  // Predicated region
  $region6: #{tpu_custom_call.1} parent=0 // pred_check
    _
  $region7: #{tpu_custom_call.1} parent=0 // pred_check_branch
    %17 = sbr.rel (0) target = $region9
  $region8: #{tpu_custom_call.1} parent=0 // pred_region
    _
  $region9: #{tpu_custom_call.1} parent=0 // pred_fallthru
    _
  // Predicated region
  $region10: #{tpu_custom_call.1} parent=0 // pred_check
    _
  $region11: #{tpu_custom_call.1} parent=0 // pred_check_branch
    %19 = sbr.rel (0) target = $region13
  $region12: #{tpu_custom_call.1} parent=0 // pred_region
    _
  $region13: #{tpu_custom_call.1} parent=0 // pred_fallthru
    _
  // Predicated region
  $region14: #{tpu_custom_call.1} parent=0 // pred_check
    _
  $region15: #{tpu_custom_call.1} parent=0 // pred_check_branch
    %21 = sbr.rel (0) target = $region17
  $region16: #{tpu_custom_call.1} parent=0 // pred_region
    _
  $region17: #{tpu_custom_call.1} parent=0 // pred_fallthru
    _
  // Predicated region
  $region18: #{tpu_custom_call.1} parent=0 // pred_check
    _
  $region19: #{tpu_custom_call.1} parent=0 // pred_check_branch
    %23 = sbr.rel (0) target = $region21
  $region20: #{tpu_custom_call.1} parent=0 // pred_region
    _
  $region21: #{tpu_custom_call.1} parent=0 // pred_fallthru
    _
  // Predicated region
  $region22: #{tpu_custom_call.1} parent=0 // pred_check
    _
  $region23: #{tpu_custom_call.1} parent=0 // pred_check_branch
    %25 = sbr.rel (0) target = $region25
  $region24: #{tpu_custom_call.1} parent=0 // pred_region
    _
  $region25: #{tpu_custom_call.1} parent=0 // pred_fallthru
    _
  // Predicated region
  $region26: #{tpu_custom_call.1} parent=0 // pred_check
    _
  $region27: #{tpu_custom_call.1} parent=0 // pred_check_branch
    %27 = sbr.rel (0) target = $region29
  $region28: #{tpu_custom_call.1} parent=0 // pred_region
    _
  $region29: #{tpu_custom_call.1} parent=0 // pred_fallthru
    _
  // Predicated region
  $region30: #{tpu_custom_call.1} parent=0 // pred_check
    _
  $region31: #{tpu_custom_call.1} parent=0 // pred_check_branch
    %29 = sbr.rel (0) target = $region33
  $region32: #{tpu_custom_call.1} parent=0 // pred_region
    _
  $region33: #{tpu_custom_call.1} parent=0 // pred_fallthru
    _
  // Predicated region
  $region34: #{tpu_custom_call.1} parent=0 // pred_check
    _
  $region35: #{tpu_custom_call.1} parent=0 // pred_check_branch
    %31 = sbr.rel (0) target = $region37
  $region36: #{tpu_custom_call.1} parent=0 // pred_region
    _
  $region37: #{tpu_custom_call.1} parent=0 // pred_fallthru
    _
  %v32 = vld [vmem:[%s0] sm:$0xff]
  %v33 = vld [vmem:[%s0 + $0x8] sm:$0xff]
  %v34 = vld [vmem:[%s0 + $0x10] sm:$0xff]
  %v35 = vld [vmem:[%s0 + $0x18] sm:$0xff]
  %v36 = vld [vmem:[%s0 + $0x20] sm:$0xff]
  %v37 = vld [vmem:[%s0 + $0x28] sm:$0xff]
  %v38 = vld [vmem:[%s0 + $0x30] sm:$0xff]
  %v39 = vld [vmem:[%s0 + $0x38] sm:$0xff]
  %v40 = vld [vmem:[%s0 + $0x40] sm:$0xff]
  %v41 = vld [vmem:[%s0 + $0x48] sm:$0xff]
  %v42 = vld [vmem:[%s0 + $0x50] sm:$0xff]
  %v43 = vld [vmem:[%s0 + $0x58] sm:$0xff]
  %v44 = vld [vmem:[%s0 + $0x60] sm:$0xff]
  %v45 = vld [vmem:[%s0 + $0x68] sm:$0xff]
  %v46 = vld [vmem:[%s0 + $0x70] sm:$0xff]
  %v47 = vld [vmem:[%s0 + $0x78] sm:$0xff]
  %v48 = vld [vmem:[%s1] sm:$0xff]
  %v49 = vld [vmem:[%s1 + $0x8] sm:$0xff]
  %v50 = vld [vmem:[%s1 + $0x10] sm:$0xff]
  %v51 = vld [vmem:[%s1 + $0x18] sm:$0xff]
  %v52 = vld [vmem:[%s1 + $0x20] sm:$0xff]
  %v53 = vld [vmem:[%s1 + $0x28] sm:$0xff]
  %v54 = vld [vmem:[%s1 + $0x30] sm:$0xff]
  %v55 = vld [vmem:[%s1 + $0x38] sm:$0xff]
  %vm56 = vcmask 523264
  %v58 = vsel %vm56, %v32, 0
  %v61 = vsel %vm56, %v33, 0
  %v64 = vsel %vm56, %v34, 0
  %v67 = vsel %vm56, %v35, 0
  %v70 = vsel %vm56, %v36, 0
  %v73 = vsel %vm56, %v37, 0
  %v76 = vsel %vm56, %v38, 0
  %v79 = vsel %vm56, %v39, 0
  %v82 = vsel %vm56, %v40, 0
  %v85 = vsel %vm56, %v41, 0
  %v88 = vsel %vm56, %v42, 0
  %v91 = vsel %vm56, %v43, 0
  %v94 = vsel %vm56, %v44, 0
  %v97 = vsel %vm56, %v45, 0
  %v100 = vsel %vm56, %v46, 0
  %v103 = vsel %vm56, %v47, 0
  %105 = vmatprep.subr.mxu0 0.0
  %106 = vmatpush1.msra.mxu0 0.0
  %107 = vmatprep.subr.mxu0 0.0
  %108 = vmatpush1.msra.mxu0 0.0
  %109 = vmatprep.subr.mxu0 0.0
  %110 = vmatpush1.msra.mxu0 0.0
  %111 = vmatprep.subr.mxu0 0.0
  %112 = vmatpush1.msra.mxu0 0.0
  %113 = vmatprep.subr.mxu0 0.0
  %114 = vmatpush1.msra.mxu0 0.0
  %115 = vmatprep.subr.mxu0 0.0
  %116 = vmatpush1.msra.mxu0 0.0
  %117 = vmatprep.subr.mxu0 0.0
  %118 = vmatpush1.msra.mxu0 0.0
  %119 = vmatprep.subr.mxu0 0.0
  %120 = vmatpush1.msra.mxu0 0.0
  %121 = vmatprep.subr.mxu0 0.0
  %v122 = vand.u32 %v55, 4294901760
  %123 = vmatpush1.msra.mxu0 %v122
  %124 = vmatprep.subr.mxu0 0.0
  %v125 = vand.u32 %v54, 4294901760
  %126 = vmatpush1.msra.mxu0 %v125
  %127 = vmatprep.subr.mxu0 0.0
  %v128 = vand.u32 %v53, 4294901760
  %129 = vmatpush1.msra.mxu0 %v128
  %130 = vmatprep.subr.mxu0 0.0
  %v131 = vand.u32 %v52, 4294901760
  %132 = vmatpush1.msra.mxu0 %v131
  %133 = vmatprep.subr.mxu0 0.0
  %v134 = vand.u32 %v51, 4294901760
  %135 = vmatpush1.msra.mxu0 %v134
  %136 = vmatprep.subr.mxu0 0.0
  %v137 = vand.u32 %v50, 4294901760
  %138 = vmatpush1.msra.mxu0 %v137
  %139 = vmatprep.subr.mxu0 0.0
  %v140 = vand.u32 %v49, 4294901760
  %141 = vmatpush1.msra.mxu0 %v140
  %142 = vmatprep.subr.mxu0 0.0
  %v143 = vand.u32 %v48, 4294901760
  %144 = vmatpush1.msra.mxu0 %v143
  %145 = vmatprep.subr.mxu0 0.0
  %146 = vmatpush2.msra.mxu0 0.0
  %147 = vmatprep.subr.mxu0 0.0
  %148 = vmatpush2.msra.mxu0 0.0
  %149 = vmatprep.subr.mxu0 0.0
  %150 = vmatpush2.msra.mxu0 0.0
  %151 = vmatprep.subr.mxu0 0.0
  %152 = vmatpush2.msra.mxu0 0.0
  %153 = vmatprep.subr.mxu0 0.0
  %154 = vmatpush2.msra.mxu0 0.0
  %155 = vmatprep.subr.mxu0 0.0
  %156 = vmatpush2.msra.mxu0 0.0
  %157 = vmatprep.subr.mxu0 0.0
  %158 = vmatpush2.msra.mxu0 0.0
  %159 = vmatprep.subr.mxu0 0.0
  %160 = vmatpush2.msra.mxu0 0.0
  %161 = vmatprep.subr.mxu0 0.0
  %162 = vmatpush2.msra.mxu0 0.0
  %163 = vmatprep.subr.mxu0 0.0
  %164 = vmatpush2.msra.mxu0 0.0
  %165 = vmatprep.subr.mxu0 0.0
  %166 = vmatpush2.msra.mxu0 0.0
  %167 = vmatprep.subr.mxu0 0.0
  %168 = vmatpush2.msra.mxu0 0.0
  %169 = vmatprep.subr.mxu0 0.0
  %170 = vmatpush2.msra.mxu0 0.0
  %171 = vmatprep.subr.mxu0 0.0
  %172 = vmatpush2.msra.mxu0 0.0
  %173 = vmatprep.subr.mxu0 0.0
  %174 = vmatpush2.msra.mxu0 0.0
  %175 = vmatprep.subr.mxu0 0.0
  %176 = vmatpush2.msra.mxu0 0.0
  %177 = vmatprep.mubr.f32.mxu0 0.0
  %v178 = vand.u32 %v58, 4294901760
  %v179 = vsub.f32 %v58, %v178
  %v180 = vand.u32 %v179, 4294901760
  %v181 = vsub.f32 %v179, %v180
  %v182 = vand.u32 %v181, 4294901760
  %183 = vmatmul.mubr.f32.gmra.mxu0 %v182
  %v184 = vpop.f32.mrf.mxu0
  %v185 = vadd.f32 0.0, %v184
  %v186 = vpop.f32.mrf.mxu0
  %187 = vmatprep.mubr.f32.mxu0 0.0
  %v188 = vand.u32 %v61, 4294901760
  %v189 = vsub.f32 %v61, %v188
  %v190 = vand.u32 %v189, 4294901760
  %v191 = vsub.f32 %v189, %v190
  %v192 = vand.u32 %v191, 4294901760
  %193 = vmatmul.mubr.f32.gmra.mxu0 %v192
  %v194 = vpop.f32.mrf.mxu0
  %v195 = vadd.f32 0.0, %v194
  %v196 = vpop.f32.mrf.mxu0
  %197 = vmatprep.mubr.f32.mxu0 0.0
  %v198 = vand.u32 %v64, 4294901760
  %v199 = vsub.f32 %v64, %v198
  %v200 = vand.u32 %v199, 4294901760
  %v201 = vsub.f32 %v199, %v200
  %v202 = vand.u32 %v201, 4294901760
  %203 = vmatmul.mubr.f32.gmra.mxu0 %v202
  %v204 = vpop.f32.mrf.mxu0
  %v205 = vadd.f32 0.0, %v204
  %v206 = vpop.f32.mrf.mxu0
  %207 = vmatprep.mubr.f32.mxu0 0.0
  %v208 = vand.u32 %v67, 4294901760
  %v209 = vsub.f32 %v67, %v208
  %v210 = vand.u32 %v209, 4294901760
  %v211 = vsub.f32 %v209, %v210
  %v212 = vand.u32 %v211, 4294901760
  %213 = vmatmul.mubr.f32.gmra.mxu0 %v212
  %v214 = vpop.f32.mrf.mxu0
  %v215 = vadd.f32 0.0, %v214
  %v216 = vpop.f32.mrf.mxu0
  %217 = vmatprep.mubr.f32.mxu0 0.0
  %v218 = vand.u32 %v70, 4294901760
  %v219 = vsub.f32 %v70, %v218
  %v220 = vand.u32 %v219, 4294901760
  %v221 = vsub.f32 %v219, %v220
  %v222 = vand.u32 %v221, 4294901760
  %223 = vmatmul.mubr.f32.gmra.mxu0 %v222
  %v224 = vpop.f32.mrf.mxu0
  %v225 = vadd.f32 0.0, %v224
  %v226 = vpop.f32.mrf.mxu0
  %227 = vmatprep.mubr.f32.mxu0 0.0
  %v228 = vand.u32 %v73, 4294901760
  %v229 = vsub.f32 %v73, %v228
  %v230 = vand.u32 %v229, 4294901760
  %v231 = vsub.f32 %v229, %v230
  %v232 = vand.u32 %v231, 4294901760
  %233 = vmatmul.mubr.f32.gmra.mxu0 %v232
  %v234 = vpop.f32.mrf.mxu0
  %v235 = vadd.f32 0.0, %v234
  %v236 = vpop.f32.mrf.mxu0
  %237 = vmatprep.mubr.f32.mxu0 0.0
  %v238 = vand.u32 %v76, 4294901760
  %v239 = vsub.f32 %v76, %v238
  %v240 = vand.u32 %v239, 4294901760
  %v241 = vsub.f32 %v239, %v240
  %v242 = vand.u32 %v241, 4294901760
  %243 = vmatmul.mubr.f32.gmra.mxu0 %v242
  %v244 = vpop.f32.mrf.mxu0
  %v245 = vadd.f32 0.0, %v244
  %v246 = vpop.f32.mrf.mxu0
  %247 = vmatprep.mubr.f32.mxu0 0.0
  %v248 = vand.u32 %v79, 4294901760
  %v249 = vsub.f32 %v79, %v248
  %v250 = vand.u32 %v249, 4294901760
  %v251 = vsub.f32 %v249, %v250
  %v252 = vand.u32 %v251, 4294901760
  %253 = vmatmul.mubr.f32.gmra.mxu0 %v252
  %v254 = vpop.f32.mrf.mxu0
  %v255 = vadd.f32 0.0, %v254
  %v256 = vpop.f32.mrf.mxu0
  %257 = vmatprep.mubr.f32.mxu0 0.0
  %v258 = vand.u32 %v82, 4294901760
  %v259 = vsub.f32 %v82, %v258
  %v260 = vand.u32 %v259, 4294901760
  %v261 = vsub.f32 %v259, %v260
  %v262 = vand.u32 %v261, 4294901760
  %263 = vmatmul.mubr.f32.gmra.mxu0 %v262
  %v264 = vpop.f32.mrf.mxu0
  %v265 = vadd.f32 0.0, %v264
  %v266 = vpop.f32.mrf.mxu0
  %267 = vmatprep.mubr.f32.mxu0 0.0
  %v268 = vand.u32 %v85, 4294901760
  %v269 = vsub.f32 %v85, %v268
  %v270 = vand.u32 %v269, 4294901760
  %v271 = vsub.f32 %v269, %v270
  %v272 = vand.u32 %v271, 4294901760
  %273 = vmatmul.mubr.f32.gmra.mxu0 %v272
  %v274 = vpop.f32.mrf.mxu0
  %v275 = vadd.f32 0.0, %v274
  %v276 = vpop.f32.mrf.mxu0
  %277 = vmatprep.mubr.f32.mxu0 0.0
  %v278 = vand.u32 %v88, 4294901760
  %v279 = vsub.f32 %v88, %v278
  %v280 = vand.u32 %v279, 4294901760
  %v281 = vsub.f32 %v279, %v280
  %v282 = vand.u32 %v281, 4294901760
  %283 = vmatmul.mubr.f32.gmra.mxu0 %v282
  %v284 = vpop.f32.mrf.mxu0
  %v285 = vadd.f32 0.0, %v284
  %v286 = vpop.f32.mrf.mxu0
  %287 = vmatprep.mubr.f32.mxu0 0.0
  %v288 = vand.u32 %v91, 4294901760
  %v289 = vsub.f32 %v91, %v288
  %v290 = vand.u32 %v289, 4294901760
  %v291 = vsub.f32 %v289, %v290
  %v292 = vand.u32 %v291, 4294901760
  %293 = vmatmul.mubr.f32.gmra.mxu0 %v292
  %v294 = vpop.f32.mrf.mxu0
  %v295 = vadd.f32 0.0, %v294
  %v296 = vpop.f32.mrf.mxu0
  %297 = vmatprep.mubr.f32.mxu0 0.0
  %v298 = vand.u32 %v94, 4294901760
  %v299 = vsub.f32 %v94, %v298
  %v300 = vand.u32 %v299, 4294901760
  %v301 = vsub.f32 %v299, %v300
  %v302 = vand.u32 %v301, 4294901760
  %303 = vmatmul.mubr.f32.gmra.mxu0 %v302
  %v304 = vpop.f32.mrf.mxu0
  %v305 = vadd.f32 0.0, %v304
  %v306 = vpop.f32.mrf.mxu0
  %307 = vmatprep.mubr.f32.mxu0 0.0
  %v308 = vand.u32 %v97, 4294901760
  %v309 = vsub.f32 %v97, %v308
  %v310 = vand.u32 %v309, 4294901760
  %v311 = vsub.f32 %v309, %v310
  %v312 = vand.u32 %v311, 4294901760
  %313 = vmatmul.mubr.f32.gmra.mxu0 %v312
  %v314 = vpop.f32.mrf.mxu0
  %v315 = vadd.f32 0.0, %v314
  %v316 = vpop.f32.mrf.mxu0
  %317 = vmatprep.mubr.f32.mxu0 0.0
  %v318 = vand.u32 %v100, 4294901760
  %v319 = vsub.f32 %v100, %v318
  %v320 = vand.u32 %v319, 4294901760
  %v321 = vsub.f32 %v319, %v320
  %v322 = vand.u32 %v321, 4294901760
  %323 = vmatmul.mubr.f32.gmra.mxu0 %v322
  %v324 = vpop.f32.mrf.mxu0
  %v325 = vadd.f32 0.0, %v324
  %v326 = vpop.f32.mrf.mxu0
  %327 = vmatprep.mubr.f32.mxu0 0.0
  %v328 = vand.u32 %v103, 4294901760
  %v329 = vsub.f32 %v103, %v328
  %v330 = vand.u32 %v329, 4294901760
  %v331 = vsub.f32 %v329, %v330
  %v332 = vand.u32 %v331, 4294901760
  %333 = vmatmul.mubr.f32.gmra.mxu0 %v332
  %v334 = vpop.f32.mrf.mxu0
  %v335 = vadd.f32 0.0, %v334
  %v336 = vpop.f32.mrf.mxu0
  %337 = vdwg.mxu0
  %338 = vmatprep.subr.mxu0 0.0
  %339 = vmatpush1.msra.mxu0 0.0
  %340 = vmatprep.subr.mxu0 0.0
  %341 = vmatpush1.msra.mxu0 0.0
  %342 = vmatprep.subr.mxu0 0.0
  %343 = vmatpush1.msra.mxu0 0.0
  %344 = vmatprep.subr.mxu0 0.0
  %345 = vmatpush1.msra.mxu0 0.0
  %346 = vmatprep.subr.mxu0 0.0
  %347 = vmatpush1.msra.mxu0 0.0
  %348 = vmatprep.subr.mxu0 0.0
  %349 = vmatpush1.msra.mxu0 0.0
  %350 = vmatprep.subr.mxu0 0.0
  %351 = vmatpush1.msra.mxu0 0.0
  %352 = vmatprep.subr.mxu0 0.0
  %353 = vmatpush1.msra.mxu0 0.0
  %354 = vmatprep.subr.mxu0 0.0
  %v355 = vand.u32 %v55, 4294901760
  %v356 = vsub.f32 %v55, %v355
  %v357 = vand.u32 %v356, 4294901760
  %v358 = vsub.f32 %v356, %v357
  %v359 = vand.u32 %v358, 4294901760
  %360 = vmatpush1.msra.mxu0 %v359
  %361 = vmatprep.subr.mxu0 0.0
  %v362 = vand.u32 %v54, 4294901760
  %v363 = vsub.f32 %v54, %v362
  %v364 = vand.u32 %v363, 4294901760
  %v365 = vsub.f32 %v363, %v364
  %v366 = vand.u32 %v365, 4294901760
  %367 = vmatpush1.msra.mxu0 %v366
  %368 = vmatprep.subr.mxu0 0.0
  %v369 = vand.u32 %v53, 4294901760
  %v370 = vsub.f32 %v53, %v369
  %v371 = vand.u32 %v370, 4294901760
  %v372 = vsub.f32 %v370, %v371
  %v373 = vand.u32 %v372, 4294901760
  %374 = vmatpush1.msra.mxu0 %v373
  %375 = vmatprep.subr.mxu0 0.0
  %v376 = vand.u32 %v52, 4294901760
  %v377 = vsub.f32 %v52, %v376
  %v378 = vand.u32 %v377, 4294901760
  %v379 = vsub.f32 %v377, %v378
  %v380 = vand.u32 %v379, 4294901760
  %381 = vmatpush1.msra.mxu0 %v380
  %382 = vmatprep.subr.mxu0 0.0
  %v383 = vand.u32 %v51, 4294901760
  %v384 = vsub.f32 %v51, %v383
  %v385 = vand.u32 %v384, 4294901760
  %v386 = vsub.f32 %v384, %v385
  %v387 = vand.u32 %v386, 4294901760
  %388 = vmatpush1.msra.mxu0 %v387
  %389 = vmatprep.subr.mxu0 0.0
  %v390 = vand.u32 %v50, 4294901760
  %v391 = vsub.f32 %v50, %v390
  %v392 = vand.u32 %v391, 4294901760
  %v393 = vsub.f32 %v391, %v392
  %v394 = vand.u32 %v393, 4294901760
  %395 = vmatpush1.msra.mxu0 %v394
  %396 = vmatprep.subr.mxu0 0.0
  %v397 = vand.u32 %v49, 4294901760
  %v398 = vsub.f32 %v49, %v397
  %v399 = vand.u32 %v398, 4294901760
  %v400 = vsub.f32 %v398, %v399
  %v401 = vand.u32 %v400, 4294901760
  %402 = vmatpush1.msra.mxu0 %v401
  %403 = vmatprep.subr.mxu0 0.0
  %v404 = vand.u32 %v48, 4294901760
  %v405 = vsub.f32 %v48, %v404
  %v406 = vand.u32 %v405, 4294901760
  %v407 = vsub.f32 %v405, %v406
  %v408 = vand.u32 %v407, 4294901760
  %409 = vmatpush1.msra.mxu0 %v408
  %410 = vmatprep.subr.mxu0 0.0
  %411 = vmatpush2.msra.mxu0 0.0
  %412 = vmatprep.subr.mxu0 0.0
  %413 = vmatpush2.msra.mxu0 0.0
  %414 = vmatprep.subr.mxu0 0.0
  %415 = vmatpush2.msra.mxu0 0.0
  %416 = vmatprep.subr.mxu0 0.0
  %417 = vmatpush2.msra.mxu0 0.0
  %418 = vmatprep.subr.mxu0 0.0
  %419 = vmatpush2.msra.mxu0 0.0
  %420 = vmatprep.subr.mxu0 0.0
  %421 = vmatpush2.msra.mxu0 0.0
  %422 = vmatprep.subr.mxu0 0.0
  %423 = vmatpush2.msra.mxu0 0.0
  %424 = vmatprep.subr.mxu0 0.0
  %425 = vmatpush2.msra.mxu0 0.0
  %426 = vmatprep.subr.mxu0 0.0
  %427 = vmatpush2.msra.mxu0 0.0
  %428 = vmatprep.subr.mxu0 0.0
  %429 = vmatpush2.msra.mxu0 0.0
  %430 = vmatprep.subr.mxu0 0.0
  %431 = vmatpush2.msra.mxu0 0.0
  %432 = vmatprep.subr.mxu0 0.0
  %433 = vmatpush2.msra.mxu0 0.0
  %434 = vmatprep.subr.mxu0 0.0
  %435 = vmatpush2.msra.mxu0 0.0
  %436 = vmatprep.subr.mxu0 0.0
  %437 = vmatpush2.msra.mxu0 0.0
  %438 = vmatprep.subr.mxu0 0.0
  %439 = vmatpush2.msra.mxu0 0.0
  %440 = vmatprep.subr.mxu0 0.0
  %441 = vmatpush2.msra.mxu0 0.0
  %442 = vmatprep.mubr.f32.mxu0 0.0
  %v443 = vand.u32 %v58, 4294901760
  %444 = vmatmul.mubr.f32.gmra.mxu0 %v443
  %v445 = vpop.f32.mrf.mxu0
  %v446 = vadd.f32 %v185, %v445
  %v447 = vpop.f32.mrf.mxu0
  %448 = vmatprep.mubr.f32.mxu0 0.0
  %v449 = vand.u32 %v61, 4294901760
  %450 = vmatmul.mubr.f32.gmra.mxu0 %v449
  %v451 = vpop.f32.mrf.mxu0
  %v452 = vadd.f32 %v195, %v451
  %v453 = vpop.f32.mrf.mxu0
  %454 = vmatprep.mubr.f32.mxu0 0.0
  %v455 = vand.u32 %v64, 4294901760
  %456 = vmatmul.mubr.f32.gmra.mxu0 %v455
  %v457 = vpop.f32.mrf.mxu0
  %v458 = vadd.f32 %v205, %v457
  %v459 = vpop.f32.mrf.mxu0
  %460 = vmatprep.mubr.f32.mxu0 0.0
  %v461 = vand.u32 %v67, 4294901760
  %462 = vmatmul.mubr.f32.gmra.mxu0 %v461
  %v463 = vpop.f32.mrf.mxu0
  %v464 = vadd.f32 %v215, %v463
  %v465 = vpop.f32.mrf.mxu0
  %466 = vmatprep.mubr.f32.mxu0 0.0
  %v467 = vand.u32 %v70, 4294901760
  %468 = vmatmul.mubr.f32.gmra.mxu0 %v467
  %v469 = vpop.f32.mrf.mxu0
  %v470 = vadd.f32 %v225, %v469
  %v471 = vpop.f32.mrf.mxu0
  %472 = vmatprep.mubr.f32.mxu0 0.0
  %v473 = vand.u32 %v73, 4294901760
  %474 = vmatmul.mubr.f32.gmra.mxu0 %v473
  %v475 = vpop.f32.mrf.mxu0
  %v476 = vadd.f32 %v235, %v475
  %v477 = vpop.f32.mrf.mxu0
  %478 = vmatprep.mubr.f32.mxu0 0.0
  %v479 = vand.u32 %v76, 4294901760
  %480 = vmatmul.mubr.f32.gmra.mxu0 %v479
  %v481 = vpop.f32.mrf.mxu0
  %v482 = vadd.f32 %v245, %v481
  %v483 = vpop.f32.mrf.mxu0
  %484 = vmatprep.mubr.f32.mxu0 0.0
  %v485 = vand.u32 %v79, 4294901760
  %486 = vmatmul.mubr.f32.gmra.mxu0 %v485
  %v487 = vpop.f32.mrf.mxu0
  %v488 = vadd.f32 %v255, %v487
  %v489 = vpop.f32.mrf.mxu0
  %490 = vmatprep.mubr.f32.mxu0 0.0
  %v491 = vand.u32 %v82, 4294901760
  %492 = vmatmul.mubr.f32.gmra.mxu0 %v491
  %v493 = vpop.f32.mrf.mxu0
  %v494 = vadd.f32 %v265, %v493
  %v495 = vpop.f32.mrf.mxu0
  %496 = vmatprep.mubr.f32.mxu0 0.0
  %v497 = vand.u32 %v85, 4294901760
  %498 = vmatmul.mubr.f32.gmra.mxu0 %v497
  %v499 = vpop.f32.mrf.mxu0
  %v500 = vadd.f32 %v275, %v499
  %v501 = vpop.f32.mrf.mxu0
  %502 = vmatprep.mubr.f32.mxu0 0.0
  %v503 = vand.u32 %v88, 4294901760
  %504 = vmatmul.mubr.f32.gmra.mxu0 %v503
  %v505 = vpop.f32.mrf.mxu0
  %v506 = vadd.f32 %v285, %v505
  %v507 = vpop.f32.mrf.mxu0
  %508 = vmatprep.mubr.f32.mxu0 0.0
  %v509 = vand.u32 %v91, 4294901760
  %510 = vmatmul.mubr.f32.gmra.mxu0 %v509
  %v511 = vpop.f32.mrf.mxu0
  %v512 = vadd.f32 %v295, %v511
  %v513 = vpop.f32.mrf.mxu0
  %514 = vmatprep.mubr.f32.mxu0 0.0
  %v515 = vand.u32 %v94, 4294901760
  %516 = vmatmul.mubr.f32.gmra.mxu0 %v515
  %v517 = vpop.f32.mrf.mxu0
  %v518 = vadd.f32 %v305, %v517
  %v519 = vpop.f32.mrf.mxu0
  %520 = vmatprep.mubr.f32.mxu0 0.0
  %v521 = vand.u32 %v97, 4294901760
  %522 = vmatmul.mubr.f32.gmra.mxu0 %v521
  %v523 = vpop.f32.mrf.mxu0
  %v524 = vadd.f32 %v315, %v523
  %v525 = vpop.f32.mrf.mxu0
  %526 = vmatprep.mubr.f32.mxu0 0.0
  %v527 = vand.u32 %v100, 4294901760
  %528 = vmatmul.mubr.f32.gmra.mxu0 %v527
  %v529 = vpop.f32.mrf.mxu0
  %v530 = vadd.f32 %v325, %v529
  %v531 = vpop.f32.mrf.mxu0
  %532 = vmatprep.mubr.f32.mxu0 0.0
  %v533 = vand.u32 %v103, 4294901760
  %534 = vmatmul.mubr.f32.gmra.mxu0 %v533
  %v535 = vpop.f32.mrf.mxu0
  %v536 = vadd.f32 %v335, %v535
  %v537 = vpop.f32.mrf.mxu0
  %538 = vdwg.mxu0
  %539 = vmatprep.subr.mxu0 0.0
  %540 = vmatpush1.msra.mxu0 0.0
  %541 = vmatprep.subr.mxu0 0.0
  %542 = vmatpush1.msra.mxu0 0.0
  %543 = vmatprep.subr.mxu0 0.0
  %544 = vmatpush1.msra.mxu0 0.0
  %545 = vmatprep.subr.mxu0 0.0
  %546 = vmatpush1.msra.mxu0 0.0
  %547 = vmatprep.subr.mxu0 0.0
  %548 = vmatpush1.msra.mxu0 0.0
  %549 = vmatprep.subr.mxu0 0.0
  %550 = vmatpush1.msra.mxu0 0.0
  %551 = vmatprep.subr.mxu0 0.0
  %552 = vmatpush1.msra.mxu0 0.0
  %553 = vmatprep.subr.mxu0 0.0
  %554 = vmatpush1.msra.mxu0 0.0
  %555 = vmatprep.subr.mxu0 0.0
  %v556 = vand.u32 %v55, 4294901760
  %v557 = vsub.f32 %v55, %v556
  %558 = vmatpush1.msra.mxu0 %v557
  %559 = vmatprep.subr.mxu0 0.0
  %v560 = vand.u32 %v54, 4294901760
  %v561 = vsub.f32 %v54, %v560
  %562 = vmatpush1.msra.mxu0 %v561
  %563 = vmatprep.subr.mxu0 0.0
  %v564 = vand.u32 %v53, 4294901760
  %v565 = vsub.f32 %v53, %v564
  %566 = vmatpush1.msra.mxu0 %v565
  %567 = vmatprep.subr.mxu0 0.0
  %v568 = vand.u32 %v52, 4294901760
  %v569 = vsub.f32 %v52, %v568
  %570 = vmatpush1.msra.mxu0 %v569
  %571 = vmatprep.subr.mxu0 0.0
  %v572 = vand.u32 %v51, 4294901760
  %v573 = vsub.f32 %v51, %v572
  %574 = vmatpush1.msra.mxu0 %v573
  %575 = vmatprep.subr.mxu0 0.0
  %v576 = vand.u32 %v50, 4294901760
  %v577 = vsub.f32 %v50, %v576
  %578 = vmatpush1.msra.mxu0 %v577
  %579 = vmatprep.subr.mxu0 0.0
  %v580 = vand.u32 %v49, 4294901760
  %v581 = vsub.f32 %v49, %v580
  %582 = vmatpush1.msra.mxu0 %v581
  %583 = vmatprep.subr.mxu0 0.0
  %v584 = vand.u32 %v48, 4294901760
  %v585 = vsub.f32 %v48, %v584
  %586 = vmatpush1.msra.mxu0 %v585
  %587 = vmatprep.subr.mxu0 0.0
  %588 = vmatpush2.msra.mxu0 0.0
  %589 = vmatprep.subr.mxu0 0.0
  %590 = vmatpush2.msra.mxu0 0.0
  %591 = vmatprep.subr.mxu0 0.0
  %592 = vmatpush2.msra.mxu0 0.0
  %593 = vmatprep.subr.mxu0 0.0
  %594 = vmatpush2.msra.mxu0 0.0
  %595 = vmatprep.subr.mxu0 0.0
  %596 = vmatpush2.msra.mxu0 0.0
  %597 = vmatprep.subr.mxu0 0.0
  %598 = vmatpush2.msra.mxu0 0.0
  %599 = vmatprep.subr.mxu0 0.0
  %600 = vmatpush2.msra.mxu0 0.0
  %601 = vmatprep.subr.mxu0 0.0
  %602 = vmatpush2.msra.mxu0 0.0
  %603 = vmatprep.subr.mxu0 0.0
  %604 = vmatpush2.msra.mxu0 0.0
  %605 = vmatprep.subr.mxu0 0.0
  %606 = vmatpush2.msra.mxu0 0.0
  %607 = vmatprep.subr.mxu0 0.0
  %608 = vmatpush2.msra.mxu0 0.0
  %609 = vmatprep.subr.mxu0 0.0
  %610 = vmatpush2.msra.mxu0 0.0
  %611 = vmatprep.subr.mxu0 0.0
  %612 = vmatpush2.msra.mxu0 0.0
  %613 = vmatprep.subr.mxu0 0.0
  %614 = vmatpush2.msra.mxu0 0.0
  %615 = vmatprep.subr.mxu0 0.0
  %616 = vmatpush2.msra.mxu0 0.0
  %617 = vmatprep.subr.mxu0 0.0
  %618 = vmatpush2.msra.mxu0 0.0
  %619 = vmatprep.mubr.f32.mxu0 0.0
  %v620 = vand.u32 %v58, 4294901760
  %v621 = vsub.f32 %v58, %v620
  %622 = vmatmul.mubr.f32.gmra.mxu0 %v621
  %v623 = vpop.f32.mrf.mxu0
  %v624 = vadd.f32 %v446, %v623
  %v625 = vpop.f32.mrf.mxu0
  %626 = vmatprep.mubr.f32.mxu0 0.0
  %v627 = vand.u32 %v61, 4294901760
  %v628 = vsub.f32 %v61, %v627
  %629 = vmatmul.mubr.f32.gmra.mxu0 %v628
  %v630 = vpop.f32.mrf.mxu0
  %v631 = vadd.f32 %v452, %v630
  %v632 = vpop.f32.mrf.mxu0
  %633 = vmatprep.mubr.f32.mxu0 0.0
  %v634 = vand.u32 %v64, 4294901760
  %v635 = vsub.f32 %v64, %v634
  %636 = vmatmul.mubr.f32.gmra.mxu0 %v635
  %v637 = vpop.f32.mrf.mxu0
  %v638 = vadd.f32 %v458, %v637
  %v639 = vpop.f32.mrf.mxu0
  %640 = vmatprep.mubr.f32.mxu0 0.0
  %v641 = vand.u32 %v67, 4294901760
  %v642 = vsub.f32 %v67, %v641
  %643 = vmatmul.mubr.f32.gmra.mxu0 %v642
  %v644 = vpop.f32.mrf.mxu0
  %v645 = vadd.f32 %v464, %v644
  %v646 = vpop.f32.mrf.mxu0
  %647 = vmatprep.mubr.f32.mxu0 0.0
  %v648 = vand.u32 %v70, 4294901760
  %v649 = vsub.f32 %v70, %v648
  %650 = vmatmul.mubr.f32.gmra.mxu0 %v649
  %v651 = vpop.f32.mrf.mxu0
  %v652 = vadd.f32 %v470, %v651
  %v653 = vpop.f32.mrf.mxu0
  %654 = vmatprep.mubr.f32.mxu0 0.0
  %v655 = vand.u32 %v73, 4294901760
  %v656 = vsub.f32 %v73, %v655
  %657 = vmatmul.mubr.f32.gmra.mxu0 %v656
  %v658 = vpop.f32.mrf.mxu0
  %v659 = vadd.f32 %v476, %v658
  %v660 = vpop.f32.mrf.mxu0
  %661 = vmatprep.mubr.f32.mxu0 0.0
  %v662 = vand.u32 %v76, 4294901760
  %v663 = vsub.f32 %v76, %v662
  %664 = vmatmul.mubr.f32.gmra.mxu0 %v663
  %v665 = vpop.f32.mrf.mxu0
  %v666 = vadd.f32 %v482, %v665
  %v667 = vpop.f32.mrf.mxu0
  %668 = vmatprep.mubr.f32.mxu0 0.0
  %v669 = vand.u32 %v79, 4294901760
  %v670 = vsub.f32 %v79, %v669
  %671 = vmatmul.mubr.f32.gmra.mxu0 %v670
  %v672 = vpop.f32.mrf.mxu0
  %v673 = vadd.f32 %v488, %v672
  %v674 = vpop.f32.mrf.mxu0
  %675 = vmatprep.mubr.f32.mxu0 0.0
  %v676 = vand.u32 %v82, 4294901760
  %v677 = vsub.f32 %v82, %v676
  %678 = vmatmul.mubr.f32.gmra.mxu0 %v677
  %v679 = vpop.f32.mrf.mxu0
  %v680 = vadd.f32 %v494, %v679
  %v681 = vpop.f32.mrf.mxu0
  %682 = vmatprep.mubr.f32.mxu0 0.0
  %v683 = vand.u32 %v85, 4294901760
  %v684 = vsub.f32 %v85, %v683
  %685 = vmatmul.mubr.f32.gmra.mxu0 %v684
  %v686 = vpop.f32.mrf.mxu0
  %v687 = vadd.f32 %v500, %v686
  %v688 = vpop.f32.mrf.mxu0
  %689 = vmatprep.mubr.f32.mxu0 0.0
  %v690 = vand.u32 %v88, 4294901760
  %v691 = vsub.f32 %v88, %v690
  %692 = vmatmul.mubr.f32.gmra.mxu0 %v691
  %v693 = vpop.f32.mrf.mxu0
  %v694 = vadd.f32 %v506, %v693
  %v695 = vpop.f32.mrf.mxu0
  %696 = vmatprep.mubr.f32.mxu0 0.0
  %v697 = vand.u32 %v91, 4294901760
  %v698 = vsub.f32 %v91, %v697
  %699 = vmatmul.mubr.f32.gmra.mxu0 %v698
  %v700 = vpop.f32.mrf.mxu0
  %v701 = vadd.f32 %v512, %v700
  %v702 = vpop.f32.mrf.mxu0
  %703 = vmatprep.mubr.f32.mxu0 0.0
  %v704 = vand.u32 %v94, 4294901760
  %v705 = vsub.f32 %v94, %v704
  %706 = vmatmul.mubr.f32.gmra.mxu0 %v705
  %v707 = vpop.f32.mrf.mxu0
  %v708 = vadd.f32 %v518, %v707
  %v709 = vpop.f32.mrf.mxu0
  %710 = vmatprep.mubr.f32.mxu0 0.0
  %v711 = vand.u32 %v97, 4294901760
  %v712 = vsub.f32 %v97, %v711
  %713 = vmatmul.mubr.f32.gmra.mxu0 %v712
  %v714 = vpop.f32.mrf.mxu0
  %v715 = vadd.f32 %v524, %v714
  %v716 = vpop.f32.mrf.mxu0
  %717 = vmatprep.mubr.f32.mxu0 0.0
  %v718 = vand.u32 %v100, 4294901760
  %v719 = vsub.f32 %v100, %v718
  %720 = vmatmul.mubr.f32.gmra.mxu0 %v719
  %v721 = vpop.f32.mrf.mxu0
  %v722 = vadd.f32 %v530, %v721
  %v723 = vpop.f32.mrf.mxu0
  %724 = vmatprep.mubr.f32.mxu0 0.0
  %v725 = vand.u32 %v103, 4294901760
  %v726 = vsub.f32 %v103, %v725
  %727 = vmatmul.mubr.f32.gmra.mxu0 %v726
  %v728 = vpop.f32.mrf.mxu0
  %v729 = vadd.f32 %v536, %v728
  %v730 = vpop.f32.mrf.mxu0
  %731 = vdwg.mxu0
  %732 = vmatprep.subr.mxu0 0.0
  %733 = vmatpush1.msra.mxu0 0.0
  %734 = vmatprep.subr.mxu0 0.0
  %735 = vmatpush1.msra.mxu0 0.0
  %736 = vmatprep.subr.mxu0 0.0
  %737 = vmatpush1.msra.mxu0 0.0
  %738 = vmatprep.subr.mxu0 0.0
  %739 = vmatpush1.msra.mxu0 0.0
  %740 = vmatprep.subr.mxu0 0.0
  %741 = vmatpush1.msra.mxu0 0.0
  %742 = vmatprep.subr.mxu0 0.0
  %743 = vmatpush1.msra.mxu0 0.0
  %744 = vmatprep.subr.mxu0 0.0
  %745 = vmatpush1.msra.mxu0 0.0
  %746 = vmatprep.subr.mxu0 0.0
  %747 = vmatpush1.msra.mxu0 0.0
  %748 = vmatprep.subr.mxu0 0.0
  %v749 = vand.u32 %v55, 4294901760
  %750 = vmatpush1.msra.mxu0 %v749
  %751 = vmatprep.subr.mxu0 0.0
  %v752 = vand.u32 %v54, 4294901760
  %753 = vmatpush1.msra.mxu0 %v752
  %754 = vmatprep.subr.mxu0 0.0
  %v755 = vand.u32 %v53, 4294901760
  %756 = vmatpush1.msra.mxu0 %v755
  %757 = vmatprep.subr.mxu0 0.0
  %v758 = vand.u32 %v52, 4294901760
  %759 = vmatpush1.msra.mxu0 %v758
  %760 = vmatprep.subr.mxu0 0.0
  %v761 = vand.u32 %v51, 4294901760
  %762 = vmatpush1.msra.mxu0 %v761
  %763 = vmatprep.subr.mxu0 0.0
  %v764 = vand.u32 %v50, 4294901760
  %765 = vmatpush1.msra.mxu0 %v764
  %766 = vmatprep.subr.mxu0 0.0
  %v767 = vand.u32 %v49, 4294901760
  %768 = vmatpush1.msra.mxu0 %v767
  %769 = vmatprep.subr.mxu0 0.0
  %v770 = vand.u32 %v48, 4294901760
  %771 = vmatpush1.msra.mxu0 %v770
  %772 = vmatprep.subr.mxu0 0.0
  %773 = vmatpush2.msra.mxu0 0.0
  %774 = vmatprep.subr.mxu0 0.0
  %775 = vmatpush2.msra.mxu0 0.0
  %776 = vmatprep.subr.mxu0 0.0
  %777 = vmatpush2.msra.mxu0 0.0
  %778 = vmatprep.subr.mxu0 0.0
  %779 = vmatpush2.msra.mxu0 0.0
  %780 = vmatprep.subr.mxu0 0.0
  %781 = vmatpush2.msra.mxu0 0.0
  %782 = vmatprep.subr.mxu0 0.0
  %783 = vmatpush2.msra.mxu0 0.0
  %784 = vmatprep.subr.mxu0 0.0
  %785 = vmatpush2.msra.mxu0 0.0
  %786 = vmatprep.subr.mxu0 0.0
  %787 = vmatpush2.msra.mxu0 0.0
  %788 = vmatprep.subr.mxu0 0.0
  %789 = vmatpush2.msra.mxu0 0.0
  %790 = vmatprep.subr.mxu0 0.0
  %791 = vmatpush2.msra.mxu0 0.0
  %792 = vmatprep.subr.mxu0 0.0
  %793 = vmatpush2.msra.mxu0 0.0
  %794 = vmatprep.subr.mxu0 0.0
  %795 = vmatpush2.msra.mxu0 0.0
  %796 = vmatprep.subr.mxu0 0.0
  %797 = vmatpush2.msra.mxu0 0.0
  %798 = vmatprep.subr.mxu0 0.0
  %799 = vmatpush2.msra.mxu0 0.0
  %800 = vmatprep.subr.mxu0 0.0
  %801 = vmatpush2.msra.mxu0 0.0
  %802 = vmatprep.subr.mxu0 0.0
  %803 = vmatpush2.msra.mxu0 0.0
  %804 = vmatprep.mubr.f32.mxu0 0.0
  %v805 = vand.u32 %v58, 4294901760
  %v806 = vsub.f32 %v58, %v805
  %v807 = vand.u32 %v806, 4294901760
  %808 = vmatmul.mubr.f32.gmra.mxu0 %v807
  %v809 = vpop.f32.mrf.mxu0
  %v810 = vadd.f32 %v624, %v809
  %v811 = vpop.f32.mrf.mxu0
  %812 = vmatprep.mubr.f32.mxu0 0.0
  %v813 = vand.u32 %v61, 4294901760
  %v814 = vsub.f32 %v61, %v813
  %v815 = vand.u32 %v814, 4294901760
  %816 = vmatmul.mubr.f32.gmra.mxu0 %v815
  %v817 = vpop.f32.mrf.mxu0
  %v818 = vadd.f32 %v631, %v817
  %v819 = vpop.f32.mrf.mxu0
  %820 = vmatprep.mubr.f32.mxu0 0.0
  %v821 = vand.u32 %v64, 4294901760
  %v822 = vsub.f32 %v64, %v821
  %v823 = vand.u32 %v822, 4294901760
  %824 = vmatmul.mubr.f32.gmra.mxu0 %v823
  %v825 = vpop.f32.mrf.mxu0
  %v826 = vadd.f32 %v638, %v825
  %v827 = vpop.f32.mrf.mxu0
  %828 = vmatprep.mubr.f32.mxu0 0.0
  %v829 = vand.u32 %v67, 4294901760
  %v830 = vsub.f32 %v67, %v829
  %v831 = vand.u32 %v830, 4294901760
  %832 = vmatmul.mubr.f32.gmra.mxu0 %v831
  %v833 = vpop.f32.mrf.mxu0
  %v834 = vadd.f32 %v645, %v833
  %v835 = vpop.f32.mrf.mxu0
  %836 = vmatprep.mubr.f32.mxu0 0.0
  %v837 = vand.u32 %v70, 4294901760
  %v838 = vsub.f32 %v70, %v837
  %v839 = vand.u32 %v838, 4294901760
  %840 = vmatmul.mubr.f32.gmra.mxu0 %v839
  %v841 = vpop.f32.mrf.mxu0
  %v842 = vadd.f32 %v652, %v841
  %v843 = vpop.f32.mrf.mxu0
  %844 = vmatprep.mubr.f32.mxu0 0.0
  %v845 = vand.u32 %v73, 4294901760
  %v846 = vsub.f32 %v73, %v845
  %v847 = vand.u32 %v846, 4294901760
  %848 = vmatmul.mubr.f32.gmra.mxu0 %v847
  %v849 = vpop.f32.mrf.mxu0
  %v850 = vadd.f32 %v659, %v849
  %v851 = vpop.f32.mrf.mxu0
  %852 = vmatprep.mubr.f32.mxu0 0.0
  %v853 = vand.u32 %v76, 4294901760
  %v854 = vsub.f32 %v76, %v853
  %v855 = vand.u32 %v854, 4294901760
  %856 = vmatmul.mubr.f32.gmra.mxu0 %v855
  %v857 = vpop.f32.mrf.mxu0
  %v858 = vadd.f32 %v666, %v857
  %v859 = vpop.f32.mrf.mxu0
  %860 = vmatprep.mubr.f32.mxu0 0.0
  %v861 = vand.u32 %v79, 4294901760
  %v862 = vsub.f32 %v79, %v861
  %v863 = vand.u32 %v862, 4294901760
  %864 = vmatmul.mubr.f32.gmra.mxu0 %v863
  %v865 = vpop.f32.mrf.mxu0
  %v866 = vadd.f32 %v673, %v865
  %v867 = vpop.f32.mrf.mxu0
  %868 = vmatprep.mubr.f32.mxu0 0.0
  %v869 = vand.u32 %v82, 4294901760
  %v870 = vsub.f32 %v82, %v869
  %v871 = vand.u32 %v870, 4294901760
  %872 = vmatmul.mubr.f32.gmra.mxu0 %v871
  %v873 = vpop.f32.mrf.mxu0
  %v874 = vadd.f32 %v680, %v873
  %v875 = vpop.f32.mrf.mxu0
  %876 = vmatprep.mubr.f32.mxu0 0.0
  %v877 = vand.u32 %v85, 4294901760
  %v878 = vsub.f32 %v85, %v877
  %v879 = vand.u32 %v878, 4294901760
  %880 = vmatmul.mubr.f32.gmra.mxu0 %v879
  %v881 = vpop.f32.mrf.mxu0
  %v882 = vadd.f32 %v687, %v881
  %v883 = vpop.f32.mrf.mxu0
  %884 = vmatprep.mubr.f32.mxu0 0.0
  %v885 = vand.u32 %v88, 4294901760
  %v886 = vsub.f32 %v88, %v885
  %v887 = vand.u32 %v886, 4294901760
  %888 = vmatmul.mubr.f32.gmra.mxu0 %v887
  %v889 = vpop.f32.mrf.mxu0
  %v890 = vadd.f32 %v694, %v889
  %v891 = vpop.f32.mrf.mxu0
  %892 = vmatprep.mubr.f32.mxu0 0.0
  %v893 = vand.u32 %v91, 4294901760
  %v894 = vsub.f32 %v91, %v893
  %v895 = vand.u32 %v894, 4294901760
  %896 = vmatmul.mubr.f32.gmra.mxu0 %v895
  %v897 = vpop.f32.mrf.mxu0
  %v898 = vadd.f32 %v701, %v897
  %v899 = vpop.f32.mrf.mxu0
  %900 = vmatprep.mubr.f32.mxu0 0.0
  %v901 = vand.u32 %v94, 4294901760
  %v902 = vsub.f32 %v94, %v901
  %v903 = vand.u32 %v902, 4294901760
  %904 = vmatmul.mubr.f32.gmra.mxu0 %v903
  %v905 = vpop.f32.mrf.mxu0
  %v906 = vadd.f32 %v708, %v905
  %v907 = vpop.f32.mrf.mxu0
  %908 = vmatprep.mubr.f32.mxu0 0.0
  %v909 = vand.u32 %v97, 4294901760
  %v910 = vsub.f32 %v97, %v909
  %v911 = vand.u32 %v910, 4294901760
  %912 = vmatmul.mubr.f32.gmra.mxu0 %v911
  %v913 = vpop.f32.mrf.mxu0
  %v914 = vadd.f32 %v715, %v913
  %v915 = vpop.f32.mrf.mxu0
  %916 = vmatprep.mubr.f32.mxu0 0.0
  %v917 = vand.u32 %v100, 4294901760
  %v918 = vsub.f32 %v100, %v917
  %v919 = vand.u32 %v918, 4294901760
  %920 = vmatmul.mubr.f32.gmra.mxu0 %v919
  %v921 = vpop.f32.mrf.mxu0
  %v922 = vadd.f32 %v722, %v921
  %v923 = vpop.f32.mrf.mxu0
  %924 = vmatprep.mubr.f32.mxu0 0.0
  %v925 = vand.u32 %v103, 4294901760
  %v926 = vsub.f32 %v103, %v925
  %v927 = vand.u32 %v926, 4294901760
  %928 = vmatmul.mubr.f32.gmra.mxu0 %v927
  %v929 = vpop.f32.mrf.mxu0
  %v930 = vadd.f32 %v729, %v929
  %v931 = vpop.f32.mrf.mxu0
  %932 = vdwg.mxu0
  %933 = vmatprep.subr.mxu0 0.0
  %934 = vmatpush1.msra.mxu0 0.0
  %935 = vmatprep.subr.mxu0 0.0
  %936 = vmatpush1.msra.mxu0 0.0
  %937 = vmatprep.subr.mxu0 0.0
  %938 = vmatpush1.msra.mxu0 0.0
  %939 = vmatprep.subr.mxu0 0.0
  %940 = vmatpush1.msra.mxu0 0.0
  %941 = vmatprep.subr.mxu0 0.0
  %942 = vmatpush1.msra.mxu0 0.0
  %943 = vmatprep.subr.mxu0 0.0
  %944 = vmatpush1.msra.mxu0 0.0
  %945 = vmatprep.subr.mxu0 0.0
  %946 = vmatpush1.msra.mxu0 0.0
  %947 = vmatprep.subr.mxu0 0.0
  %948 = vmatpush1.msra.mxu0 0.0
  %949 = vmatprep.subr.mxu0 0.0
  %v950 = vand.u32 %v55, 4294901760
  %v951 = vsub.f32 %v55, %v950
  %v952 = vand.u32 %v951, 4294901760
  %953 = vmatpush1.msra.mxu0 %v952
  %954 = vmatprep.subr.mxu0 0.0
  %v955 = vand.u32 %v54, 4294901760
  %v956 = vsub.f32 %v54, %v955
  %v957 = vand.u32 %v956, 4294901760
  %958 = vmatpush1.msra.mxu0 %v957
  %959 = vmatprep.subr.mxu0 0.0
  %v960 = vand.u32 %v53, 4294901760
  %v961 = vsub.f32 %v53, %v960
  %v962 = vand.u32 %v961, 4294901760
  %963 = vmatpush1.msra.mxu0 %v962
  %964 = vmatprep.subr.mxu0 0.0
  %v965 = vand.u32 %v52, 4294901760
  %v966 = vsub.f32 %v52, %v965
  %v967 = vand.u32 %v966, 4294901760
  %968 = vmatpush1.msra.mxu0 %v967
  %969 = vmatprep.subr.mxu0 0.0
  %v970 = vand.u32 %v51, 4294901760
  %v971 = vsub.f32 %v51, %v970
  %v972 = vand.u32 %v971, 4294901760
  %973 = vmatpush1.msra.mxu0 %v972
  %974 = vmatprep.subr.mxu0 0.0
  %v975 = vand.u32 %v50, 4294901760
  %v976 = vsub.f32 %v50, %v975
  %v977 = vand.u32 %v976, 4294901760
  %978 = vmatpush1.msra.mxu0 %v977
  %979 = vmatprep.subr.mxu0 0.0
  %v980 = vand.u32 %v49, 4294901760
  %v981 = vsub.f32 %v49, %v980
  %v982 = vand.u32 %v981, 4294901760
  %983 = vmatpush1.msra.mxu0 %v982
  %984 = vmatprep.subr.mxu0 0.0
  %v985 = vand.u32 %v48, 4294901760
  %v986 = vsub.f32 %v48, %v985
  %v987 = vand.u32 %v986, 4294901760
  %988 = vmatpush1.msra.mxu0 %v987
  %989 = vmatprep.subr.mxu0 0.0
  %990 = vmatpush2.msra.mxu0 0.0
  %991 = vmatprep.subr.mxu0 0.0
  %992 = vmatpush2.msra.mxu0 0.0
  %993 = vmatprep.subr.mxu0 0.0
  %994 = vmatpush2.msra.mxu0 0.0
  %995 = vmatprep.subr.mxu0 0.0
  %996 = vmatpush2.msra.mxu0 0.0
  %997 = vmatprep.subr.mxu0 0.0
  %998 = vmatpush2.msra.mxu0 0.0
  %999 = vmatprep.subr.mxu0 0.0
  %1000 = vmatpush2.msra.mxu0 0.0
  %1001 = vmatprep.subr.mxu0 0.0
  %1002 = vmatpush2.msra.mxu0 0.0
  %1003 = vmatprep.subr.mxu0 0.0
  %1004 = vmatpush2.msra.mxu0 0.0
  %1005 = vmatprep.subr.mxu0 0.0
  %1006 = vmatpush2.msra.mxu0 0.0
  %1007 = vmatprep.subr.mxu0 0.0
  %1008 = vmatpush2.msra.mxu0 0.0
  %1009 = vmatprep.subr.mxu0 0.0
  %1010 = vmatpush2.msra.mxu0 0.0
  %1011 = vmatprep.subr.mxu0 0.0
  %1012 = vmatpush2.msra.mxu0 0.0
  %1013 = vmatprep.subr.mxu0 0.0
  %1014 = vmatpush2.msra.mxu0 0.0
  %1015 = vmatprep.subr.mxu0 0.0
  %1016 = vmatpush2.msra.mxu0 0.0
  %1017 = vmatprep.subr.mxu0 0.0
  %1018 = vmatpush2.msra.mxu0 0.0
  %1019 = vmatprep.subr.mxu0 0.0
  %1020 = vmatpush2.msra.mxu0 0.0
  %1021 = vmatprep.mubr.f32.mxu0 0.0
  %v1022 = vand.u32 %v58, 4294901760
  %1023 = vmatmul.mubr.f32.gmra.mxu0 %v1022
  %v1024 = vpop.f32.mrf.mxu0
  %v1025 = vadd.f32 %v810, %v1024
  %v1026 = vpop.f32.mrf.mxu0
  %1027 = vmatprep.mubr.f32.mxu0 0.0
  %v1028 = vand.u32 %v61, 4294901760
  %1029 = vmatmul.mubr.f32.gmra.mxu0 %v1028
  %v1030 = vpop.f32.mrf.mxu0
  %v1031 = vadd.f32 %v818, %v1030
  %v1032 = vpop.f32.mrf.mxu0
  %1033 = vmatprep.mubr.f32.mxu0 0.0
  %v1034 = vand.u32 %v64, 4294901760
  %1035 = vmatmul.mubr.f32.gmra.mxu0 %v1034
  %v1036 = vpop.f32.mrf.mxu0
  %v1037 = vadd.f32 %v826, %v1036
  %v1038 = vpop.f32.mrf.mxu0
  %1039 = vmatprep.mubr.f32.mxu0 0.0
  %v1040 = vand.u32 %v67, 4294901760
  %1041 = vmatmul.mubr.f32.gmra.mxu0 %v1040
  %v1042 = vpop.f32.mrf.mxu0
  %v1043 = vadd.f32 %v834, %v1042
  %v1044 = vpop.f32.mrf.mxu0
  %1045 = vmatprep.mubr.f32.mxu0 0.0
  %v1046 = vand.u32 %v70, 4294901760
  %1047 = vmatmul.mubr.f32.gmra.mxu0 %v1046
  %v1048 = vpop.f32.mrf.mxu0
  %v1049 = vadd.f32 %v842, %v1048
  %v1050 = vpop.f32.mrf.mxu0
  %1051 = vmatprep.mubr.f32.mxu0 0.0
  %v1052 = vand.u32 %v73, 4294901760
  %1053 = vmatmul.mubr.f32.gmra.mxu0 %v1052
  %v1054 = vpop.f32.mrf.mxu0
  %v1055 = vadd.f32 %v850, %v1054
  %v1056 = vpop.f32.mrf.mxu0
  %1057 = vmatprep.mubr.f32.mxu0 0.0
  %v1058 = vand.u32 %v76, 4294901760
  %1059 = vmatmul.mubr.f32.gmra.mxu0 %v1058
  %v1060 = vpop.f32.mrf.mxu0
  %v1061 = vadd.f32 %v858, %v1060
  %v1062 = vpop.f32.mrf.mxu0
  %1063 = vmatprep.mubr.f32.mxu0 0.0
  %v1064 = vand.u32 %v79, 4294901760
  %1065 = vmatmul.mubr.f32.gmra.mxu0 %v1064
  %v1066 = vpop.f32.mrf.mxu0
  %v1067 = vadd.f32 %v866, %v1066
  %v1068 = vpop.f32.mrf.mxu0
  %1069 = vmatprep.mubr.f32.mxu0 0.0
  %v1070 = vand.u32 %v82, 4294901760
  %1071 = vmatmul.mubr.f32.gmra.mxu0 %v1070
  %v1072 = vpop.f32.mrf.mxu0
  %v1073 = vadd.f32 %v874, %v1072
  %v1074 = vpop.f32.mrf.mxu0
  %1075 = vmatprep.mubr.f32.mxu0 0.0
  %v1076 = vand.u32 %v85, 4294901760
  %1077 = vmatmul.mubr.f32.gmra.mxu0 %v1076
  %v1078 = vpop.f32.mrf.mxu0
  %v1079 = vadd.f32 %v882, %v1078
  %v1080 = vpop.f32.mrf.mxu0
  %1081 = vmatprep.mubr.f32.mxu0 0.0
  %v1082 = vand.u32 %v88, 4294901760
  %1083 = vmatmul.mubr.f32.gmra.mxu0 %v1082
  %v1084 = vpop.f32.mrf.mxu0
  %v1085 = vadd.f32 %v890, %v1084
  %v1086 = vpop.f32.mrf.mxu0
  %1087 = vmatprep.mubr.f32.mxu0 0.0
  %v1088 = vand.u32 %v91, 4294901760
  %1089 = vmatmul.mubr.f32.gmra.mxu0 %v1088
  %v1090 = vpop.f32.mrf.mxu0
  %v1091 = vadd.f32 %v898, %v1090
  %v1092 = vpop.f32.mrf.mxu0
  %1093 = vmatprep.mubr.f32.mxu0 0.0
  %v1094 = vand.u32 %v94, 4294901760
  %1095 = vmatmul.mubr.f32.gmra.mxu0 %v1094
  %v1096 = vpop.f32.mrf.mxu0
  %v1097 = vadd.f32 %v906, %v1096
  %v1098 = vpop.f32.mrf.mxu0
  %1099 = vmatprep.mubr.f32.mxu0 0.0
  %v1100 = vand.u32 %v97, 4294901760
  %1101 = vmatmul.mubr.f32.gmra.mxu0 %v1100
  %v1102 = vpop.f32.mrf.mxu0
  %v1103 = vadd.f32 %v914, %v1102
  %v1104 = vpop.f32.mrf.mxu0
  %1105 = vmatprep.mubr.f32.mxu0 0.0
  %v1106 = vand.u32 %v100, 4294901760
  %1107 = vmatmul.mubr.f32.gmra.mxu0 %v1106
  %v1108 = vpop.f32.mrf.mxu0
  %v1109 = vadd.f32 %v922, %v1108
  %v1110 = vpop.f32.mrf.mxu0
  %1111 = vmatprep.mubr.f32.mxu0 0.0
  %v1112 = vand.u32 %v103, 4294901760
  %1113 = vmatmul.mubr.f32.gmra.mxu0 %v1112
  %v1114 = vpop.f32.mrf.mxu0
  %v1115 = vadd.f32 %v930, %v1114
  %v1116 = vpop.f32.mrf.mxu0
  %1117 = vdwg.mxu0
  %1118 = vmatprep.subr.mxu0 0.0
  %1119 = vmatpush1.msra.mxu0 0.0
  %1120 = vmatprep.subr.mxu0 0.0
  %1121 = vmatpush1.msra.mxu0 0.0
  %1122 = vmatprep.subr.mxu0 0.0
  %1123 = vmatpush1.msra.mxu0 0.0
  %1124 = vmatprep.subr.mxu0 0.0
  %1125 = vmatpush1.msra.mxu0 0.0
  %1126 = vmatprep.subr.mxu0 0.0
  %1127 = vmatpush1.msra.mxu0 0.0
  %1128 = vmatprep.subr.mxu0 0.0
  %1129 = vmatpush1.msra.mxu0 0.0
  %1130 = vmatprep.subr.mxu0 0.0
  %1131 = vmatpush1.msra.mxu0 0.0
  %1132 = vmatprep.subr.mxu0 0.0
  %1133 = vmatpush1.msra.mxu0 0.0
  %1134 = vmatprep.subr.mxu0 0.0
  %v1135 = vand.u32 %v55, 4294901760
  %1136 = vmatpush1.msra.mxu0 %v1135
  %1137 = vmatprep.subr.mxu0 0.0
  %v1138 = vand.u32 %v54, 4294901760
  %1139 = vmatpush1.msra.mxu0 %v1138
  %1140 = vmatprep.subr.mxu0 0.0
  %v1141 = vand.u32 %v53, 4294901760
  %1142 = vmatpush1.msra.mxu0 %v1141
  %1143 = vmatprep.subr.mxu0 0.0
  %v1144 = vand.u32 %v52, 4294901760
  %1145 = vmatpush1.msra.mxu0 %v1144
  %1146 = vmatprep.subr.mxu0 0.0
  %v1147 = vand.u32 %v51, 4294901760
  %1148 = vmatpush1.msra.mxu0 %v1147
  %1149 = vmatprep.subr.mxu0 0.0
  %v1150 = vand.u32 %v50, 4294901760
  %1151 = vmatpush1.msra.mxu0 %v1150
  %1152 = vmatprep.subr.mxu0 0.0
  %v1153 = vand.u32 %v49, 4294901760
  %1154 = vmatpush1.msra.mxu0 %v1153
  %1155 = vmatprep.subr.mxu0 0.0
  %v1156 = vand.u32 %v48, 4294901760
  %1157 = vmatpush1.msra.mxu0 %v1156
  %1158 = vmatprep.subr.mxu0 0.0
  %1159 = vmatpush2.msra.mxu0 0.0
  %1160 = vmatprep.subr.mxu0 0.0
  %1161 = vmatpush2.msra.mxu0 0.0
  %1162 = vmatprep.subr.mxu0 0.0
  %1163 = vmatpush2.msra.mxu0 0.0
  %1164 = vmatprep.subr.mxu0 0.0
  %1165 = vmatpush2.msra.mxu0 0.0
  %1166 = vmatprep.subr.mxu0 0.0
  %1167 = vmatpush2.msra.mxu0 0.0
  %1168 = vmatprep.subr.mxu0 0.0
  %1169 = vmatpush2.msra.mxu0 0.0
  %1170 = vmatprep.subr.mxu0 0.0
  %1171 = vmatpush2.msra.mxu0 0.0
  %1172 = vmatprep.subr.mxu0 0.0
  %1173 = vmatpush2.msra.mxu0 0.0
  %1174 = vmatprep.subr.mxu0 0.0
  %1175 = vmatpush2.msra.mxu0 0.0
  %1176 = vmatprep.subr.mxu0 0.0
  %1177 = vmatpush2.msra.mxu0 0.0
  %1178 = vmatprep.subr.mxu0 0.0
  %1179 = vmatpush2.msra.mxu0 0.0
  %1180 = vmatprep.subr.mxu0 0.0
  %1181 = vmatpush2.msra.mxu0 0.0
  %1182 = vmatprep.subr.mxu0 0.0
  %1183 = vmatpush2.msra.mxu0 0.0
  %1184 = vmatprep.subr.mxu0 0.0
  %1185 = vmatpush2.msra.mxu0 0.0
  %1186 = vmatprep.subr.mxu0 0.0
  %1187 = vmatpush2.msra.mxu0 0.0
  %1188 = vmatprep.subr.mxu0 0.0
  %1189 = vmatpush2.msra.mxu0 0.0
  %1190 = vmatprep.mubr.f32.mxu0 0.0
  %v1191 = vand.u32 %v58, 4294901760
  %1192 = vmatmul.mubr.f32.gmra.mxu0 %v1191
  %v1193 = vpop.f32.mrf.mxu0
  %v1194 = vadd.f32 %v1025, %v1193
  %v1195 = vpop.f32.mrf.mxu0
  %1196 = vmatprep.mubr.f32.mxu0 0.0
  %v1197 = vand.u32 %v61, 4294901760
  %1198 = vmatmul.mubr.f32.gmra.mxu0 %v1197
  %v1199 = vpop.f32.mrf.mxu0
  %v1200 = vadd.f32 %v1031, %v1199
  %v1201 = vpop.f32.mrf.mxu0
  %1202 = vmatprep.mubr.f32.mxu0 0.0
  %v1203 = vand.u32 %v64, 4294901760
  %1204 = vmatmul.mubr.f32.gmra.mxu0 %v1203
  %v1205 = vpop.f32.mrf.mxu0
  %v1206 = vadd.f32 %v1037, %v1205
  %v1207 = vpop.f32.mrf.mxu0
  %1208 = vmatprep.mubr.f32.mxu0 0.0
  %v1209 = vand.u32 %v67, 4294901760
  %1210 = vmatmul.mubr.f32.gmra.mxu0 %v1209
  %v1211 = vpop.f32.mrf.mxu0
  %v1212 = vadd.f32 %v1043, %v1211
  %v1213 = vpop.f32.mrf.mxu0
  %1214 = vmatprep.mubr.f32.mxu0 0.0
  %v1215 = vand.u32 %v70, 4294901760
  %1216 = vmatmul.mubr.f32.gmra.mxu0 %v1215
  %v1217 = vpop.f32.mrf.mxu0
  %v1218 = vadd.f32 %v1049, %v1217
  %v1219 = vpop.f32.mrf.mxu0
  %1220 = vmatprep.mubr.f32.mxu0 0.0
  %v1221 = vand.u32 %v73, 4294901760
  %1222 = vmatmul.mubr.f32.gmra.mxu0 %v1221
  %v1223 = vpop.f32.mrf.mxu0
  %v1224 = vadd.f32 %v1055, %v1223
  %v1225 = vpop.f32.mrf.mxu0
  %1226 = vmatprep.mubr.f32.mxu0 0.0
  %v1227 = vand.u32 %v76, 4294901760
  %1228 = vmatmul.mubr.f32.gmra.mxu0 %v1227
  %v1229 = vpop.f32.mrf.mxu0
  %v1230 = vadd.f32 %v1061, %v1229
  %v1231 = vpop.f32.mrf.mxu0
  %1232 = vmatprep.mubr.f32.mxu0 0.0
  %v1233 = vand.u32 %v79, 4294901760
  %1234 = vmatmul.mubr.f32.gmra.mxu0 %v1233
  %v1235 = vpop.f32.mrf.mxu0
  %v1236 = vadd.f32 %v1067, %v1235
  %v1237 = vpop.f32.mrf.mxu0
  %1238 = vmatprep.mubr.f32.mxu0 0.0
  %v1239 = vand.u32 %v82, 4294901760
  %1240 = vmatmul.mubr.f32.gmra.mxu0 %v1239
  %v1241 = vpop.f32.mrf.mxu0
  %v1242 = vadd.f32 %v1073, %v1241
  %v1243 = vpop.f32.mrf.mxu0
  %1244 = vmatprep.mubr.f32.mxu0 0.0
  %v1245 = vand.u32 %v85, 4294901760
  %1246 = vmatmul.mubr.f32.gmra.mxu0 %v1245
  %v1247 = vpop.f32.mrf.mxu0
  %v1248 = vadd.f32 %v1079, %v1247
  %v1249 = vpop.f32.mrf.mxu0
  %1250 = vmatprep.mubr.f32.mxu0 0.0
  %v1251 = vand.u32 %v88, 4294901760
  %1252 = vmatmul.mubr.f32.gmra.mxu0 %v1251
  %v1253 = vpop.f32.mrf.mxu0
  %v1254 = vadd.f32 %v1085, %v1253
  %v1255 = vpop.f32.mrf.mxu0
  %1256 = vmatprep.mubr.f32.mxu0 0.0
  %v1257 = vand.u32 %v91, 4294901760
  %1258 = vmatmul.mubr.f32.gmra.mxu0 %v1257
  %v1259 = vpop.f32.mrf.mxu0
  %v1260 = vadd.f32 %v1091, %v1259
  %v1261 = vpop.f32.mrf.mxu0
  %1262 = vmatprep.mubr.f32.mxu0 0.0
  %v1263 = vand.u32 %v94, 4294901760
  %1264 = vmatmul.mubr.f32.gmra.mxu0 %v1263
  %v1265 = vpop.f32.mrf.mxu0
  %v1266 = vadd.f32 %v1097, %v1265
  %v1267 = vpop.f32.mrf.mxu0
  %1268 = vmatprep.mubr.f32.mxu0 0.0
  %v1269 = vand.u32 %v97, 4294901760
  %1270 = vmatmul.mubr.f32.gmra.mxu0 %v1269
  %v1271 = vpop.f32.mrf.mxu0
  %v1272 = vadd.f32 %v1103, %v1271
  %v1273 = vpop.f32.mrf.mxu0
  %1274 = vmatprep.mubr.f32.mxu0 0.0
  %v1275 = vand.u32 %v100, 4294901760
  %1276 = vmatmul.mubr.f32.gmra.mxu0 %v1275
  %v1277 = vpop.f32.mrf.mxu0
  %v1278 = vadd.f32 %v1109, %v1277
  %v1279 = vpop.f32.mrf.mxu0
  %1280 = vmatprep.mubr.f32.mxu0 0.0
  %v1281 = vand.u32 %v103, 4294901760
  %1282 = vmatmul.mubr.f32.gmra.mxu0 %v1281
  %v1283 = vpop.f32.mrf.mxu0
  %v1284 = vadd.f32 %v1115, %v1283
  %v1285 = vpop.f32.mrf.mxu0
  %1286 = vdwg.mxu0
  %v1287 = vld [vmem:[%s2] sm:$0xff]
  %v1288 = vld [vmem:[%s2 + $0x8] sm:$0xff]
  %v1289 = vld [vmem:[%s2 + $0x10] sm:$0xff]
  %v1290 = vld [vmem:[%s2 + $0x18] sm:$0xff]
  %v1291 = vld [vmem:[%s2 + $0x20] sm:$0xff]
  %v1292 = vld [vmem:[%s2 + $0x28] sm:$0xff]
  %v1293 = vld [vmem:[%s2 + $0x30] sm:$0xff]
  %v1294 = vld [vmem:[%s2 + $0x38] sm:$0xff]
  %1295 = vmatprep.subr.mxu0 0.0
  %1296 = vmatpush1.msra.mxu0 0.0
  %1297 = vmatprep.subr.mxu0 0.0
  %1298 = vmatpush1.msra.mxu0 0.0
  %1299 = vmatprep.subr.mxu0 0.0
  %1300 = vmatpush1.msra.mxu0 0.0
  %1301 = vmatprep.subr.mxu0 0.0
  %1302 = vmatpush1.msra.mxu0 0.0
  %1303 = vmatprep.subr.mxu0 0.0
  %1304 = vmatpush1.msra.mxu0 0.0
  %1305 = vmatprep.subr.mxu0 0.0
  %1306 = vmatpush1.msra.mxu0 0.0
  %1307 = vmatprep.subr.mxu0 0.0
  %1308 = vmatpush1.msra.mxu0 0.0
  %1309 = vmatprep.subr.mxu0 0.0
  %1310 = vmatpush1.msra.mxu0 0.0
  %1311 = vmatprep.subr.mxu0 0.0
  %v1312 = vand.u32 %v1294, 4294901760
  %1313 = vmatpush1.msra.mxu0 %v1312
  %1314 = vmatprep.subr.mxu0 0.0
  %v1315 = vand.u32 %v1293, 4294901760
  %1316 = vmatpush1.msra.mxu0 %v1315
  %1317 = vmatprep.subr.mxu0 0.0
  %v1318 = vand.u32 %v1292, 4294901760
  %1319 = vmatpush1.msra.mxu0 %v1318
  %1320 = vmatprep.subr.mxu0 0.0
  %v1321 = vand.u32 %v1291, 4294901760
  %1322 = vmatpush1.msra.mxu0 %v1321
  %1323 = vmatprep.subr.mxu0 0.0
  %v1324 = vand.u32 %v1290, 4294901760
  %1325 = vmatpush1.msra.mxu0 %v1324
  %1326 = vmatprep.subr.mxu0 0.0
  %v1327 = vand.u32 %v1289, 4294901760
  %1328 = vmatpush1.msra.mxu0 %v1327
  %1329 = vmatprep.subr.mxu0 0.0
  %v1330 = vand.u32 %v1288, 4294901760
  %1331 = vmatpush1.msra.mxu0 %v1330
  %1332 = vmatprep.subr.mxu0 0.0
  %v1333 = vand.u32 %v1287, 4294901760
  %1334 = vmatpush1.msra.mxu0 %v1333
  %1335 = vmatprep.subr.mxu0 0.0
  %1336 = vmatpush2.msra.mxu0 0.0
  %1337 = vmatprep.subr.mxu0 0.0
  %1338 = vmatpush2.msra.mxu0 0.0
  %1339 = vmatprep.subr.mxu0 0.0
  %1340 = vmatpush2.msra.mxu0 0.0
  %1341 = vmatprep.subr.mxu0 0.0
  %1342 = vmatpush2.msra.mxu0 0.0
  %1343 = vmatprep.subr.mxu0 0.0
  %1344 = vmatpush2.msra.mxu0 0.0
  %1345 = vmatprep.subr.mxu0 0.0
  %1346 = vmatpush2.msra.mxu0 0.0
  %1347 = vmatprep.subr.mxu0 0.0
  %1348 = vmatpush2.msra.mxu0 0.0
  %1349 = vmatprep.subr.mxu0 0.0
  %1350 = vmatpush2.msra.mxu0 0.0
  %1351 = vmatprep.subr.mxu0 0.0
  %1352 = vmatpush2.msra.mxu0 0.0
  %1353 = vmatprep.subr.mxu0 0.0
  %1354 = vmatpush2.msra.mxu0 0.0
  %1355 = vmatprep.subr.mxu0 0.0
  %1356 = vmatpush2.msra.mxu0 0.0
  %1357 = vmatprep.subr.mxu0 0.0
  %1358 = vmatpush2.msra.mxu0 0.0
  %1359 = vmatprep.subr.mxu0 0.0
  %1360 = vmatpush2.msra.mxu0 0.0
  %1361 = vmatprep.subr.mxu0 0.0
  %1362 = vmatpush2.msra.mxu0 0.0
  %1363 = vmatprep.subr.mxu0 0.0
  %1364 = vmatpush2.msra.mxu0 0.0
  %1365 = vmatprep.subr.mxu0 0.0
  %1366 = vmatpush2.msra.mxu0 0.0
  %1367 = vmatprep.mubr.f32.mxu0 0.0
  %v1368 = vand.u32 %v58, 4294901760
  %v1369 = vsub.f32 %v58, %v1368
  %v1370 = vand.u32 %v1369, 4294901760
  %v1371 = vsub.f32 %v1369, %v1370
  %v1372 = vand.u32 %v1371, 4294901760
  %1373 = vmatmul.mubr.f32.gmra.mxu0 %v1372
  %v1374 = vpop.f32.mrf.mxu0
  %v1375 = vadd.f32 0.0, %v1374
  %v1376 = vpop.f32.mrf.mxu0
  %1377 = vmatprep.mubr.f32.mxu0 0.0
  %v1378 = vand.u32 %v61, 4294901760
  %v1379 = vsub.f32 %v61, %v1378
  %v1380 = vand.u32 %v1379, 4294901760
  %v1381 = vsub.f32 %v1379, %v1380
  %v1382 = vand.u32 %v1381, 4294901760
  %1383 = vmatmul.mubr.f32.gmra.mxu0 %v1382
  %v1384 = vpop.f32.mrf.mxu0
  %v1385 = vadd.f32 0.0, %v1384
  %v1386 = vpop.f32.mrf.mxu0
  %1387 = vmatprep.mubr.f32.mxu0 0.0
  %v1388 = vand.u32 %v64, 4294901760
  %v1389 = vsub.f32 %v64, %v1388
  %v1390 = vand.u32 %v1389, 4294901760
  %v1391 = vsub.f32 %v1389, %v1390
  %v1392 = vand.u32 %v1391, 4294901760
  %1393 = vmatmul.mubr.f32.gmra.mxu0 %v1392
  %v1394 = vpop.f32.mrf.mxu0
  %v1395 = vadd.f32 0.0, %v1394
  %v1396 = vpop.f32.mrf.mxu0
  %1397 = vmatprep.mubr.f32.mxu0 0.0
  %v1398 = vand.u32 %v67, 4294901760
  %v1399 = vsub.f32 %v67, %v1398
  %v1400 = vand.u32 %v1399, 4294901760
  %v1401 = vsub.f32 %v1399, %v1400
  %v1402 = vand.u32 %v1401, 4294901760
  %1403 = vmatmul.mubr.f32.gmra.mxu0 %v1402
  %v1404 = vpop.f32.mrf.mxu0
  %v1405 = vadd.f32 0.0, %v1404
  %v1406 = vpop.f32.mrf.mxu0
  %1407 = vmatprep.mubr.f32.mxu0 0.0
  %v1408 = vand.u32 %v70, 4294901760
  %v1409 = vsub.f32 %v70, %v1408
  %v1410 = vand.u32 %v1409, 4294901760
  %v1411 = vsub.f32 %v1409, %v1410
  %v1412 = vand.u32 %v1411, 4294901760
  %1413 = vmatmul.mubr.f32.gmra.mxu0 %v1412
  %v1414 = vpop.f32.mrf.mxu0
  %v1415 = vadd.f32 0.0, %v1414
  %v1416 = vpop.f32.mrf.mxu0
  %1417 = vmatprep.mubr.f32.mxu0 0.0
  %v1418 = vand.u32 %v73, 4294901760
  %v1419 = vsub.f32 %v73, %v1418
  %v1420 = vand.u32 %v1419, 4294901760
  %v1421 = vsub.f32 %v1419, %v1420
  %v1422 = vand.u32 %v1421, 4294901760
  %1423 = vmatmul.mubr.f32.gmra.mxu0 %v1422
  %v1424 = vpop.f32.mrf.mxu0
  %v1425 = vadd.f32 0.0, %v1424
  %v1426 = vpop.f32.mrf.mxu0
  %1427 = vmatprep.mubr.f32.mxu0 0.0
  %v1428 = vand.u32 %v76, 4294901760
  %v1429 = vsub.f32 %v76, %v1428
  %v1430 = vand.u32 %v1429, 4294901760
  %v1431 = vsub.f32 %v1429, %v1430
  %v1432 = vand.u32 %v1431, 4294901760
  %1433 = vmatmul.mubr.f32.gmra.mxu0 %v1432
  %v1434 = vpop.f32.mrf.mxu0
  %v1435 = vadd.f32 0.0, %v1434
  %v1436 = vpop.f32.mrf.mxu0
  %1437 = vmatprep.mubr.f32.mxu0 0.0
  %v1438 = vand.u32 %v79, 4294901760
  %v1439 = vsub.f32 %v79, %v1438
  %v1440 = vand.u32 %v1439, 4294901760
  %v1441 = vsub.f32 %v1439, %v1440
  %v1442 = vand.u32 %v1441, 4294901760
  %1443 = vmatmul.mubr.f32.gmra.mxu0 %v1442
  %v1444 = vpop.f32.mrf.mxu0
  %v1445 = vadd.f32 0.0, %v1444
  %v1446 = vpop.f32.mrf.mxu0
  %1447 = vmatprep.mubr.f32.mxu0 0.0
  %v1448 = vand.u32 %v82, 4294901760
  %v1449 = vsub.f32 %v82, %v1448
  %v1450 = vand.u32 %v1449, 4294901760
  %v1451 = vsub.f32 %v1449, %v1450
  %v1452 = vand.u32 %v1451, 4294901760
  %1453 = vmatmul.mubr.f32.gmra.mxu0 %v1452
  %v1454 = vpop.f32.mrf.mxu0
  %v1455 = vadd.f32 0.0, %v1454
  %v1456 = vpop.f32.mrf.mxu0
  %1457 = vmatprep.mubr.f32.mxu0 0.0
  %v1458 = vand.u32 %v85, 4294901760
  %v1459 = vsub.f32 %v85, %v1458
  %v1460 = vand.u32 %v1459, 4294901760
  %v1461 = vsub.f32 %v1459, %v1460
  %v1462 = vand.u32 %v1461, 4294901760
  %1463 = vmatmul.mubr.f32.gmra.mxu0 %v1462
  %v1464 = vpop.f32.mrf.mxu0
  %v1465 = vadd.f32 0.0, %v1464
  %v1466 = vpop.f32.mrf.mxu0
  %1467 = vmatprep.mubr.f32.mxu0 0.0
  %v1468 = vand.u32 %v88, 4294901760
  %v1469 = vsub.f32 %v88, %v1468
  %v1470 = vand.u32 %v1469, 4294901760
  %v1471 = vsub.f32 %v1469, %v1470
  %v1472 = vand.u32 %v1471, 4294901760
  %1473 = vmatmul.mubr.f32.gmra.mxu0 %v1472
  %v1474 = vpop.f32.mrf.mxu0
  %v1475 = vadd.f32 0.0, %v1474
  %v1476 = vpop.f32.mrf.mxu0
  %1477 = vmatprep.mubr.f32.mxu0 0.0
  %v1478 = vand.u32 %v91, 4294901760
  %v1479 = vsub.f32 %v91, %v1478
  %v1480 = vand.u32 %v1479, 4294901760
  %v1481 = vsub.f32 %v1479, %v1480
  %v1482 = vand.u32 %v1481, 4294901760
  %1483 = vmatmul.mubr.f32.gmra.mxu0 %v1482
  %v1484 = vpop.f32.mrf.mxu0
  %v1485 = vadd.f32 0.0, %v1484
  %v1486 = vpop.f32.mrf.mxu0
  %1487 = vmatprep.mubr.f32.mxu0 0.0
  %v1488 = vand.u32 %v94, 4294901760
  %v1489 = vsub.f32 %v94, %v1488
  %v1490 = vand.u32 %v1489, 4294901760
  %v1491 = vsub.f32 %v1489, %v1490
  %v1492 = vand.u32 %v1491, 4294901760
  %1493 = vmatmul.mubr.f32.gmra.mxu0 %v1492
  %v1494 = vpop.f32.mrf.mxu0
  %v1495 = vadd.f32 0.0, %v1494
  %v1496 = vpop.f32.mrf.mxu0
  %1497 = vmatprep.mubr.f32.mxu0 0.0
  %v1498 = vand.u32 %v97, 4294901760
  %v1499 = vsub.f32 %v97, %v1498
  %v1500 = vand.u32 %v1499, 4294901760
  %v1501 = vsub.f32 %v1499, %v1500
  %v1502 = vand.u32 %v1501, 4294901760
  %1503 = vmatmul.mubr.f32.gmra.mxu0 %v1502
  %v1504 = vpop.f32.mrf.mxu0
  %v1505 = vadd.f32 0.0, %v1504
  %v1506 = vpop.f32.mrf.mxu0
  %1507 = vmatprep.mubr.f32.mxu0 0.0
  %v1508 = vand.u32 %v100, 4294901760
  %v1509 = vsub.f32 %v100, %v1508
  %v1510 = vand.u32 %v1509, 4294901760
  %v1511 = vsub.f32 %v1509, %v1510
  %v1512 = vand.u32 %v1511, 4294901760
  %1513 = vmatmul.mubr.f32.gmra.mxu0 %v1512
  %v1514 = vpop.f32.mrf.mxu0
  %v1515 = vadd.f32 0.0, %v1514
  %v1516 = vpop.f32.mrf.mxu0
  %1517 = vmatprep.mubr.f32.mxu0 0.0
  %v1518 = vand.u32 %v103, 4294901760
  %v1519 = vsub.f32 %v103, %v1518
  %v1520 = vand.u32 %v1519, 4294901760
  %v1521 = vsub.f32 %v1519, %v1520
  %v1522 = vand.u32 %v1521, 4294901760
  %1523 = vmatmul.mubr.f32.gmra.mxu0 %v1522
  %v1524 = vpop.f32.mrf.mxu0
  %v1525 = vadd.f32 0.0, %v1524
  %v1526 = vpop.f32.mrf.mxu0
  %1527 = vdwg.mxu0
  %1528 = vmatprep.subr.mxu0 0.0
  %1529 = vmatpush1.msra.mxu0 0.0
  %1530 = vmatprep.subr.mxu0 0.0
  %1531 = vmatpush1.msra.mxu0 0.0
  %1532 = vmatprep.subr.mxu0 0.0
  %1533 = vmatpush1.msra.mxu0 0.0
  %1534 = vmatprep.subr.mxu0 0.0
  %1535 = vmatpush1.msra.mxu0 0.0
  %1536 = vmatprep.subr.mxu0 0.0
  %1537 = vmatpush1.msra.mxu0 0.0
  %1538 = vmatprep.subr.mxu0 0.0
  %1539 = vmatpush1.msra.mxu0 0.0
  %1540 = vmatprep.subr.mxu0 0.0
  %1541 = vmatpush1.msra.mxu0 0.0
  %1542 = vmatprep.subr.mxu0 0.0
  %1543 = vmatpush1.msra.mxu0 0.0
  %1544 = vmatprep.subr.mxu0 0.0
  %v1545 = vand.u32 %v1294, 4294901760
  %v1546 = vsub.f32 %v1294, %v1545
  %v1547 = vand.u32 %v1546, 4294901760
  %v1548 = vsub.f32 %v1546, %v1547
  %v1549 = vand.u32 %v1548, 4294901760
  %1550 = vmatpush1.msra.mxu0 %v1549
  %1551 = vmatprep.subr.mxu0 0.0
  %v1552 = vand.u32 %v1293, 4294901760
  %v1553 = vsub.f32 %v1293, %v1552
  %v1554 = vand.u32 %v1553, 4294901760
  %v1555 = vsub.f32 %v1553, %v1554
  %v1556 = vand.u32 %v1555, 4294901760
  %1557 = vmatpush1.msra.mxu0 %v1556
  %1558 = vmatprep.subr.mxu0 0.0
  %v1559 = vand.u32 %v1292, 4294901760
  %v1560 = vsub.f32 %v1292, %v1559
  %v1561 = vand.u32 %v1560, 4294901760
  %v1562 = vsub.f32 %v1560, %v1561
  %v1563 = vand.u32 %v1562, 4294901760
  %1564 = vmatpush1.msra.mxu0 %v1563
  %1565 = vmatprep.subr.mxu0 0.0
  %v1566 = vand.u32 %v1291, 4294901760
  %v1567 = vsub.f32 %v1291, %v1566
  %v1568 = vand.u32 %v1567, 4294901760
  %v1569 = vsub.f32 %v1567, %v1568
  %v1570 = vand.u32 %v1569, 4294901760
  %1571 = vmatpush1.msra.mxu0 %v1570
  %1572 = vmatprep.subr.mxu0 0.0
  %v1573 = vand.u32 %v1290, 4294901760
  %v1574 = vsub.f32 %v1290, %v1573
  %v1575 = vand.u32 %v1574, 4294901760
  %v1576 = vsub.f32 %v1574, %v1575
  %v1577 = vand.u32 %v1576, 4294901760
  %1578 = vmatpush1.msra.mxu0 %v1577
  %1579 = vmatprep.subr.mxu0 0.0
  %v1580 = vand.u32 %v1289, 4294901760
  %v1581 = vsub.f32 %v1289, %v1580
  %v1582 = vand.u32 %v1581, 4294901760
  %v1583 = vsub.f32 %v1581, %v1582
  %v1584 = vand.u32 %v1583, 4294901760
  %1585 = vmatpush1.msra.mxu0 %v1584
  %1586 = vmatprep.subr.mxu0 0.0
  %v1587 = vand.u32 %v1288, 4294901760
  %v1588 = vsub.f32 %v1288, %v1587
  %v1589 = vand.u32 %v1588, 4294901760
  %v1590 = vsub.f32 %v1588, %v1589
  %v1591 = vand.u32 %v1590, 4294901760
  %1592 = vmatpush1.msra.mxu0 %v1591
  %1593 = vmatprep.subr.mxu0 0.0
  %v1594 = vand.u32 %v1287, 4294901760
  %v1595 = vsub.f32 %v1287, %v1594
  %v1596 = vand.u32 %v1595, 4294901760
  %v1597 = vsub.f32 %v1595, %v1596
  %v1598 = vand.u32 %v1597, 4294901760
  %1599 = vmatpush1.msra.mxu0 %v1598
  %1600 = vmatprep.subr.mxu0 0.0
  %1601 = vmatpush2.msra.mxu0 0.0
  %1602 = vmatprep.subr.mxu0 0.0
  %1603 = vmatpush2.msra.mxu0 0.0
  %1604 = vmatprep.subr.mxu0 0.0
  %1605 = vmatpush2.msra.mxu0 0.0
  %1606 = vmatprep.subr.mxu0 0.0
  %1607 = vmatpush2.msra.mxu0 0.0
  %1608 = vmatprep.subr.mxu0 0.0
  %1609 = vmatpush2.msra.mxu0 0.0
  %1610 = vmatprep.subr.mxu0 0.0
  %1611 = vmatpush2.msra.mxu0 0.0
  %1612 = vmatprep.subr.mxu0 0.0
  %1613 = vmatpush2.msra.mxu0 0.0
  %1614 = vmatprep.subr.mxu0 0.0
  %1615 = vmatpush2.msra.mxu0 0.0
  %1616 = vmatprep.subr.mxu0 0.0
  %1617 = vmatpush2.msra.mxu0 0.0
  %1618 = vmatprep.subr.mxu0 0.0
  %1619 = vmatpush2.msra.mxu0 0.0
  %1620 = vmatprep.subr.mxu0 0.0
  %1621 = vmatpush2.msra.mxu0 0.0
  %1622 = vmatprep.subr.mxu0 0.0
  %1623 = vmatpush2.msra.mxu0 0.0
  %1624 = vmatprep.subr.mxu0 0.0
  %1625 = vmatpush2.msra.mxu0 0.0
  %1626 = vmatprep.subr.mxu0 0.0
  %1627 = vmatpush2.msra.mxu0 0.0
  %1628 = vmatprep.subr.mxu0 0.0
  %1629 = vmatpush2.msra.mxu0 0.0
  %1630 = vmatprep.subr.mxu0 0.0
  %1631 = vmatpush2.msra.mxu0 0.0
  %1632 = vmatprep.mubr.f32.mxu0 0.0
  %v1633 = vand.u32 %v58, 4294901760
  %1634 = vmatmul.mubr.f32.gmra.mxu0 %v1633
  %v1635 = vpop.f32.mrf.mxu0
  %v1636 = vadd.f32 %v1375, %v1635
  %v1637 = vpop.f32.mrf.mxu0
  %1638 = vmatprep.mubr.f32.mxu0 0.0
  %v1639 = vand.u32 %v61, 4294901760
  %1640 = vmatmul.mubr.f32.gmra.mxu0 %v1639
  %v1641 = vpop.f32.mrf.mxu0
  %v1642 = vadd.f32 %v1385, %v1641
  %v1643 = vpop.f32.mrf.mxu0
  %1644 = vmatprep.mubr.f32.mxu0 0.0
  %v1645 = vand.u32 %v64, 4294901760
  %1646 = vmatmul.mubr.f32.gmra.mxu0 %v1645
  %v1647 = vpop.f32.mrf.mxu0
  %v1648 = vadd.f32 %v1395, %v1647
  %v1649 = vpop.f32.mrf.mxu0
  %1650 = vmatprep.mubr.f32.mxu0 0.0
  %v1651 = vand.u32 %v67, 4294901760
  %1652 = vmatmul.mubr.f32.gmra.mxu0 %v1651
  %v1653 = vpop.f32.mrf.mxu0
  %v1654 = vadd.f32 %v1405, %v1653
  %v1655 = vpop.f32.mrf.mxu0
  %1656 = vmatprep.mubr.f32.mxu0 0.0
  %v1657 = vand.u32 %v70, 4294901760
  %1658 = vmatmul.mubr.f32.gmra.mxu0 %v1657
  %v1659 = vpop.f32.mrf.mxu0
  %v1660 = vadd.f32 %v1415, %v1659
  %v1661 = vpop.f32.mrf.mxu0
  %1662 = vmatprep.mubr.f32.mxu0 0.0
  %v1663 = vand.u32 %v73, 4294901760
  %1664 = vmatmul.mubr.f32.gmra.mxu0 %v1663
  %v1665 = vpop.f32.mrf.mxu0
  %v1666 = vadd.f32 %v1425, %v1665
  %v1667 = vpop.f32.mrf.mxu0
  %1668 = vmatprep.mubr.f32.mxu0 0.0
  %v1669 = vand.u32 %v76, 4294901760
  %1670 = vmatmul.mubr.f32.gmra.mxu0 %v1669
  %v1671 = vpop.f32.mrf.mxu0
  %v1672 = vadd.f32 %v1435, %v1671
  %v1673 = vpop.f32.mrf.mxu0
  %1674 = vmatprep.mubr.f32.mxu0 0.0
  %v1675 = vand.u32 %v79, 4294901760
  %1676 = vmatmul.mubr.f32.gmra.mxu0 %v1675
  %v1677 = vpop.f32.mrf.mxu0
  %v1678 = vadd.f32 %v1445, %v1677
  %v1679 = vpop.f32.mrf.mxu0
  %1680 = vmatprep.mubr.f32.mxu0 0.0
  %v1681 = vand.u32 %v82, 4294901760
  %1682 = vmatmul.mubr.f32.gmra.mxu0 %v1681
  %v1683 = vpop.f32.mrf.mxu0
  %v1684 = vadd.f32 %v1455, %v1683
  %v1685 = vpop.f32.mrf.mxu0
  %1686 = vmatprep.mubr.f32.mxu0 0.0
  %v1687 = vand.u32 %v85, 4294901760
  %1688 = vmatmul.mubr.f32.gmra.mxu0 %v1687
  %v1689 = vpop.f32.mrf.mxu0
  %v1690 = vadd.f32 %v1465, %v1689
  %v1691 = vpop.f32.mrf.mxu0
  %1692 = vmatprep.mubr.f32.mxu0 0.0
  %v1693 = vand.u32 %v88, 4294901760
  %1694 = vmatmul.mubr.f32.gmra.mxu0 %v1693
  %v1695 = vpop.f32.mrf.mxu0
  %v1696 = vadd.f32 %v1475, %v1695
  %v1697 = vpop.f32.mrf.mxu0
  %1698 = vmatprep.mubr.f32.mxu0 0.0
  %v1699 = vand.u32 %v91, 4294901760
  %1700 = vmatmul.mubr.f32.gmra.mxu0 %v1699
  %v1701 = vpop.f32.mrf.mxu0
  %v1702 = vadd.f32 %v1485, %v1701
  %v1703 = vpop.f32.mrf.mxu0
  %1704 = vmatprep.mubr.f32.mxu0 0.0
  %v1705 = vand.u32 %v94, 4294901760
  %1706 = vmatmul.mubr.f32.gmra.mxu0 %v1705
  %v1707 = vpop.f32.mrf.mxu0
  %v1708 = vadd.f32 %v1495, %v1707
  %v1709 = vpop.f32.mrf.mxu0
  %1710 = vmatprep.mubr.f32.mxu0 0.0
  %v1711 = vand.u32 %v97, 4294901760
  %1712 = vmatmul.mubr.f32.gmra.mxu0 %v1711
  %v1713 = vpop.f32.mrf.mxu0
  %v1714 = vadd.f32 %v1505, %v1713
  %v1715 = vpop.f32.mrf.mxu0
  %1716 = vmatprep.mubr.f32.mxu0 0.0
  %v1717 = vand.u32 %v100, 4294901760
  %1718 = vmatmul.mubr.f32.gmra.mxu0 %v1717
  %v1719 = vpop.f32.mrf.mxu0
  %v1720 = vadd.f32 %v1515, %v1719
  %v1721 = vpop.f32.mrf.mxu0
  %1722 = vmatprep.mubr.f32.mxu0 0.0
  %v1723 = vand.u32 %v103, 4294901760
  %1724 = vmatmul.mubr.f32.gmra.mxu0 %v1723
  %v1725 = vpop.f32.mrf.mxu0
  %v1726 = vadd.f32 %v1525, %v1725
  %v1727 = vpop.f32.mrf.mxu0
  %1728 = vdwg.mxu0
  %1729 = vmatprep.subr.mxu0 0.0
  %1730 = vmatpush1.msra.mxu0 0.0
  %1731 = vmatprep.subr.mxu0 0.0
  %1732 = vmatpush1.msra.mxu0 0.0
  %1733 = vmatprep.subr.mxu0 0.0
  %1734 = vmatpush1.msra.mxu0 0.0
  %1735 = vmatprep.subr.mxu0 0.0
  %1736 = vmatpush1.msra.mxu0 0.0
  %1737 = vmatprep.subr.mxu0 0.0
  %1738 = vmatpush1.msra.mxu0 0.0
  %1739 = vmatprep.subr.mxu0 0.0
  %1740 = vmatpush1.msra.mxu0 0.0
  %1741 = vmatprep.subr.mxu0 0.0
  %1742 = vmatpush1.msra.mxu0 0.0
  %1743 = vmatprep.subr.mxu0 0.0
  %1744 = vmatpush1.msra.mxu0 0.0
  %1745 = vmatprep.subr.mxu0 0.0
  %v1746 = vand.u32 %v1294, 4294901760
  %v1747 = vsub.f32 %v1294, %v1746
  %1748 = vmatpush1.msra.mxu0 %v1747
  %1749 = vmatprep.subr.mxu0 0.0
  %v1750 = vand.u32 %v1293, 4294901760
  %v1751 = vsub.f32 %v1293, %v1750
  %1752 = vmatpush1.msra.mxu0 %v1751
  %1753 = vmatprep.subr.mxu0 0.0
  %v1754 = vand.u32 %v1292, 4294901760
  %v1755 = vsub.f32 %v1292, %v1754
  %1756 = vmatpush1.msra.mxu0 %v1755
  %1757 = vmatprep.subr.mxu0 0.0
  %v1758 = vand.u32 %v1291, 4294901760
  %v1759 = vsub.f32 %v1291, %v1758
  %1760 = vmatpush1.msra.mxu0 %v1759
  %1761 = vmatprep.subr.mxu0 0.0
  %v1762 = vand.u32 %v1290, 4294901760
  %v1763 = vsub.f32 %v1290, %v1762
  %1764 = vmatpush1.msra.mxu0 %v1763
  %1765 = vmatprep.subr.mxu0 0.0
  %v1766 = vand.u32 %v1289, 4294901760
  %v1767 = vsub.f32 %v1289, %v1766
  %1768 = vmatpush1.msra.mxu0 %v1767
  %1769 = vmatprep.subr.mxu0 0.0
  %v1770 = vand.u32 %v1288, 4294901760
  %v1771 = vsub.f32 %v1288, %v1770
  %1772 = vmatpush1.msra.mxu0 %v1771
  %1773 = vmatprep.subr.mxu0 0.0
  %v1774 = vand.u32 %v1287, 4294901760
  %v1775 = vsub.f32 %v1287, %v1774
  %1776 = vmatpush1.msra.mxu0 %v1775
  %1777 = vmatprep.subr.mxu0 0.0
  %1778 = vmatpush2.msra.mxu0 0.0
  %1779 = vmatprep.subr.mxu0 0.0
  %1780 = vmatpush2.msra.mxu0 0.0
  %1781 = vmatprep.subr.mxu0 0.0
  %1782 = vmatpush2.msra.mxu0 0.0
  %1783 = vmatprep.subr.mxu0 0.0
  %1784 = vmatpush2.msra.mxu0 0.0
  %1785 = vmatprep.subr.mxu0 0.0
  %1786 = vmatpush2.msra.mxu0 0.0
  %1787 = vmatprep.subr.mxu0 0.0
  %1788 = vmatpush2.msra.mxu0 0.0
  %1789 = vmatprep.subr.mxu0 0.0
  %1790 = vmatpush2.msra.mxu0 0.0
  %1791 = vmatprep.subr.mxu0 0.0
  %1792 = vmatpush2.msra.mxu0 0.0
  %1793 = vmatprep.subr.mxu0 0.0
  %1794 = vmatpush2.msra.mxu0 0.0
  %1795 = vmatprep.subr.mxu0 0.0
  %1796 = vmatpush2.msra.mxu0 0.0
  %1797 = vmatprep.subr.mxu0 0.0
  %1798 = vmatpush2.msra.mxu0 0.0
  %1799 = vmatprep.subr.mxu0 0.0
  %1800 = vmatpush2.msra.mxu0 0.0
  %1801 = vmatprep.subr.mxu0 0.0
  %1802 = vmatpush2.msra.mxu0 0.0
  %1803 = vmatprep.subr.mxu0 0.0
  %1804 = vmatpush2.msra.mxu0 0.0
  %1805 = vmatprep.subr.mxu0 0.0
  %1806 = vmatpush2.msra.mxu0 0.0
  %1807 = vmatprep.subr.mxu0 0.0
  %1808 = vmatpush2.msra.mxu0 0.0
  %1809 = vmatprep.mubr.f32.mxu0 0.0
  %v1810 = vand.u32 %v58, 4294901760
  %v1811 = vsub.f32 %v58, %v1810
  %1812 = vmatmul.mubr.f32.gmra.mxu0 %v1811
  %v1813 = vpop.f32.mrf.mxu0
  %v1814 = vadd.f32 %v1636, %v1813
  %v1815 = vpop.f32.mrf.mxu0
  %1816 = vmatprep.mubr.f32.mxu0 0.0
  %v1817 = vand.u32 %v61, 4294901760
  %v1818 = vsub.f32 %v61, %v1817
  %1819 = vmatmul.mubr.f32.gmra.mxu0 %v1818
  %v1820 = vpop.f32.mrf.mxu0
  %v1821 = vadd.f32 %v1642, %v1820
  %v1822 = vpop.f32.mrf.mxu0
  %1823 = vmatprep.mubr.f32.mxu0 0.0
  %v1824 = vand.u32 %v64, 4294901760
  %v1825 = vsub.f32 %v64, %v1824
  %1826 = vmatmul.mubr.f32.gmra.mxu0 %v1825
  %v1827 = vpop.f32.mrf.mxu0
  %v1828 = vadd.f32 %v1648, %v1827
  %v1829 = vpop.f32.mrf.mxu0
  %1830 = vmatprep.mubr.f32.mxu0 0.0
  %v1831 = vand.u32 %v67, 4294901760
  %v1832 = vsub.f32 %v67, %v1831
  %1833 = vmatmul.mubr.f32.gmra.mxu0 %v1832
  %v1834 = vpop.f32.mrf.mxu0
  %v1835 = vadd.f32 %v1654, %v1834
  %v1836 = vpop.f32.mrf.mxu0
  %1837 = vmatprep.mubr.f32.mxu0 0.0
  %v1838 = vand.u32 %v70, 4294901760
  %v1839 = vsub.f32 %v70, %v1838
  %1840 = vmatmul.mubr.f32.gmra.mxu0 %v1839
  %v1841 = vpop.f32.mrf.mxu0
  %v1842 = vadd.f32 %v1660, %v1841
  %v1843 = vpop.f32.mrf.mxu0
  %1844 = vmatprep.mubr.f32.mxu0 0.0
  %v1845 = vand.u32 %v73, 4294901760
  %v1846 = vsub.f32 %v73, %v1845
  %1847 = vmatmul.mubr.f32.gmra.mxu0 %v1846
  %v1848 = vpop.f32.mrf.mxu0
  %v1849 = vadd.f32 %v1666, %v1848
  %v1850 = vpop.f32.mrf.mxu0
  %1851 = vmatprep.mubr.f32.mxu0 0.0
  %v1852 = vand.u32 %v76, 4294901760
  %v1853 = vsub.f32 %v76, %v1852
  %1854 = vmatmul.mubr.f32.gmra.mxu0 %v1853
  %v1855 = vpop.f32.mrf.mxu0
  %v1856 = vadd.f32 %v1672, %v1855
  %v1857 = vpop.f32.mrf.mxu0
  %1858 = vmatprep.mubr.f32.mxu0 0.0
  %v1859 = vand.u32 %v79, 4294901760
  %v1860 = vsub.f32 %v79, %v1859
  %1861 = vmatmul.mubr.f32.gmra.mxu0 %v1860
  %v1862 = vpop.f32.mrf.mxu0
  %v1863 = vadd.f32 %v1678, %v1862
  %v1864 = vpop.f32.mrf.mxu0
  %1865 = vmatprep.mubr.f32.mxu0 0.0
  %v1866 = vand.u32 %v82, 4294901760
  %v1867 = vsub.f32 %v82, %v1866
  %1868 = vmatmul.mubr.f32.gmra.mxu0 %v1867
  %v1869 = vpop.f32.mrf.mxu0
  %v1870 = vadd.f32 %v1684, %v1869
  %v1871 = vpop.f32.mrf.mxu0
  %1872 = vmatprep.mubr.f32.mxu0 0.0
  %v1873 = vand.u32 %v85, 4294901760
  %v1874 = vsub.f32 %v85, %v1873
  %1875 = vmatmul.mubr.f32.gmra.mxu0 %v1874
  %v1876 = vpop.f32.mrf.mxu0
  %v1877 = vadd.f32 %v1690, %v1876
  %v1878 = vpop.f32.mrf.mxu0
  %1879 = vmatprep.mubr.f32.mxu0 0.0
  %v1880 = vand.u32 %v88, 4294901760
  %v1881 = vsub.f32 %v88, %v1880
  %1882 = vmatmul.mubr.f32.gmra.mxu0 %v1881
  %v1883 = vpop.f32.mrf.mxu0
  %v1884 = vadd.f32 %v1696, %v1883
  %v1885 = vpop.f32.mrf.mxu0
  %1886 = vmatprep.mubr.f32.mxu0 0.0
  %v1887 = vand.u32 %v91, 4294901760
  %v1888 = vsub.f32 %v91, %v1887
  %1889 = vmatmul.mubr.f32.gmra.mxu0 %v1888
  %v1890 = vpop.f32.mrf.mxu0
  %v1891 = vadd.f32 %v1702, %v1890
  %v1892 = vpop.f32.mrf.mxu0
  %1893 = vmatprep.mubr.f32.mxu0 0.0
  %v1894 = vand.u32 %v94, 4294901760
  %v1895 = vsub.f32 %v94, %v1894
  %1896 = vmatmul.mubr.f32.gmra.mxu0 %v1895
  %v1897 = vpop.f32.mrf.mxu0
  %v1898 = vadd.f32 %v1708, %v1897
  %v1899 = vpop.f32.mrf.mxu0
  %1900 = vmatprep.mubr.f32.mxu0 0.0
  %v1901 = vand.u32 %v97, 4294901760
  %v1902 = vsub.f32 %v97, %v1901
  %1903 = vmatmul.mubr.f32.gmra.mxu0 %v1902
  %v1904 = vpop.f32.mrf.mxu0
  %v1905 = vadd.f32 %v1714, %v1904
  %v1906 = vpop.f32.mrf.mxu0
  %1907 = vmatprep.mubr.f32.mxu0 0.0
  %v1908 = vand.u32 %v100, 4294901760
  %v1909 = vsub.f32 %v100, %v1908
  %1910 = vmatmul.mubr.f32.gmra.mxu0 %v1909
  %v1911 = vpop.f32.mrf.mxu0
  %v1912 = vadd.f32 %v1720, %v1911
  %v1913 = vpop.f32.mrf.mxu0
  %1914 = vmatprep.mubr.f32.mxu0 0.0
  %v1915 = vand.u32 %v103, 4294901760
  %v1916 = vsub.f32 %v103, %v1915
  %1917 = vmatmul.mubr.f32.gmra.mxu0 %v1916
  %v1918 = vpop.f32.mrf.mxu0
  %v1919 = vadd.f32 %v1726, %v1918
  %v1920 = vpop.f32.mrf.mxu0
  %1921 = vdwg.mxu0
  %1922 = vmatprep.subr.mxu0 0.0
  %1923 = vmatpush1.msra.mxu0 0.0
  %1924 = vmatprep.subr.mxu0 0.0
  %1925 = vmatpush1.msra.mxu0 0.0
  %1926 = vmatprep.subr.mxu0 0.0
  %1927 = vmatpush1.msra.mxu0 0.0
  %1928 = vmatprep.subr.mxu0 0.0
  %1929 = vmatpush1.msra.mxu0 0.0
  %1930 = vmatprep.subr.mxu0 0.0
  %1931 = vmatpush1.msra.mxu0 0.0
  %1932 = vmatprep.subr.mxu0 0.0
  %1933 = vmatpush1.msra.mxu0 0.0
  %1934 = vmatprep.subr.mxu0 0.0
  %1935 = vmatpush1.msra.mxu0 0.0
  %1936 = vmatprep.subr.mxu0 0.0
  %1937 = vmatpush1.msra.mxu0 0.0
  %1938 = vmatprep.subr.mxu0 0.0
  %v1939 = vand.u32 %v1294, 4294901760
  %1940 = vmatpush1.msra.mxu0 %v1939
  %1941 = vmatprep.subr.mxu0 0.0
  %v1942 = vand.u32 %v1293, 4294901760
  %1943 = vmatpush1.msra.mxu0 %v1942
  %1944 = vmatprep.subr.mxu0 0.0
  %v1945 = vand.u32 %v1292, 4294901760
  %1946 = vmatpush1.msra.mxu0 %v1945
  %1947 = vmatprep.subr.mxu0 0.0
  %v1948 = vand.u32 %v1291, 4294901760
  %1949 = vmatpush1.msra.mxu0 %v1948
  %1950 = vmatprep.subr.mxu0 0.0
  %v1951 = vand.u32 %v1290, 4294901760
  %1952 = vmatpush1.msra.mxu0 %v1951
  %1953 = vmatprep.subr.mxu0 0.0
  %v1954 = vand.u32 %v1289, 4294901760
  %1955 = vmatpush1.msra.mxu0 %v1954
  %1956 = vmatprep.subr.mxu0 0.0
  %v1957 = vand.u32 %v1288, 4294901760
  %1958 = vmatpush1.msra.mxu0 %v1957
  %1959 = vmatprep.subr.mxu0 0.0
  %v1960 = vand.u32 %v1287, 4294901760
  %1961 = vmatpush1.msra.mxu0 %v1960
  %1962 = vmatprep.subr.mxu0 0.0
  %1963 = vmatpush2.msra.mxu0 0.0
  %1964 = vmatprep.subr.mxu0 0.0
  %1965 = vmatpush2.msra.mxu0 0.0
  %1966 = vmatprep.subr.mxu0 0.0
  %1967 = vmatpush2.msra.mxu0 0.0
  %1968 = vmatprep.subr.mxu0 0.0
  %1969 = vmatpush2.msra.mxu0 0.0
  %1970 = vmatprep.subr.mxu0 0.0
  %1971 = vmatpush2.msra.mxu0 0.0
  %1972 = vmatprep.subr.mxu0 0.0
  %1973 = vmatpush2.msra.mxu0 0.0
  %1974 = vmatprep.subr.mxu0 0.0
  %1975 = vmatpush2.msra.mxu0 0.0
  %1976 = vmatprep.subr.mxu0 0.0
  %1977 = vmatpush2.msra.mxu0 0.0
  %1978 = vmatprep.subr.mxu0 0.0
  %1979 = vmatpush2.msra.mxu0 0.0
  %1980 = vmatprep.subr.mxu0 0.0
  %1981 = vmatpush2.msra.mxu0 0.0
  %1982 = vmatprep.subr.mxu0 0.0
  %1983 = vmatpush2.msra.mxu0 0.0
  %1984 = vmatprep.subr.mxu0 0.0
  %1985 = vmatpush2.msra.mxu0 0.0
  %1986 = vmatprep.subr.mxu0 0.0
  %1987 = vmatpush2.msra.mxu0 0.0
  %1988 = vmatprep.subr.mxu0 0.0
  %1989 = vmatpush2.msra.mxu0 0.0
  %1990 = vmatprep.subr.mxu0 0.0
  %1991 = vmatpush2.msra.mxu0 0.0
  %1992 = vmatprep.subr.mxu0 0.0
  %1993 = vmatpush2.msra.mxu0 0.0
  %1994 = vmatprep.mubr.f32.mxu0 0.0
  %v1995 = vand.u32 %v58, 4294901760
  %v1996 = vsub.f32 %v58, %v1995
  %v1997 = vand.u32 %v1996, 4294901760
  %1998 = vmatmul.mubr.f32.gmra.mxu0 %v1997
  %v1999 = vpop.f32.mrf.mxu0
  %v2000 = vadd.f32 %v1814, %v1999
  %v2001 = vpop.f32.mrf.mxu0
  %2002 = vmatprep.mubr.f32.mxu0 0.0
  %v2003 = vand.u32 %v61, 4294901760
  %v2004 = vsub.f32 %v61, %v2003
  %v2005 = vand.u32 %v2004, 4294901760
  %2006 = vmatmul.mubr.f32.gmra.mxu0 %v2005
  %v2007 = vpop.f32.mrf.mxu0
  %v2008 = vadd.f32 %v1821, %v2007
  %v2009 = vpop.f32.mrf.mxu0
  %2010 = vmatprep.mubr.f32.mxu0 0.0
  %v2011 = vand.u32 %v64, 4294901760
  %v2012 = vsub.f32 %v64, %v2011
  %v2013 = vand.u32 %v2012, 4294901760
  %2014 = vmatmul.mubr.f32.gmra.mxu0 %v2013
  %v2015 = vpop.f32.mrf.mxu0
  %v2016 = vadd.f32 %v1828, %v2015
  %v2017 = vpop.f32.mrf.mxu0
  %2018 = vmatprep.mubr.f32.mxu0 0.0
  %v2019 = vand.u32 %v67, 4294901760
  %v2020 = vsub.f32 %v67, %v2019
  %v2021 = vand.u32 %v2020, 4294901760
  %2022 = vmatmul.mubr.f32.gmra.mxu0 %v2021
  %v2023 = vpop.f32.mrf.mxu0
  %v2024 = vadd.f32 %v1835, %v2023
  %v2025 = vpop.f32.mrf.mxu0
  %2026 = vmatprep.mubr.f32.mxu0 0.0
  %v2027 = vand.u32 %v70, 4294901760
  %v2028 = vsub.f32 %v70, %v2027
  %v2029 = vand.u32 %v2028, 4294901760
  %2030 = vmatmul.mubr.f32.gmra.mxu0 %v2029
  %v2031 = vpop.f32.mrf.mxu0
  %v2032 = vadd.f32 %v1842, %v2031
  %v2033 = vpop.f32.mrf.mxu0
  %2034 = vmatprep.mubr.f32.mxu0 0.0
  %v2035 = vand.u32 %v73, 4294901760
  %v2036 = vsub.f32 %v73, %v2035
  %v2037 = vand.u32 %v2036, 4294901760
  %2038 = vmatmul.mubr.f32.gmra.mxu0 %v2037
  %v2039 = vpop.f32.mrf.mxu0
  %v2040 = vadd.f32 %v1849, %v2039
  %v2041 = vpop.f32.mrf.mxu0
  %2042 = vmatprep.mubr.f32.mxu0 0.0
  %v2043 = vand.u32 %v76, 4294901760
  %v2044 = vsub.f32 %v76, %v2043
  %v2045 = vand.u32 %v2044, 4294901760
  %2046 = vmatmul.mubr.f32.gmra.mxu0 %v2045
  %v2047 = vpop.f32.mrf.mxu0
  %v2048 = vadd.f32 %v1856, %v2047
  %v2049 = vpop.f32.mrf.mxu0
  %2050 = vmatprep.mubr.f32.mxu0 0.0
  %v2051 = vand.u32 %v79, 4294901760
  %v2052 = vsub.f32 %v79, %v2051
  %v2053 = vand.u32 %v2052, 4294901760
  %2054 = vmatmul.mubr.f32.gmra.mxu0 %v2053
  %v2055 = vpop.f32.mrf.mxu0
  %v2056 = vadd.f32 %v1863, %v2055
  %v2057 = vpop.f32.mrf.mxu0
  %2058 = vmatprep.mubr.f32.mxu0 0.0
  %v2059 = vand.u32 %v82, 4294901760
  %v2060 = vsub.f32 %v82, %v2059
  %v2061 = vand.u32 %v2060, 4294901760
  %2062 = vmatmul.mubr.f32.gmra.mxu0 %v2061
  %v2063 = vpop.f32.mrf.mxu0
  %v2064 = vadd.f32 %v1870, %v2063
  %v2065 = vpop.f32.mrf.mxu0
  %2066 = vmatprep.mubr.f32.mxu0 0.0
  %v2067 = vand.u32 %v85, 4294901760
  %v2068 = vsub.f32 %v85, %v2067
  %v2069 = vand.u32 %v2068, 4294901760
  %2070 = vmatmul.mubr.f32.gmra.mxu0 %v2069
  %v2071 = vpop.f32.mrf.mxu0
  %v2072 = vadd.f32 %v1877, %v2071
  %v2073 = vpop.f32.mrf.mxu0
  %2074 = vmatprep.mubr.f32.mxu0 0.0
  %v2075 = vand.u32 %v88, 4294901760
  %v2076 = vsub.f32 %v88, %v2075
  %v2077 = vand.u32 %v2076, 4294901760
  %2078 = vmatmul.mubr.f32.gmra.mxu0 %v2077
  %v2079 = vpop.f32.mrf.mxu0
  %v2080 = vadd.f32 %v1884, %v2079
  %v2081 = vpop.f32.mrf.mxu0
  %2082 = vmatprep.mubr.f32.mxu0 0.0
  %v2083 = vand.u32 %v91, 4294901760
  %v2084 = vsub.f32 %v91, %v2083
  %v2085 = vand.u32 %v2084, 4294901760
  %2086 = vmatmul.mubr.f32.gmra.mxu0 %v2085
  %v2087 = vpop.f32.mrf.mxu0
  %v2088 = vadd.f32 %v1891, %v2087
  %v2089 = vpop.f32.mrf.mxu0
  %2090 = vmatprep.mubr.f32.mxu0 0.0
  %v2091 = vand.u32 %v94, 4294901760
  %v2092 = vsub.f32 %v94, %v2091
  %v2093 = vand.u32 %v2092, 4294901760
  %2094 = vmatmul.mubr.f32.gmra.mxu0 %v2093
  %v2095 = vpop.f32.mrf.mxu0
  %v2096 = vadd.f32 %v1898, %v2095
  %v2097 = vpop.f32.mrf.mxu0
  %2098 = vmatprep.mubr.f32.mxu0 0.0
  %v2099 = vand.u32 %v97, 4294901760
  %v2100 = vsub.f32 %v97, %v2099
  %v2101 = vand.u32 %v2100, 4294901760
  %2102 = vmatmul.mubr.f32.gmra.mxu0 %v2101
  %v2103 = vpop.f32.mrf.mxu0
  %v2104 = vadd.f32 %v1905, %v2103
  %v2105 = vpop.f32.mrf.mxu0
  %2106 = vmatprep.mubr.f32.mxu0 0.0
  %v2107 = vand.u32 %v100, 4294901760
  %v2108 = vsub.f32 %v100, %v2107
  %v2109 = vand.u32 %v2108, 4294901760
  %2110 = vmatmul.mubr.f32.gmra.mxu0 %v2109
  %v2111 = vpop.f32.mrf.mxu0
  %v2112 = vadd.f32 %v1912, %v2111
  %v2113 = vpop.f32.mrf.mxu0
  %2114 = vmatprep.mubr.f32.mxu0 0.0
  %v2115 = vand.u32 %v103, 4294901760
  %v2116 = vsub.f32 %v103, %v2115
  %v2117 = vand.u32 %v2116, 4294901760
  %2118 = vmatmul.mubr.f32.gmra.mxu0 %v2117
  %v2119 = vpop.f32.mrf.mxu0
  %v2120 = vadd.f32 %v1919, %v2119
  %v2121 = vpop.f32.mrf.mxu0
  %2122 = vdwg.mxu0
  %2123 = vmatprep.subr.mxu0 0.0
  %2124 = vmatpush1.msra.mxu0 0.0
  %2125 = vmatprep.subr.mxu0 0.0
  %2126 = vmatpush1.msra.mxu0 0.0
  %2127 = vmatprep.subr.mxu0 0.0
  %2128 = vmatpush1.msra.mxu0 0.0
  %2129 = vmatprep.subr.mxu0 0.0
  %2130 = vmatpush1.msra.mxu0 0.0
  %2131 = vmatprep.subr.mxu0 0.0
  %2132 = vmatpush1.msra.mxu0 0.0
  %2133 = vmatprep.subr.mxu0 0.0
  %2134 = vmatpush1.msra.mxu0 0.0
  %2135 = vmatprep.subr.mxu0 0.0
  %2136 = vmatpush1.msra.mxu0 0.0
  %2137 = vmatprep.subr.mxu0 0.0
  %2138 = vmatpush1.msra.mxu0 0.0
  %2139 = vmatprep.subr.mxu0 0.0
  %v2140 = vand.u32 %v1294, 4294901760
  %v2141 = vsub.f32 %v1294, %v2140
  %v2142 = vand.u32 %v2141, 4294901760
  %2143 = vmatpush1.msra.mxu0 %v2142
  %2144 = vmatprep.subr.mxu0 0.0
  %v2145 = vand.u32 %v1293, 4294901760
  %v2146 = vsub.f32 %v1293, %v2145
  %v2147 = vand.u32 %v2146, 4294901760
  %2148 = vmatpush1.msra.mxu0 %v2147
  %2149 = vmatprep.subr.mxu0 0.0
  %v2150 = vand.u32 %v1292, 4294901760
  %v2151 = vsub.f32 %v1292, %v2150
  %v2152 = vand.u32 %v2151, 4294901760
  %2153 = vmatpush1.msra.mxu0 %v2152
  %2154 = vmatprep.subr.mxu0 0.0
  %v2155 = vand.u32 %v1291, 4294901760
  %v2156 = vsub.f32 %v1291, %v2155
  %v2157 = vand.u32 %v2156, 4294901760
  %2158 = vmatpush1.msra.mxu0 %v2157
  %2159 = vmatprep.subr.mxu0 0.0
  %v2160 = vand.u32 %v1290, 4294901760
  %v2161 = vsub.f32 %v1290, %v2160
  %v2162 = vand.u32 %v2161, 4294901760
  %2163 = vmatpush1.msra.mxu0 %v2162
  %2164 = vmatprep.subr.mxu0 0.0
  %v2165 = vand.u32 %v1289, 4294901760
  %v2166 = vsub.f32 %v1289, %v2165
  %v2167 = vand.u32 %v2166, 4294901760
  %2168 = vmatpush1.msra.mxu0 %v2167
  %2169 = vmatprep.subr.mxu0 0.0
  %v2170 = vand.u32 %v1288, 4294901760
  %v2171 = vsub.f32 %v1288, %v2170
  %v2172 = vand.u32 %v2171, 4294901760
  %2173 = vmatpush1.msra.mxu0 %v2172
  %2174 = vmatprep.subr.mxu0 0.0
  %v2175 = vand.u32 %v1287, 4294901760
  %v2176 = vsub.f32 %v1287, %v2175
  %v2177 = vand.u32 %v2176, 4294901760
  %2178 = vmatpush1.msra.mxu0 %v2177
  %2179 = vmatprep.subr.mxu0 0.0
  %2180 = vmatpush2.msra.mxu0 0.0
  %2181 = vmatprep.subr.mxu0 0.0
  %2182 = vmatpush2.msra.mxu0 0.0
  %2183 = vmatprep.subr.mxu0 0.0
  %2184 = vmatpush2.msra.mxu0 0.0
  %2185 = vmatprep.subr.mxu0 0.0
  %2186 = vmatpush2.msra.mxu0 0.0
  %2187 = vmatprep.subr.mxu0 0.0
  %2188 = vmatpush2.msra.mxu0 0.0
  %2189 = vmatprep.subr.mxu0 0.0
  %2190 = vmatpush2.msra.mxu0 0.0
  %2191 = vmatprep.subr.mxu0 0.0
  %2192 = vmatpush2.msra.mxu0 0.0
  %2193 = vmatprep.subr.mxu0 0.0
  %2194 = vmatpush2.msra.mxu0 0.0
  %2195 = vmatprep.subr.mxu0 0.0
  %2196 = vmatpush2.msra.mxu0 0.0
  %2197 = vmatprep.subr.mxu0 0.0
  %2198 = vmatpush2.msra.mxu0 0.0
  %2199 = vmatprep.subr.mxu0 0.0
  %2200 = vmatpush2.msra.mxu0 0.0
  %2201 = vmatprep.subr.mxu0 0.0
  %2202 = vmatpush2.msra.mxu0 0.0
  %2203 = vmatprep.subr.mxu0 0.0
  %2204 = vmatpush2.msra.mxu0 0.0
  %2205 = vmatprep.subr.mxu0 0.0
  %2206 = vmatpush2.msra.mxu0 0.0
  %2207 = vmatprep.subr.mxu0 0.0
  %2208 = vmatpush2.msra.mxu0 0.0
  %2209 = vmatprep.subr.mxu0 0.0
  %2210 = vmatpush2.msra.mxu0 0.0
  %2211 = vmatprep.mubr.f32.mxu0 0.0
  %v2212 = vand.u32 %v58, 4294901760
  %2213 = vmatmul.mubr.f32.gmra.mxu0 %v2212
  %v2214 = vpop.f32.mrf.mxu0
  %v2215 = vadd.f32 %v2000, %v2214
  %v2216 = vpop.f32.mrf.mxu0
  %2217 = vmatprep.mubr.f32.mxu0 0.0
  %v2218 = vand.u32 %v61, 4294901760
  %2219 = vmatmul.mubr.f32.gmra.mxu0 %v2218
  %v2220 = vpop.f32.mrf.mxu0
  %v2221 = vadd.f32 %v2008, %v2220
  %v2222 = vpop.f32.mrf.mxu0
  %2223 = vmatprep.mubr.f32.mxu0 0.0
  %v2224 = vand.u32 %v64, 4294901760
  %2225 = vmatmul.mubr.f32.gmra.mxu0 %v2224
  %v2226 = vpop.f32.mrf.mxu0
  %v2227 = vadd.f32 %v2016, %v2226
  %v2228 = vpop.f32.mrf.mxu0
  %2229 = vmatprep.mubr.f32.mxu0 0.0
  %v2230 = vand.u32 %v67, 4294901760
  %2231 = vmatmul.mubr.f32.gmra.mxu0 %v2230
  %v2232 = vpop.f32.mrf.mxu0
  %v2233 = vadd.f32 %v2024, %v2232
  %v2234 = vpop.f32.mrf.mxu0
  %2235 = vmatprep.mubr.f32.mxu0 0.0
  %v2236 = vand.u32 %v70, 4294901760
  %2237 = vmatmul.mubr.f32.gmra.mxu0 %v2236
  %v2238 = vpop.f32.mrf.mxu0
  %v2239 = vadd.f32 %v2032, %v2238
  %v2240 = vpop.f32.mrf.mxu0
  %2241 = vmatprep.mubr.f32.mxu0 0.0
  %v2242 = vand.u32 %v73, 4294901760
  %2243 = vmatmul.mubr.f32.gmra.mxu0 %v2242
  %v2244 = vpop.f32.mrf.mxu0
  %v2245 = vadd.f32 %v2040, %v2244
  %v2246 = vpop.f32.mrf.mxu0
  %2247 = vmatprep.mubr.f32.mxu0 0.0
  %v2248 = vand.u32 %v76, 4294901760
  %2249 = vmatmul.mubr.f32.gmra.mxu0 %v2248
  %v2250 = vpop.f32.mrf.mxu0
  %v2251 = vadd.f32 %v2048, %v2250
  %v2252 = vpop.f32.mrf.mxu0
  %2253 = vmatprep.mubr.f32.mxu0 0.0
  %v2254 = vand.u32 %v79, 4294901760
  %2255 = vmatmul.mubr.f32.gmra.mxu0 %v2254
  %v2256 = vpop.f32.mrf.mxu0
  %v2257 = vadd.f32 %v2056, %v2256
  %v2258 = vpop.f32.mrf.mxu0
  %2259 = vmatprep.mubr.f32.mxu0 0.0
  %v2260 = vand.u32 %v82, 4294901760
  %2261 = vmatmul.mubr.f32.gmra.mxu0 %v2260
  %v2262 = vpop.f32.mrf.mxu0
  %v2263 = vadd.f32 %v2064, %v2262
  %v2264 = vpop.f32.mrf.mxu0
  %2265 = vmatprep.mubr.f32.mxu0 0.0
  %v2266 = vand.u32 %v85, 4294901760
  %2267 = vmatmul.mubr.f32.gmra.mxu0 %v2266
  %v2268 = vpop.f32.mrf.mxu0
  %v2269 = vadd.f32 %v2072, %v2268
  %v2270 = vpop.f32.mrf.mxu0
  %2271 = vmatprep.mubr.f32.mxu0 0.0
  %v2272 = vand.u32 %v88, 4294901760
  %2273 = vmatmul.mubr.f32.gmra.mxu0 %v2272
  %v2274 = vpop.f32.mrf.mxu0
  %v2275 = vadd.f32 %v2080, %v2274
  %v2276 = vpop.f32.mrf.mxu0
  %2277 = vmatprep.mubr.f32.mxu0 0.0
  %v2278 = vand.u32 %v91, 4294901760
  %2279 = vmatmul.mubr.f32.gmra.mxu0 %v2278
  %v2280 = vpop.f32.mrf.mxu0
  %v2281 = vadd.f32 %v2088, %v2280
  %v2282 = vpop.f32.mrf.mxu0
  %2283 = vmatprep.mubr.f32.mxu0 0.0
  %v2284 = vand.u32 %v94, 4294901760
  %2285 = vmatmul.mubr.f32.gmra.mxu0 %v2284
  %v2286 = vpop.f32.mrf.mxu0
  %v2287 = vadd.f32 %v2096, %v2286
  %v2288 = vpop.f32.mrf.mxu0
  %2289 = vmatprep.mubr.f32.mxu0 0.0
  %v2290 = vand.u32 %v97, 4294901760
  %2291 = vmatmul.mubr.f32.gmra.mxu0 %v2290
  %v2292 = vpop.f32.mrf.mxu0
  %v2293 = vadd.f32 %v2104, %v2292
  %v2294 = vpop.f32.mrf.mxu0
  %2295 = vmatprep.mubr.f32.mxu0 0.0
  %v2296 = vand.u32 %v100, 4294901760
  %2297 = vmatmul.mubr.f32.gmra.mxu0 %v2296
  %v2298 = vpop.f32.mrf.mxu0
  %v2299 = vadd.f32 %v2112, %v2298
  %v2300 = vpop.f32.mrf.mxu0
  %2301 = vmatprep.mubr.f32.mxu0 0.0
  %v2302 = vand.u32 %v103, 4294901760
  %2303 = vmatmul.mubr.f32.gmra.mxu0 %v2302
  %v2304 = vpop.f32.mrf.mxu0
  %v2305 = vadd.f32 %v2120, %v2304
  %v2306 = vpop.f32.mrf.mxu0
  %2307 = vdwg.mxu0
  %2308 = vmatprep.subr.mxu0 0.0
  %2309 = vmatpush1.msra.mxu0 0.0
  %2310 = vmatprep.subr.mxu0 0.0
  %2311 = vmatpush1.msra.mxu0 0.0
  %2312 = vmatprep.subr.mxu0 0.0
  %2313 = vmatpush1.msra.mxu0 0.0
  %2314 = vmatprep.subr.mxu0 0.0
  %2315 = vmatpush1.msra.mxu0 0.0
  %2316 = vmatprep.subr.mxu0 0.0
  %2317 = vmatpush1.msra.mxu0 0.0
  %2318 = vmatprep.subr.mxu0 0.0
  %2319 = vmatpush1.msra.mxu0 0.0
  %2320 = vmatprep.subr.mxu0 0.0
  %2321 = vmatpush1.msra.mxu0 0.0
  %2322 = vmatprep.subr.mxu0 0.0
  %2323 = vmatpush1.msra.mxu0 0.0
  %2324 = vmatprep.subr.mxu0 0.0
  %v2325 = vand.u32 %v1294, 4294901760
  %2326 = vmatpush1.msra.mxu0 %v2325
  %2327 = vmatprep.subr.mxu0 0.0
  %v2328 = vand.u32 %v1293, 4294901760
  %2329 = vmatpush1.msra.mxu0 %v2328
  %2330 = vmatprep.subr.mxu0 0.0
  %v2331 = vand.u32 %v1292, 4294901760
  %2332 = vmatpush1.msra.mxu0 %v2331
  %2333 = vmatprep.subr.mxu0 0.0
  %v2334 = vand.u32 %v1291, 4294901760
  %2335 = vmatpush1.msra.mxu0 %v2334
  %2336 = vmatprep.subr.mxu0 0.0
  %v2337 = vand.u32 %v1290, 4294901760
  %2338 = vmatpush1.msra.mxu0 %v2337
  %2339 = vmatprep.subr.mxu0 0.0
  %v2340 = vand.u32 %v1289, 4294901760
  %2341 = vmatpush1.msra.mxu0 %v2340
  %2342 = vmatprep.subr.mxu0 0.0
  %v2343 = vand.u32 %v1288, 4294901760
  %2344 = vmatpush1.msra.mxu0 %v2343
  %2345 = vmatprep.subr.mxu0 0.0
  %v2346 = vand.u32 %v1287, 4294901760
  %2347 = vmatpush1.msra.mxu0 %v2346
  %2348 = vmatprep.subr.mxu0 0.0
  %2349 = vmatpush2.msra.mxu0 0.0
  %2350 = vmatprep.subr.mxu0 0.0
  %2351 = vmatpush2.msra.mxu0 0.0
  %2352 = vmatprep.subr.mxu0 0.0
  %2353 = vmatpush2.msra.mxu0 0.0
  %2354 = vmatprep.subr.mxu0 0.0
  %2355 = vmatpush2.msra.mxu0 0.0
  %2356 = vmatprep.subr.mxu0 0.0
  %2357 = vmatpush2.msra.mxu0 0.0
  %2358 = vmatprep.subr.mxu0 0.0
  %2359 = vmatpush2.msra.mxu0 0.0
  %2360 = vmatprep.subr.mxu0 0.0
  %2361 = vmatpush2.msra.mxu0 0.0
  %2362 = vmatprep.subr.mxu0 0.0
  %2363 = vmatpush2.msra.mxu0 0.0
  %2364 = vmatprep.subr.mxu0 0.0
  %2365 = vmatpush2.msra.mxu0 0.0
  %2366 = vmatprep.subr.mxu0 0.0
  %2367 = vmatpush2.msra.mxu0 0.0
  %2368 = vmatprep.subr.mxu0 0.0
  %2369 = vmatpush2.msra.mxu0 0.0
  %2370 = vmatprep.subr.mxu0 0.0
  %2371 = vmatpush2.msra.mxu0 0.0
  %2372 = vmatprep.subr.mxu0 0.0
  %2373 = vmatpush2.msra.mxu0 0.0
  %2374 = vmatprep.subr.mxu0 0.0
  %2375 = vmatpush2.msra.mxu0 0.0
  %2376 = vmatprep.subr.mxu0 0.0
  %2377 = vmatpush2.msra.mxu0 0.0
  %2378 = vmatprep.subr.mxu0 0.0
  %2379 = vmatpush2.msra.mxu0 0.0
  %2380 = vmatprep.mubr.f32.mxu0 0.0
  %v2381 = vand.u32 %v58, 4294901760
  %2382 = vmatmul.mubr.f32.gmra.mxu0 %v2381
  %v2383 = vpop.f32.mrf.mxu0
  %v2384 = vadd.f32 %v2215, %v2383
  %v2385 = vpop.f32.mrf.mxu0
  %2386 = vmatprep.mubr.f32.mxu0 0.0
  %v2387 = vand.u32 %v61, 4294901760
  %2388 = vmatmul.mubr.f32.gmra.mxu0 %v2387
  %v2389 = vpop.f32.mrf.mxu0
  %v2390 = vadd.f32 %v2221, %v2389
  %v2391 = vpop.f32.mrf.mxu0
  %2392 = vmatprep.mubr.f32.mxu0 0.0
  %v2393 = vand.u32 %v64, 4294901760
  %2394 = vmatmul.mubr.f32.gmra.mxu0 %v2393
  %v2395 = vpop.f32.mrf.mxu0
  %v2396 = vadd.f32 %v2227, %v2395
  %v2397 = vpop.f32.mrf.mxu0
  %2398 = vmatprep.mubr.f32.mxu0 0.0
  %v2399 = vand.u32 %v67, 4294901760
  %2400 = vmatmul.mubr.f32.gmra.mxu0 %v2399
  %v2401 = vpop.f32.mrf.mxu0
  %v2402 = vadd.f32 %v2233, %v2401
  %v2403 = vpop.f32.mrf.mxu0
  %2404 = vmatprep.mubr.f32.mxu0 0.0
  %v2405 = vand.u32 %v70, 4294901760
  %2406 = vmatmul.mubr.f32.gmra.mxu0 %v2405
  %v2407 = vpop.f32.mrf.mxu0
  %v2408 = vadd.f32 %v2239, %v2407
  %v2409 = vpop.f32.mrf.mxu0
  %2410 = vmatprep.mubr.f32.mxu0 0.0
  %v2411 = vand.u32 %v73, 4294901760
  %2412 = vmatmul.mubr.f32.gmra.mxu0 %v2411
  %v2413 = vpop.f32.mrf.mxu0
  %v2414 = vadd.f32 %v2245, %v2413
  %v2415 = vpop.f32.mrf.mxu0
  %2416 = vmatprep.mubr.f32.mxu0 0.0
  %v2417 = vand.u32 %v76, 4294901760
  %2418 = vmatmul.mubr.f32.gmra.mxu0 %v2417
  %v2419 = vpop.f32.mrf.mxu0
  %v2420 = vadd.f32 %v2251, %v2419
  %v2421 = vpop.f32.mrf.mxu0
  %2422 = vmatprep.mubr.f32.mxu0 0.0
  %v2423 = vand.u32 %v79, 4294901760
  %2424 = vmatmul.mubr.f32.gmra.mxu0 %v2423
  %v2425 = vpop.f32.mrf.mxu0
  %v2426 = vadd.f32 %v2257, %v2425
  %v2427 = vpop.f32.mrf.mxu0
  %2428 = vmatprep.mubr.f32.mxu0 0.0
  %v2429 = vand.u32 %v82, 4294901760
  %2430 = vmatmul.mubr.f32.gmra.mxu0 %v2429
  %v2431 = vpop.f32.mrf.mxu0
  %v2432 = vadd.f32 %v2263, %v2431
  %v2433 = vpop.f32.mrf.mxu0
  %2434 = vmatprep.mubr.f32.mxu0 0.0
  %v2435 = vand.u32 %v85, 4294901760
  %2436 = vmatmul.mubr.f32.gmra.mxu0 %v2435
  %v2437 = vpop.f32.mrf.mxu0
  %v2438 = vadd.f32 %v2269, %v2437
  %v2439 = vpop.f32.mrf.mxu0
  %2440 = vmatprep.mubr.f32.mxu0 0.0
  %v2441 = vand.u32 %v88, 4294901760
  %2442 = vmatmul.mubr.f32.gmra.mxu0 %v2441
  %v2443 = vpop.f32.mrf.mxu0
  %v2444 = vadd.f32 %v2275, %v2443
  %v2445 = vpop.f32.mrf.mxu0
  %2446 = vmatprep.mubr.f32.mxu0 0.0
  %v2447 = vand.u32 %v91, 4294901760
  %2448 = vmatmul.mubr.f32.gmra.mxu0 %v2447
  %v2449 = vpop.f32.mrf.mxu0
  %v2450 = vadd.f32 %v2281, %v2449
  %v2451 = vpop.f32.mrf.mxu0
  %2452 = vmatprep.mubr.f32.mxu0 0.0
  %v2453 = vand.u32 %v94, 4294901760
  %2454 = vmatmul.mubr.f32.gmra.mxu0 %v2453
  %v2455 = vpop.f32.mrf.mxu0
  %v2456 = vadd.f32 %v2287, %v2455
  %v2457 = vpop.f32.mrf.mxu0
  %2458 = vmatprep.mubr.f32.mxu0 0.0
  %v2459 = vand.u32 %v97, 4294901760
  %2460 = vmatmul.mubr.f32.gmra.mxu0 %v2459
  %v2461 = vpop.f32.mrf.mxu0
  %v2462 = vadd.f32 %v2293, %v2461
  %v2463 = vpop.f32.mrf.mxu0
  %2464 = vmatprep.mubr.f32.mxu0 0.0
  %v2465 = vand.u32 %v100, 4294901760
  %2466 = vmatmul.mubr.f32.gmra.mxu0 %v2465
  %v2467 = vpop.f32.mrf.mxu0
  %v2468 = vadd.f32 %v2299, %v2467
  %v2469 = vpop.f32.mrf.mxu0
  %2470 = vmatprep.mubr.f32.mxu0 0.0
  %v2471 = vand.u32 %v103, 4294901760
  %2472 = vmatmul.mubr.f32.gmra.mxu0 %v2471
  %v2473 = vpop.f32.mrf.mxu0
  %v2474 = vadd.f32 %v2305, %v2473
  %v2475 = vpop.f32.mrf.mxu0
  %2476 = vdwg.mxu0
  %v2477 = vmax.f32 %v1194, %v2384
  %v2478 = vmax.f32 %v1200, %v2390
  %v2479 = vmax.f32 %v1206, %v2396
  %v2480 = vmax.f32 %v1212, %v2402
  %v2481 = vmax.f32 %v1218, %v2408
  %v2482 = vmax.f32 %v1224, %v2414
  %v2483 = vmax.f32 %v1230, %v2420
  %v2484 = vmax.f32 %v1236, %v2426
  %v2485 = vmax.f32 %v1242, %v2432
  %v2486 = vmax.f32 %v1248, %v2438
  %v2487 = vmax.f32 %v1254, %v2444
  %v2488 = vmax.f32 %v1260, %v2450
  %v2489 = vmax.f32 %v1266, %v2456
  %v2490 = vmax.f32 %v1272, %v2462
  %v2491 = vmax.f32 %v1278, %v2468
  %v2492 = vmax.f32 %v1284, %v2474
  %v2493 = vld [vmem:[%s3] sm:$0x1]
  %v2495 = vlaneseq
  %v2496 = vshrl.u32 %v2495, 7
  %v2497 = vsub.s32 0, %v2496
  %v2498 = vrot.slane %v2493, %v2497
  %v2500 = vadd.f32 %v2477, %v2498
  %v2501 = vadd.f32 %v2478, %v2498
  %v2502 = vadd.f32 %v2479, %v2498
  %v2503 = vadd.f32 %v2480, %v2498
  %v2504 = vadd.f32 %v2481, %v2498
  %v2505 = vadd.f32 %v2482, %v2498
  %v2506 = vadd.f32 %v2483, %v2498
  %v2507 = vadd.f32 %v2484, %v2498
  %v2508 = vadd.f32 %v2485, %v2498
  %v2509 = vadd.f32 %v2486, %v2498
  %v2510 = vadd.f32 %v2487, %v2498
  %v2511 = vadd.f32 %v2488, %v2498
  %v2512 = vadd.f32 %v2489, %v2498
  %v2513 = vadd.f32 %v2490, %v2498
  %v2514 = vadd.f32 %v2491, %v2498
  %v2515 = vadd.f32 %v2492, %v2498
  %v2516 = vtanh.pop %v2500
  %v2517 = vtanh.pop %v2501
  %v2518 = vtanh.pop %v2502
  %v2519 = vtanh.pop %v2503
  %v2520 = vtanh.pop %v2504
  %v2521 = vtanh.pop %v2505
  %v2522 = vtanh.pop %v2506
  %v2523 = vtanh.pop %v2507
  %v2524 = vtanh.pop %v2508
  %v2525 = vtanh.pop %v2509
  %v2526 = vtanh.pop %v2510
  %v2527 = vtanh.pop %v2511
  %v2528 = vtanh.pop %v2512
  %v2529 = vtanh.pop %v2513
  %v2530 = vtanh.pop %v2514
  %v2531 = vtanh.pop %v2515
  %v2532 = vld [vmem:[%s4] sm:$0xff]
  %v2533 = vld [vmem:[%s4 + $0x8] sm:$0xff]
  %v2534 = vld [vmem:[%s4 + $0x10] sm:$0xff]
  %v2535 = vld [vmem:[%s4 + $0x18] sm:$0xff]
  %v2536 = vld [vmem:[%s4 + $0x20] sm:$0x7]
  %vm2537 = vcmask 285696
  %v2539 = vsel %vm2537, %v2516, 0
  %v2542 = vsel %vm2537, %v2517, 0
  %v2545 = vsel %vm2537, %v2518, 0
  %v2548 = vsel %vm2537, %v2519, 0
  %v2551 = vsel %vm2537, %v2520, 0
  %v2554 = vsel %vm2537, %v2521, 0
  %v2557 = vsel %vm2537, %v2522, 0
  %v2560 = vsel %vm2537, %v2523, 0
  %v2563 = vsel %vm2537, %v2524, 0
  %v2566 = vsel %vm2537, %v2525, 0
  %v2569 = vsel %vm2537, %v2526, 0
  %v2572 = vsel %vm2537, %v2527, 0
  %v2575 = vsel %vm2537, %v2528, 0
  %v2578 = vsel %vm2537, %v2529, 0
  %v2581 = vsel %vm2537, %v2530, 0
  %v2584 = vsel %vm2537, %v2531, 0
  %vm2586 = vcmask 1042432
  %v2588 = vsel %vm2586, %v2536, 0
  %2590 = vmatprep.subr.mxu0 0.0
  %2591 = vmatpush1.msra.mxu0 0.0
  %2592 = vmatprep.subr.mxu0 0.0
  %2593 = vmatpush1.msra.mxu0 0.0
  %2594 = vmatprep.subr.mxu0 0.0
  %2595 = vmatpush1.msra.mxu0 0.0
  %2596 = vmatprep.subr.mxu0 0.0
  %2597 = vmatpush1.msra.mxu0 0.0
  %2598 = vmatprep.subr.mxu0 0.0
  %2599 = vmatpush1.msra.mxu0 0.0
  %2600 = vmatprep.subr.mxu0 0.0
  %2601 = vmatpush1.msra.mxu0 0.0
  %2602 = vmatprep.subr.mxu0 0.0
  %2603 = vmatpush1.msra.mxu0 0.0
  %2604 = vmatprep.subr.mxu0 0.0
  %2605 = vmatpush1.msra.mxu0 0.0
  %2606 = vmatprep.subr.mxu0 0.0
  %2607 = vmatpush1.msra.mxu0 0.0
  %2608 = vmatprep.subr.mxu0 0.0
  %2609 = vmatpush1.msra.mxu0 0.0
  %2610 = vmatprep.subr.mxu0 0.0
  %2611 = vmatpush1.msra.mxu0 0.0
  %2612 = vmatprep.subr.mxu0 0.0
  %v2613 = vand.u32 %v2588, 4294901760
  %2614 = vmatpush1.msra.mxu0 %v2613
  %2615 = vmatprep.subr.mxu0 0.0
  %v2616 = vand.u32 %v2535, 4294901760
  %2617 = vmatpush1.msra.mxu0 %v2616
  %2618 = vmatprep.subr.mxu0 0.0
  %v2619 = vand.u32 %v2534, 4294901760
  %2620 = vmatpush1.msra.mxu0 %v2619
  %2621 = vmatprep.subr.mxu0 0.0
  %v2622 = vand.u32 %v2533, 4294901760
  %2623 = vmatpush1.msra.mxu0 %v2622
  %2624 = vmatprep.subr.mxu0 0.0
  %v2625 = vand.u32 %v2532, 4294901760
  %2626 = vmatpush1.msra.mxu0 %v2625
  %2627 = vmatprep.subr.mxu0 0.0
  %2628 = vmatpush2.msra.mxu0 0.0
  %2629 = vmatprep.subr.mxu0 0.0
  %2630 = vmatpush2.msra.mxu0 0.0
  %2631 = vmatprep.subr.mxu0 0.0
  %2632 = vmatpush2.msra.mxu0 0.0
  %2633 = vmatprep.subr.mxu0 0.0
  %2634 = vmatpush2.msra.mxu0 0.0
  %2635 = vmatprep.subr.mxu0 0.0
  %2636 = vmatpush2.msra.mxu0 0.0
  %2637 = vmatprep.subr.mxu0 0.0
  %2638 = vmatpush2.msra.mxu0 0.0
  %2639 = vmatprep.subr.mxu0 0.0
  %2640 = vmatpush2.msra.mxu0 0.0
  %2641 = vmatprep.subr.mxu0 0.0
  %2642 = vmatpush2.msra.mxu0 0.0
  %2643 = vmatprep.subr.mxu0 0.0
  %2644 = vmatpush2.msra.mxu0 0.0
  %2645 = vmatprep.subr.mxu0 0.0
  %2646 = vmatpush2.msra.mxu0 0.0
  %2647 = vmatprep.subr.mxu0 0.0
  %2648 = vmatpush2.msra.mxu0 0.0
  %2649 = vmatprep.subr.mxu0 0.0
  %2650 = vmatpush2.msra.mxu0 0.0
  %2651 = vmatprep.subr.mxu0 0.0
  %2652 = vmatpush2.msra.mxu0 0.0
  %2653 = vmatprep.subr.mxu0 0.0
  %2654 = vmatpush2.msra.mxu0 0.0
  %2655 = vmatprep.subr.mxu0 0.0
  %2656 = vmatpush2.msra.mxu0 0.0
  %2657 = vmatprep.subr.mxu0 0.0
  %2658 = vmatpush2.msra.mxu0 0.0
  %2659 = vmatprep.mubr.f32.mxu0 0.0
  %v2660 = vand.u32 %v2539, 4294901760
  %v2661 = vsub.f32 %v2539, %v2660
  %v2662 = vand.u32 %v2661, 4294901760
  %v2663 = vsub.f32 %v2661, %v2662
  %v2664 = vand.u32 %v2663, 4294901760
  %2665 = vmatmul.mubr.f32.gmra.mxu0 %v2664
  %v2666 = vpop.f32.mrf.mxu0
  %v2667 = vadd.f32 0.0, %v2666
  %v2668 = vpop.f32.mrf.mxu0
  %2669 = vmatprep.mubr.f32.mxu0 0.0
  %v2670 = vand.u32 %v2542, 4294901760
  %v2671 = vsub.f32 %v2542, %v2670
  %v2672 = vand.u32 %v2671, 4294901760
  %v2673 = vsub.f32 %v2671, %v2672
  %v2674 = vand.u32 %v2673, 4294901760
  %2675 = vmatmul.mubr.f32.gmra.mxu0 %v2674
  %v2676 = vpop.f32.mrf.mxu0
  %v2677 = vadd.f32 0.0, %v2676
  %v2678 = vpop.f32.mrf.mxu0
  %2679 = vmatprep.mubr.f32.mxu0 0.0
  %v2680 = vand.u32 %v2545, 4294901760
  %v2681 = vsub.f32 %v2545, %v2680
  %v2682 = vand.u32 %v2681, 4294901760
  %v2683 = vsub.f32 %v2681, %v2682
  %v2684 = vand.u32 %v2683, 4294901760
  %2685 = vmatmul.mubr.f32.gmra.mxu0 %v2684
  %v2686 = vpop.f32.mrf.mxu0
  %v2687 = vadd.f32 0.0, %v2686
  %v2688 = vpop.f32.mrf.mxu0
  %2689 = vmatprep.mubr.f32.mxu0 0.0
  %v2690 = vand.u32 %v2548, 4294901760
  %v2691 = vsub.f32 %v2548, %v2690
  %v2692 = vand.u32 %v2691, 4294901760
  %v2693 = vsub.f32 %v2691, %v2692
  %v2694 = vand.u32 %v2693, 4294901760
  %2695 = vmatmul.mubr.f32.gmra.mxu0 %v2694
  %v2696 = vpop.f32.mrf.mxu0
  %v2697 = vadd.f32 0.0, %v2696
  %v2698 = vpop.f32.mrf.mxu0
  %2699 = vmatprep.mubr.f32.mxu0 0.0
  %v2700 = vand.u32 %v2551, 4294901760
  %v2701 = vsub.f32 %v2551, %v2700
  %v2702 = vand.u32 %v2701, 4294901760
  %v2703 = vsub.f32 %v2701, %v2702
  %v2704 = vand.u32 %v2703, 4294901760
  %2705 = vmatmul.mubr.f32.gmra.mxu0 %v2704
  %v2706 = vpop.f32.mrf.mxu0
  %v2707 = vadd.f32 0.0, %v2706
  %v2708 = vpop.f32.mrf.mxu0
  %2709 = vmatprep.mubr.f32.mxu0 0.0
  %v2710 = vand.u32 %v2554, 4294901760
  %v2711 = vsub.f32 %v2554, %v2710
  %v2712 = vand.u32 %v2711, 4294901760
  %v2713 = vsub.f32 %v2711, %v2712
  %v2714 = vand.u32 %v2713, 4294901760
  %2715 = vmatmul.mubr.f32.gmra.mxu0 %v2714
  %v2716 = vpop.f32.mrf.mxu0
  %v2717 = vadd.f32 0.0, %v2716
  %v2718 = vpop.f32.mrf.mxu0
  %2719 = vmatprep.mubr.f32.mxu0 0.0
  %v2720 = vand.u32 %v2557, 4294901760
  %v2721 = vsub.f32 %v2557, %v2720
  %v2722 = vand.u32 %v2721, 4294901760
  %v2723 = vsub.f32 %v2721, %v2722
  %v2724 = vand.u32 %v2723, 4294901760
  %2725 = vmatmul.mubr.f32.gmra.mxu0 %v2724
  %v2726 = vpop.f32.mrf.mxu0
  %v2727 = vadd.f32 0.0, %v2726
  %v2728 = vpop.f32.mrf.mxu0
  %2729 = vmatprep.mubr.f32.mxu0 0.0
  %v2730 = vand.u32 %v2560, 4294901760
  %v2731 = vsub.f32 %v2560, %v2730
  %v2732 = vand.u32 %v2731, 4294901760
  %v2733 = vsub.f32 %v2731, %v2732
  %v2734 = vand.u32 %v2733, 4294901760
  %2735 = vmatmul.mubr.f32.gmra.mxu0 %v2734
  %v2736 = vpop.f32.mrf.mxu0
  %v2737 = vadd.f32 0.0, %v2736
  %v2738 = vpop.f32.mrf.mxu0
  %2739 = vmatprep.mubr.f32.mxu0 0.0
  %v2740 = vand.u32 %v2563, 4294901760
  %v2741 = vsub.f32 %v2563, %v2740
  %v2742 = vand.u32 %v2741, 4294901760
  %v2743 = vsub.f32 %v2741, %v2742
  %v2744 = vand.u32 %v2743, 4294901760
  %2745 = vmatmul.mubr.f32.gmra.mxu0 %v2744
  %v2746 = vpop.f32.mrf.mxu0
  %v2747 = vadd.f32 0.0, %v2746
  %v2748 = vpop.f32.mrf.mxu0
  %2749 = vmatprep.mubr.f32.mxu0 0.0
  %v2750 = vand.u32 %v2566, 4294901760
  %v2751 = vsub.f32 %v2566, %v2750
  %v2752 = vand.u32 %v2751, 4294901760
  %v2753 = vsub.f32 %v2751, %v2752
  %v2754 = vand.u32 %v2753, 4294901760
  %2755 = vmatmul.mubr.f32.gmra.mxu0 %v2754
  %v2756 = vpop.f32.mrf.mxu0
  %v2757 = vadd.f32 0.0, %v2756
  %v2758 = vpop.f32.mrf.mxu0
  %2759 = vmatprep.mubr.f32.mxu0 0.0
  %v2760 = vand.u32 %v2569, 4294901760
  %v2761 = vsub.f32 %v2569, %v2760
  %v2762 = vand.u32 %v2761, 4294901760
  %v2763 = vsub.f32 %v2761, %v2762
  %v2764 = vand.u32 %v2763, 4294901760
  %2765 = vmatmul.mubr.f32.gmra.mxu0 %v2764
  %v2766 = vpop.f32.mrf.mxu0
  %v2767 = vadd.f32 0.0, %v2766
  %v2768 = vpop.f32.mrf.mxu0
  %2769 = vmatprep.mubr.f32.mxu0 0.0
  %v2770 = vand.u32 %v2572, 4294901760
  %v2771 = vsub.f32 %v2572, %v2770
  %v2772 = vand.u32 %v2771, 4294901760
  %v2773 = vsub.f32 %v2771, %v2772
  %v2774 = vand.u32 %v2773, 4294901760
  %2775 = vmatmul.mubr.f32.gmra.mxu0 %v2774
  %v2776 = vpop.f32.mrf.mxu0
  %v2777 = vadd.f32 0.0, %v2776
  %v2778 = vpop.f32.mrf.mxu0
  %2779 = vmatprep.mubr.f32.mxu0 0.0
  %v2780 = vand.u32 %v2575, 4294901760
  %v2781 = vsub.f32 %v2575, %v2780
  %v2782 = vand.u32 %v2781, 4294901760
  %v2783 = vsub.f32 %v2781, %v2782
  %v2784 = vand.u32 %v2783, 4294901760
  %2785 = vmatmul.mubr.f32.gmra.mxu0 %v2784
  %v2786 = vpop.f32.mrf.mxu0
  %v2787 = vadd.f32 0.0, %v2786
  %v2788 = vpop.f32.mrf.mxu0
  %2789 = vmatprep.mubr.f32.mxu0 0.0
  %v2790 = vand.u32 %v2578, 4294901760
  %v2791 = vsub.f32 %v2578, %v2790
  %v2792 = vand.u32 %v2791, 4294901760
  %v2793 = vsub.f32 %v2791, %v2792
  %v2794 = vand.u32 %v2793, 4294901760
  %2795 = vmatmul.mubr.f32.gmra.mxu0 %v2794
  %v2796 = vpop.f32.mrf.mxu0
  %v2797 = vadd.f32 0.0, %v2796
  %v2798 = vpop.f32.mrf.mxu0
  %2799 = vmatprep.mubr.f32.mxu0 0.0
  %v2800 = vand.u32 %v2581, 4294901760
  %v2801 = vsub.f32 %v2581, %v2800
  %v2802 = vand.u32 %v2801, 4294901760
  %v2803 = vsub.f32 %v2801, %v2802
  %v2804 = vand.u32 %v2803, 4294901760
  %2805 = vmatmul.mubr.f32.gmra.mxu0 %v2804
  %v2806 = vpop.f32.mrf.mxu0
  %v2807 = vadd.f32 0.0, %v2806
  %v2808 = vpop.f32.mrf.mxu0
  %2809 = vmatprep.mubr.f32.mxu0 0.0
  %v2810 = vand.u32 %v2584, 4294901760
  %v2811 = vsub.f32 %v2584, %v2810
  %v2812 = vand.u32 %v2811, 4294901760
  %v2813 = vsub.f32 %v2811, %v2812
  %v2814 = vand.u32 %v2813, 4294901760
  %2815 = vmatmul.mubr.f32.gmra.mxu0 %v2814
  %v2816 = vpop.f32.mrf.mxu0
  %v2817 = vadd.f32 0.0, %v2816
  %v2818 = vpop.f32.mrf.mxu0
  %2819 = vdwg.mxu0
  %2820 = vmatprep.subr.mxu0 0.0
  %2821 = vmatpush1.msra.mxu0 0.0
  %2822 = vmatprep.subr.mxu0 0.0
  %2823 = vmatpush1.msra.mxu0 0.0
  %2824 = vmatprep.subr.mxu0 0.0
  %2825 = vmatpush1.msra.mxu0 0.0
  %2826 = vmatprep.subr.mxu0 0.0
  %2827 = vmatpush1.msra.mxu0 0.0
  %2828 = vmatprep.subr.mxu0 0.0
  %2829 = vmatpush1.msra.mxu0 0.0
  %2830 = vmatprep.subr.mxu0 0.0
  %2831 = vmatpush1.msra.mxu0 0.0
  %2832 = vmatprep.subr.mxu0 0.0
  %2833 = vmatpush1.msra.mxu0 0.0
  %2834 = vmatprep.subr.mxu0 0.0
  %2835 = vmatpush1.msra.mxu0 0.0
  %2836 = vmatprep.subr.mxu0 0.0
  %2837 = vmatpush1.msra.mxu0 0.0
  %2838 = vmatprep.subr.mxu0 0.0
  %2839 = vmatpush1.msra.mxu0 0.0
  %2840 = vmatprep.subr.mxu0 0.0
  %2841 = vmatpush1.msra.mxu0 0.0
  %2842 = vmatprep.subr.mxu0 0.0
  %v2843 = vand.u32 %v2588, 4294901760
  %v2844 = vsub.f32 %v2588, %v2843
  %v2845 = vand.u32 %v2844, 4294901760
  %v2846 = vsub.f32 %v2844, %v2845
  %v2847 = vand.u32 %v2846, 4294901760
  %2848 = vmatpush1.msra.mxu0 %v2847
  %2849 = vmatprep.subr.mxu0 0.0
  %v2850 = vand.u32 %v2535, 4294901760
  %v2851 = vsub.f32 %v2535, %v2850
  %v2852 = vand.u32 %v2851, 4294901760
  %v2853 = vsub.f32 %v2851, %v2852
  %v2854 = vand.u32 %v2853, 4294901760
  %2855 = vmatpush1.msra.mxu0 %v2854
  %2856 = vmatprep.subr.mxu0 0.0
  %v2857 = vand.u32 %v2534, 4294901760
  %v2858 = vsub.f32 %v2534, %v2857
  %v2859 = vand.u32 %v2858, 4294901760
  %v2860 = vsub.f32 %v2858, %v2859
  %v2861 = vand.u32 %v2860, 4294901760
  %2862 = vmatpush1.msra.mxu0 %v2861
  %2863 = vmatprep.subr.mxu0 0.0
  %v2864 = vand.u32 %v2533, 4294901760
  %v2865 = vsub.f32 %v2533, %v2864
  %v2866 = vand.u32 %v2865, 4294901760
  %v2867 = vsub.f32 %v2865, %v2866
  %v2868 = vand.u32 %v2867, 4294901760
  %2869 = vmatpush1.msra.mxu0 %v2868
  %2870 = vmatprep.subr.mxu0 0.0
  %v2871 = vand.u32 %v2532, 4294901760
  %v2872 = vsub.f32 %v2532, %v2871
  %v2873 = vand.u32 %v2872, 4294901760
  %v2874 = vsub.f32 %v2872, %v2873
  %v2875 = vand.u32 %v2874, 4294901760
  %2876 = vmatpush1.msra.mxu0 %v2875
  %2877 = vmatprep.subr.mxu0 0.0
  %2878 = vmatpush2.msra.mxu0 0.0
  %2879 = vmatprep.subr.mxu0 0.0
  %2880 = vmatpush2.msra.mxu0 0.0
  %2881 = vmatprep.subr.mxu0 0.0
  %2882 = vmatpush2.msra.mxu0 0.0
  %2883 = vmatprep.subr.mxu0 0.0
  %2884 = vmatpush2.msra.mxu0 0.0
  %2885 = vmatprep.subr.mxu0 0.0
  %2886 = vmatpush2.msra.mxu0 0.0
  %2887 = vmatprep.subr.mxu0 0.0
  %2888 = vmatpush2.msra.mxu0 0.0
  %2889 = vmatprep.subr.mxu0 0.0
  %2890 = vmatpush2.msra.mxu0 0.0
  %2891 = vmatprep.subr.mxu0 0.0
  %2892 = vmatpush2.msra.mxu0 0.0
  %2893 = vmatprep.subr.mxu0 0.0
  %2894 = vmatpush2.msra.mxu0 0.0
  %2895 = vmatprep.subr.mxu0 0.0
  %2896 = vmatpush2.msra.mxu0 0.0
  %2897 = vmatprep.subr.mxu0 0.0
  %2898 = vmatpush2.msra.mxu0 0.0
  %2899 = vmatprep.subr.mxu0 0.0
  %2900 = vmatpush2.msra.mxu0 0.0
  %2901 = vmatprep.subr.mxu0 0.0
  %2902 = vmatpush2.msra.mxu0 0.0
  %2903 = vmatprep.subr.mxu0 0.0
  %2904 = vmatpush2.msra.mxu0 0.0
  %2905 = vmatprep.subr.mxu0 0.0
  %2906 = vmatpush2.msra.mxu0 0.0
  %2907 = vmatprep.subr.mxu0 0.0
  %2908 = vmatpush2.msra.mxu0 0.0
  %2909 = vmatprep.mubr.f32.mxu0 0.0
  %v2910 = vand.u32 %v2539, 4294901760
  %2911 = vmatmul.mubr.f32.gmra.mxu0 %v2910
  %v2912 = vpop.f32.mrf.mxu0
  %v2913 = vadd.f32 %v2667, %v2912
  %v2914 = vpop.f32.mrf.mxu0
  %2915 = vmatprep.mubr.f32.mxu0 0.0
  %v2916 = vand.u32 %v2542, 4294901760
  %2917 = vmatmul.mubr.f32.gmra.mxu0 %v2916
  %v2918 = vpop.f32.mrf.mxu0
  %v2919 = vadd.f32 %v2677, %v2918
  %v2920 = vpop.f32.mrf.mxu0
  %2921 = vmatprep.mubr.f32.mxu0 0.0
  %v2922 = vand.u32 %v2545, 4294901760
  %2923 = vmatmul.mubr.f32.gmra.mxu0 %v2922
  %v2924 = vpop.f32.mrf.mxu0
  %v2925 = vadd.f32 %v2687, %v2924
  %v2926 = vpop.f32.mrf.mxu0
  %2927 = vmatprep.mubr.f32.mxu0 0.0
  %v2928 = vand.u32 %v2548, 4294901760
  %2929 = vmatmul.mubr.f32.gmra.mxu0 %v2928
  %v2930 = vpop.f32.mrf.mxu0
  %v2931 = vadd.f32 %v2697, %v2930
  %v2932 = vpop.f32.mrf.mxu0
  %2933 = vmatprep.mubr.f32.mxu0 0.0
  %v2934 = vand.u32 %v2551, 4294901760
  %2935 = vmatmul.mubr.f32.gmra.mxu0 %v2934
  %v2936 = vpop.f32.mrf.mxu0
  %v2937 = vadd.f32 %v2707, %v2936
  %v2938 = vpop.f32.mrf.mxu0
  %2939 = vmatprep.mubr.f32.mxu0 0.0
  %v2940 = vand.u32 %v2554, 4294901760
  %2941 = vmatmul.mubr.f32.gmra.mxu0 %v2940
  %v2942 = vpop.f32.mrf.mxu0
  %v2943 = vadd.f32 %v2717, %v2942
  %v2944 = vpop.f32.mrf.mxu0
  %2945 = vmatprep.mubr.f32.mxu0 0.0
  %v2946 = vand.u32 %v2557, 4294901760
  %2947 = vmatmul.mubr.f32.gmra.mxu0 %v2946
  %v2948 = vpop.f32.mrf.mxu0
  %v2949 = vadd.f32 %v2727, %v2948
  %v2950 = vpop.f32.mrf.mxu0
  %2951 = vmatprep.mubr.f32.mxu0 0.0
  %v2952 = vand.u32 %v2560, 4294901760
  %2953 = vmatmul.mubr.f32.gmra.mxu0 %v2952
  %v2954 = vpop.f32.mrf.mxu0
  %v2955 = vadd.f32 %v2737, %v2954
  %v2956 = vpop.f32.mrf.mxu0
  %2957 = vmatprep.mubr.f32.mxu0 0.0
  %v2958 = vand.u32 %v2563, 4294901760
  %2959 = vmatmul.mubr.f32.gmra.mxu0 %v2958
  %v2960 = vpop.f32.mrf.mxu0
  %v2961 = vadd.f32 %v2747, %v2960
  %v2962 = vpop.f32.mrf.mxu0
  %2963 = vmatprep.mubr.f32.mxu0 0.0
  %v2964 = vand.u32 %v2566, 4294901760
  %2965 = vmatmul.mubr.f32.gmra.mxu0 %v2964
  %v2966 = vpop.f32.mrf.mxu0
  %v2967 = vadd.f32 %v2757, %v2966
  %v2968 = vpop.f32.mrf.mxu0
  %2969 = vmatprep.mubr.f32.mxu0 0.0
  %v2970 = vand.u32 %v2569, 4294901760
  %2971 = vmatmul.mubr.f32.gmra.mxu0 %v2970
  %v2972 = vpop.f32.mrf.mxu0
  %v2973 = vadd.f32 %v2767, %v2972
  %v2974 = vpop.f32.mrf.mxu0
  %2975 = vmatprep.mubr.f32.mxu0 0.0
  %v2976 = vand.u32 %v2572, 4294901760
  %2977 = vmatmul.mubr.f32.gmra.mxu0 %v2976
  %v2978 = vpop.f32.mrf.mxu0
  %v2979 = vadd.f32 %v2777, %v2978
  %v2980 = vpop.f32.mrf.mxu0
  %2981 = vmatprep.mubr.f32.mxu0 0.0
  %v2982 = vand.u32 %v2575, 4294901760
  %2983 = vmatmul.mubr.f32.gmra.mxu0 %v2982
  %v2984 = vpop.f32.mrf.mxu0
  %v2985 = vadd.f32 %v2787, %v2984
  %v2986 = vpop.f32.mrf.mxu0
  %2987 = vmatprep.mubr.f32.mxu0 0.0
  %v2988 = vand.u32 %v2578, 4294901760
  %2989 = vmatmul.mubr.f32.gmra.mxu0 %v2988
  %v2990 = vpop.f32.mrf.mxu0
  %v2991 = vadd.f32 %v2797, %v2990
  %v2992 = vpop.f32.mrf.mxu0
  %2993 = vmatprep.mubr.f32.mxu0 0.0
  %v2994 = vand.u32 %v2581, 4294901760
  %2995 = vmatmul.mubr.f32.gmra.mxu0 %v2994
  %v2996 = vpop.f32.mrf.mxu0
  %v2997 = vadd.f32 %v2807, %v2996
  %v2998 = vpop.f32.mrf.mxu0
  %2999 = vmatprep.mubr.f32.mxu0 0.0
  %v3000 = vand.u32 %v2584, 4294901760
  %3001 = vmatmul.mubr.f32.gmra.mxu0 %v3000
  %v3002 = vpop.f32.mrf.mxu0
  %v3003 = vadd.f32 %v2817, %v3002
  %v3004 = vpop.f32.mrf.mxu0
  %3005 = vdwg.mxu0
  %3006 = vmatprep.subr.mxu0 0.0
  %3007 = vmatpush1.msra.mxu0 0.0
  %3008 = vmatprep.subr.mxu0 0.0
  %3009 = vmatpush1.msra.mxu0 0.0
  %3010 = vmatprep.subr.mxu0 0.0
  %3011 = vmatpush1.msra.mxu0 0.0
  %3012 = vmatprep.subr.mxu0 0.0
  %3013 = vmatpush1.msra.mxu0 0.0
  %3014 = vmatprep.subr.mxu0 0.0
  %3015 = vmatpush1.msra.mxu0 0.0
  %3016 = vmatprep.subr.mxu0 0.0
  %3017 = vmatpush1.msra.mxu0 0.0
  %3018 = vmatprep.subr.mxu0 0.0
  %3019 = vmatpush1.msra.mxu0 0.0
  %3020 = vmatprep.subr.mxu0 0.0
  %3021 = vmatpush1.msra.mxu0 0.0
  %3022 = vmatprep.subr.mxu0 0.0
  %3023 = vmatpush1.msra.mxu0 0.0
  %3024 = vmatprep.subr.mxu0 0.0
  %3025 = vmatpush1.msra.mxu0 0.0
  %3026 = vmatprep.subr.mxu0 0.0
  %3027 = vmatpush1.msra.mxu0 0.0
  %3028 = vmatprep.subr.mxu0 0.0
  %v3029 = vand.u32 %v2588, 4294901760
  %v3030 = vsub.f32 %v2588, %v3029
  %3031 = vmatpush1.msra.mxu0 %v3030
  %3032 = vmatprep.subr.mxu0 0.0
  %v3033 = vand.u32 %v2535, 4294901760
  %v3034 = vsub.f32 %v2535, %v3033
  %3035 = vmatpush1.msra.mxu0 %v3034
  %3036 = vmatprep.subr.mxu0 0.0
  %v3037 = vand.u32 %v2534, 4294901760
  %v3038 = vsub.f32 %v2534, %v3037
  %3039 = vmatpush1.msra.mxu0 %v3038
  %3040 = vmatprep.subr.mxu0 0.0
  %v3041 = vand.u32 %v2533, 4294901760
  %v3042 = vsub.f32 %v2533, %v3041
  %3043 = vmatpush1.msra.mxu0 %v3042
  %3044 = vmatprep.subr.mxu0 0.0
  %v3045 = vand.u32 %v2532, 4294901760
  %v3046 = vsub.f32 %v2532, %v3045
  %3047 = vmatpush1.msra.mxu0 %v3046
  %3048 = vmatprep.subr.mxu0 0.0
  %3049 = vmatpush2.msra.mxu0 0.0
  %3050 = vmatprep.subr.mxu0 0.0
  %3051 = vmatpush2.msra.mxu0 0.0
  %3052 = vmatprep.subr.mxu0 0.0
  %3053 = vmatpush2.msra.mxu0 0.0
  %3054 = vmatprep.subr.mxu0 0.0
  %3055 = vmatpush2.msra.mxu0 0.0
  %3056 = vmatprep.subr.mxu0 0.0
  %3057 = vmatpush2.msra.mxu0 0.0
  %3058 = vmatprep.subr.mxu0 0.0
  %3059 = vmatpush2.msra.mxu0 0.0
  %3060 = vmatprep.subr.mxu0 0.0
  %3061 = vmatpush2.msra.mxu0 0.0
  %3062 = vmatprep.subr.mxu0 0.0
  %3063 = vmatpush2.msra.mxu0 0.0
  %3064 = vmatprep.subr.mxu0 0.0
  %3065 = vmatpush2.msra.mxu0 0.0
  %3066 = vmatprep.subr.mxu0 0.0
  %3067 = vmatpush2.msra.mxu0 0.0
  %3068 = vmatprep.subr.mxu0 0.0
  %3069 = vmatpush2.msra.mxu0 0.0
  %3070 = vmatprep.subr.mxu0 0.0
  %3071 = vmatpush2.msra.mxu0 0.0
  %3072 = vmatprep.subr.mxu0 0.0
  %3073 = vmatpush2.msra.mxu0 0.0
  %3074 = vmatprep.subr.mxu0 0.0
  %3075 = vmatpush2.msra.mxu0 0.0
  %3076 = vmatprep.subr.mxu0 0.0
  %3077 = vmatpush2.msra.mxu0 0.0
  %3078 = vmatprep.subr.mxu0 0.0
  %3079 = vmatpush2.msra.mxu0 0.0
  %3080 = vmatprep.mubr.f32.mxu0 0.0
  %v3081 = vand.u32 %v2539, 4294901760
  %v3082 = vsub.f32 %v2539, %v3081
  %3083 = vmatmul.mubr.f32.gmra.mxu0 %v3082
  %v3084 = vpop.f32.mrf.mxu0
  %v3085 = vadd.f32 %v2913, %v3084
  %v3086 = vpop.f32.mrf.mxu0
  %3087 = vmatprep.mubr.f32.mxu0 0.0
  %v3088 = vand.u32 %v2542, 4294901760
  %v3089 = vsub.f32 %v2542, %v3088
  %3090 = vmatmul.mubr.f32.gmra.mxu0 %v3089
  %v3091 = vpop.f32.mrf.mxu0
  %v3092 = vadd.f32 %v2919, %v3091
  %v3093 = vpop.f32.mrf.mxu0
  %3094 = vmatprep.mubr.f32.mxu0 0.0
  %v3095 = vand.u32 %v2545, 4294901760
  %v3096 = vsub.f32 %v2545, %v3095
  %3097 = vmatmul.mubr.f32.gmra.mxu0 %v3096
  %v3098 = vpop.f32.mrf.mxu0
  %v3099 = vadd.f32 %v2925, %v3098
  %v3100 = vpop.f32.mrf.mxu0
  %3101 = vmatprep.mubr.f32.mxu0 0.0
  %v3102 = vand.u32 %v2548, 4294901760
  %v3103 = vsub.f32 %v2548, %v3102
  %3104 = vmatmul.mubr.f32.gmra.mxu0 %v3103
  %v3105 = vpop.f32.mrf.mxu0
  %v3106 = vadd.f32 %v2931, %v3105
  %v3107 = vpop.f32.mrf.mxu0
  %3108 = vmatprep.mubr.f32.mxu0 0.0
  %v3109 = vand.u32 %v2551, 4294901760
  %v3110 = vsub.f32 %v2551, %v3109
  %3111 = vmatmul.mubr.f32.gmra.mxu0 %v3110
  %v3112 = vpop.f32.mrf.mxu0
  %v3113 = vadd.f32 %v2937, %v3112
  %v3114 = vpop.f32.mrf.mxu0
  %3115 = vmatprep.mubr.f32.mxu0 0.0
  %v3116 = vand.u32 %v2554, 4294901760
  %v3117 = vsub.f32 %v2554, %v3116
  %3118 = vmatmul.mubr.f32.gmra.mxu0 %v3117
  %v3119 = vpop.f32.mrf.mxu0
  %v3120 = vadd.f32 %v2943, %v3119
  %v3121 = vpop.f32.mrf.mxu0
  %3122 = vmatprep.mubr.f32.mxu0 0.0
  %v3123 = vand.u32 %v2557, 4294901760
  %v3124 = vsub.f32 %v2557, %v3123
  %3125 = vmatmul.mubr.f32.gmra.mxu0 %v3124
  %v3126 = vpop.f32.mrf.mxu0
  %v3127 = vadd.f32 %v2949, %v3126
  %v3128 = vpop.f32.mrf.mxu0
  %3129 = vmatprep.mubr.f32.mxu0 0.0
  %v3130 = vand.u32 %v2560, 4294901760
  %v3131 = vsub.f32 %v2560, %v3130
  %3132 = vmatmul.mubr.f32.gmra.mxu0 %v3131
  %v3133 = vpop.f32.mrf.mxu0
  %v3134 = vadd.f32 %v2955, %v3133
  %v3135 = vpop.f32.mrf.mxu0
  %3136 = vmatprep.mubr.f32.mxu0 0.0
  %v3137 = vand.u32 %v2563, 4294901760
  %v3138 = vsub.f32 %v2563, %v3137
  %3139 = vmatmul.mubr.f32.gmra.mxu0 %v3138
  %v3140 = vpop.f32.mrf.mxu0
  %v3141 = vadd.f32 %v2961, %v3140
  %v3142 = vpop.f32.mrf.mxu0
  %3143 = vmatprep.mubr.f32.mxu0 0.0
  %v3144 = vand.u32 %v2566, 4294901760
  %v3145 = vsub.f32 %v2566, %v3144
  %3146 = vmatmul.mubr.f32.gmra.mxu0 %v3145
  %v3147 = vpop.f32.mrf.mxu0
  %v3148 = vadd.f32 %v2967, %v3147
  %v3149 = vpop.f32.mrf.mxu0
  %3150 = vmatprep.mubr.f32.mxu0 0.0
  %v3151 = vand.u32 %v2569, 4294901760
  %v3152 = vsub.f32 %v2569, %v3151
  %3153 = vmatmul.mubr.f32.gmra.mxu0 %v3152
  %v3154 = vpop.f32.mrf.mxu0
  %v3155 = vadd.f32 %v2973, %v3154
  %v3156 = vpop.f32.mrf.mxu0
  %3157 = vmatprep.mubr.f32.mxu0 0.0
  %v3158 = vand.u32 %v2572, 4294901760
  %v3159 = vsub.f32 %v2572, %v3158
  %3160 = vmatmul.mubr.f32.gmra.mxu0 %v3159
  %v3161 = vpop.f32.mrf.mxu0
  %v3162 = vadd.f32 %v2979, %v3161
  %v3163 = vpop.f32.mrf.mxu0
  %3164 = vmatprep.mubr.f32.mxu0 0.0
  %v3165 = vand.u32 %v2575, 4294901760
  %v3166 = vsub.f32 %v2575, %v3165
  %3167 = vmatmul.mubr.f32.gmra.mxu0 %v3166
  %v3168 = vpop.f32.mrf.mxu0
  %v3169 = vadd.f32 %v2985, %v3168
  %v3170 = vpop.f32.mrf.mxu0
  %3171 = vmatprep.mubr.f32.mxu0 0.0
  %v3172 = vand.u32 %v2578, 4294901760
  %v3173 = vsub.f32 %v2578, %v3172
  %3174 = vmatmul.mubr.f32.gmra.mxu0 %v3173
  %v3175 = vpop.f32.mrf.mxu0
  %v3176 = vadd.f32 %v2991, %v3175
  %v3177 = vpop.f32.mrf.mxu0
  %3178 = vmatprep.mubr.f32.mxu0 0.0
  %v3179 = vand.u32 %v2581, 4294901760
  %v3180 = vsub.f32 %v2581, %v3179
  %3181 = vmatmul.mubr.f32.gmra.mxu0 %v3180
  %v3182 = vpop.f32.mrf.mxu0
  %v3183 = vadd.f32 %v2997, %v3182
  %v3184 = vpop.f32.mrf.mxu0
  %3185 = vmatprep.mubr.f32.mxu0 0.0
  %v3186 = vand.u32 %v2584, 4294901760
  %v3187 = vsub.f32 %v2584, %v3186
  %3188 = vmatmul.mubr.f32.gmra.mxu0 %v3187
  %v3189 = vpop.f32.mrf.mxu0
  %v3190 = vadd.f32 %v3003, %v3189
  %v3191 = vpop.f32.mrf.mxu0
  %3192 = vdwg.mxu0
  %3193 = vmatprep.subr.mxu0 0.0
  %3194 = vmatpush1.msra.mxu0 0.0
  %3195 = vmatprep.subr.mxu0 0.0
  %3196 = vmatpush1.msra.mxu0 0.0
  %3197 = vmatprep.subr.mxu0 0.0
  %3198 = vmatpush1.msra.mxu0 0.0
  %3199 = vmatprep.subr.mxu0 0.0
  %3200 = vmatpush1.msra.mxu0 0.0
  %3201 = vmatprep.subr.mxu0 0.0
  %3202 = vmatpush1.msra.mxu0 0.0
  %3203 = vmatprep.subr.mxu0 0.0
  %3204 = vmatpush1.msra.mxu0 0.0
  %3205 = vmatprep.subr.mxu0 0.0
  %3206 = vmatpush1.msra.mxu0 0.0
  %3207 = vmatprep.subr.mxu0 0.0
  %3208 = vmatpush1.msra.mxu0 0.0
  %3209 = vmatprep.subr.mxu0 0.0
  %3210 = vmatpush1.msra.mxu0 0.0
  %3211 = vmatprep.subr.mxu0 0.0
  %3212 = vmatpush1.msra.mxu0 0.0
  %3213 = vmatprep.subr.mxu0 0.0
  %3214 = vmatpush1.msra.mxu0 0.0
  %3215 = vmatprep.subr.mxu0 0.0
  %v3216 = vand.u32 %v2588, 4294901760
  %3217 = vmatpush1.msra.mxu0 %v3216
  %3218 = vmatprep.subr.mxu0 0.0
  %v3219 = vand.u32 %v2535, 4294901760
  %3220 = vmatpush1.msra.mxu0 %v3219
  %3221 = vmatprep.subr.mxu0 0.0
  %v3222 = vand.u32 %v2534, 4294901760
  %3223 = vmatpush1.msra.mxu0 %v3222
  %3224 = vmatprep.subr.mxu0 0.0
  %v3225 = vand.u32 %v2533, 4294901760
  %3226 = vmatpush1.msra.mxu0 %v3225
  %3227 = vmatprep.subr.mxu0 0.0
  %v3228 = vand.u32 %v2532, 4294901760
  %3229 = vmatpush1.msra.mxu0 %v3228
  %3230 = vmatprep.subr.mxu0 0.0
  %3231 = vmatpush2.msra.mxu0 0.0
  %3232 = vmatprep.subr.mxu0 0.0
  %3233 = vmatpush2.msra.mxu0 0.0
  %3234 = vmatprep.subr.mxu0 0.0
  %3235 = vmatpush2.msra.mxu0 0.0
  %3236 = vmatprep.subr.mxu0 0.0
  %3237 = vmatpush2.msra.mxu0 0.0
  %3238 = vmatprep.subr.mxu0 0.0
  %3239 = vmatpush2.msra.mxu0 0.0
  %3240 = vmatprep.subr.mxu0 0.0
  %3241 = vmatpush2.msra.mxu0 0.0
  %3242 = vmatprep.subr.mxu0 0.0
  %3243 = vmatpush2.msra.mxu0 0.0
  %3244 = vmatprep.subr.mxu0 0.0
  %3245 = vmatpush2.msra.mxu0 0.0
  %3246 = vmatprep.subr.mxu0 0.0
  %3247 = vmatpush2.msra.mxu0 0.0
  %3248 = vmatprep.subr.mxu0 0.0
  %3249 = vmatpush2.msra.mxu0 0.0
  %3250 = vmatprep.subr.mxu0 0.0
  %3251 = vmatpush2.msra.mxu0 0.0
  %3252 = vmatprep.subr.mxu0 0.0
  %3253 = vmatpush2.msra.mxu0 0.0
  %3254 = vmatprep.subr.mxu0 0.0
  %3255 = vmatpush2.msra.mxu0 0.0
  %3256 = vmatprep.subr.mxu0 0.0
  %3257 = vmatpush2.msra.mxu0 0.0
  %3258 = vmatprep.subr.mxu0 0.0
  %3259 = vmatpush2.msra.mxu0 0.0
  %3260 = vmatprep.subr.mxu0 0.0
  %3261 = vmatpush2.msra.mxu0 0.0
  %3262 = vmatprep.mubr.f32.mxu0 0.0
  %v3263 = vand.u32 %v2539, 4294901760
  %v3264 = vsub.f32 %v2539, %v3263
  %v3265 = vand.u32 %v3264, 4294901760
  %3266 = vmatmul.mubr.f32.gmra.mxu0 %v3265
  %v3267 = vpop.f32.mrf.mxu0
  %v3268 = vadd.f32 %v3085, %v3267
  %v3269 = vpop.f32.mrf.mxu0
  %3270 = vmatprep.mubr.f32.mxu0 0.0
  %v3271 = vand.u32 %v2542, 4294901760
  %v3272 = vsub.f32 %v2542, %v3271
  %v3273 = vand.u32 %v3272, 4294901760
  %3274 = vmatmul.mubr.f32.gmra.mxu0 %v3273
  %v3275 = vpop.f32.mrf.mxu0
  %v3276 = vadd.f32 %v3092, %v3275
  %v3277 = vpop.f32.mrf.mxu0
  %3278 = vmatprep.mubr.f32.mxu0 0.0
  %v3279 = vand.u32 %v2545, 4294901760
  %v3280 = vsub.f32 %v2545, %v3279
  %v3281 = vand.u32 %v3280, 4294901760
  %3282 = vmatmul.mubr.f32.gmra.mxu0 %v3281
  %v3283 = vpop.f32.mrf.mxu0
  %v3284 = vadd.f32 %v3099, %v3283
  %v3285 = vpop.f32.mrf.mxu0
  %3286 = vmatprep.mubr.f32.mxu0 0.0
  %v3287 = vand.u32 %v2548, 4294901760
  %v3288 = vsub.f32 %v2548, %v3287
  %v3289 = vand.u32 %v3288, 4294901760
  %3290 = vmatmul.mubr.f32.gmra.mxu0 %v3289
  %v3291 = vpop.f32.mrf.mxu0
  %v3292 = vadd.f32 %v3106, %v3291
  %v3293 = vpop.f32.mrf.mxu0
  %3294 = vmatprep.mubr.f32.mxu0 0.0
  %v3295 = vand.u32 %v2551, 4294901760
  %v3296 = vsub.f32 %v2551, %v3295
  %v3297 = vand.u32 %v3296, 4294901760
  %3298 = vmatmul.mubr.f32.gmra.mxu0 %v3297
  %v3299 = vpop.f32.mrf.mxu0
  %v3300 = vadd.f32 %v3113, %v3299
  %v3301 = vpop.f32.mrf.mxu0
  %3302 = vmatprep.mubr.f32.mxu0 0.0
  %v3303 = vand.u32 %v2554, 4294901760
  %v3304 = vsub.f32 %v2554, %v3303
  %v3305 = vand.u32 %v3304, 4294901760
  %3306 = vmatmul.mubr.f32.gmra.mxu0 %v3305
  %v3307 = vpop.f32.mrf.mxu0
  %v3308 = vadd.f32 %v3120, %v3307
  %v3309 = vpop.f32.mrf.mxu0
  %3310 = vmatprep.mubr.f32.mxu0 0.0
  %v3311 = vand.u32 %v2557, 4294901760
  %v3312 = vsub.f32 %v2557, %v3311
  %v3313 = vand.u32 %v3312, 4294901760
  %3314 = vmatmul.mubr.f32.gmra.mxu0 %v3313
  %v3315 = vpop.f32.mrf.mxu0
  %v3316 = vadd.f32 %v3127, %v3315
  %v3317 = vpop.f32.mrf.mxu0
  %3318 = vmatprep.mubr.f32.mxu0 0.0
  %v3319 = vand.u32 %v2560, 4294901760
  %v3320 = vsub.f32 %v2560, %v3319
  %v3321 = vand.u32 %v3320, 4294901760
  %3322 = vmatmul.mubr.f32.gmra.mxu0 %v3321
  %v3323 = vpop.f32.mrf.mxu0
  %v3324 = vadd.f32 %v3134, %v3323
  %v3325 = vpop.f32.mrf.mxu0
  %3326 = vmatprep.mubr.f32.mxu0 0.0
  %v3327 = vand.u32 %v2563, 4294901760
  %v3328 = vsub.f32 %v2563, %v3327
  %v3329 = vand.u32 %v3328, 4294901760
  %3330 = vmatmul.mubr.f32.gmra.mxu0 %v3329
  %v3331 = vpop.f32.mrf.mxu0
  %v3332 = vadd.f32 %v3141, %v3331
  %v3333 = vpop.f32.mrf.mxu0
  %3334 = vmatprep.mubr.f32.mxu0 0.0
  %v3335 = vand.u32 %v2566, 4294901760
  %v3336 = vsub.f32 %v2566, %v3335
  %v3337 = vand.u32 %v3336, 4294901760
  %3338 = vmatmul.mubr.f32.gmra.mxu0 %v3337
  %v3339 = vpop.f32.mrf.mxu0
  %v3340 = vadd.f32 %v3148, %v3339
  %v3341 = vpop.f32.mrf.mxu0
  %3342 = vmatprep.mubr.f32.mxu0 0.0
  %v3343 = vand.u32 %v2569, 4294901760
  %v3344 = vsub.f32 %v2569, %v3343
  %v3345 = vand.u32 %v3344, 4294901760
  %3346 = vmatmul.mubr.f32.gmra.mxu0 %v3345
  %v3347 = vpop.f32.mrf.mxu0
  %v3348 = vadd.f32 %v3155, %v3347
  %v3349 = vpop.f32.mrf.mxu0
  %3350 = vmatprep.mubr.f32.mxu0 0.0
  %v3351 = vand.u32 %v2572, 4294901760
  %v3352 = vsub.f32 %v2572, %v3351
  %v3353 = vand.u32 %v3352, 4294901760
  %3354 = vmatmul.mubr.f32.gmra.mxu0 %v3353
  %v3355 = vpop.f32.mrf.mxu0
  %v3356 = vadd.f32 %v3162, %v3355
  %v3357 = vpop.f32.mrf.mxu0
  %3358 = vmatprep.mubr.f32.mxu0 0.0
  %v3359 = vand.u32 %v2575, 4294901760
  %v3360 = vsub.f32 %v2575, %v3359
  %v3361 = vand.u32 %v3360, 4294901760
  %3362 = vmatmul.mubr.f32.gmra.mxu0 %v3361
  %v3363 = vpop.f32.mrf.mxu0
  %v3364 = vadd.f32 %v3169, %v3363
  %v3365 = vpop.f32.mrf.mxu0
  %3366 = vmatprep.mubr.f32.mxu0 0.0
  %v3367 = vand.u32 %v2578, 4294901760
  %v3368 = vsub.f32 %v2578, %v3367
  %v3369 = vand.u32 %v3368, 4294901760
  %3370 = vmatmul.mubr.f32.gmra.mxu0 %v3369
  %v3371 = vpop.f32.mrf.mxu0
  %v3372 = vadd.f32 %v3176, %v3371
  %v3373 = vpop.f32.mrf.mxu0
  %3374 = vmatprep.mubr.f32.mxu0 0.0
  %v3375 = vand.u32 %v2581, 4294901760
  %v3376 = vsub.f32 %v2581, %v3375
  %v3377 = vand.u32 %v3376, 4294901760
  %3378 = vmatmul.mubr.f32.gmra.mxu0 %v3377
  %v3379 = vpop.f32.mrf.mxu0
  %v3380 = vadd.f32 %v3183, %v3379
  %v3381 = vpop.f32.mrf.mxu0
  %3382 = vmatprep.mubr.f32.mxu0 0.0
  %v3383 = vand.u32 %v2584, 4294901760
  %v3384 = vsub.f32 %v2584, %v3383
  %v3385 = vand.u32 %v3384, 4294901760
  %3386 = vmatmul.mubr.f32.gmra.mxu0 %v3385
  %v3387 = vpop.f32.mrf.mxu0
  %v3388 = vadd.f32 %v3190, %v3387
  %v3389 = vpop.f32.mrf.mxu0
  %3390 = vdwg.mxu0
  %3391 = vmatprep.subr.mxu0 0.0
  %3392 = vmatpush1.msra.mxu0 0.0
  %3393 = vmatprep.subr.mxu0 0.0
  %3394 = vmatpush1.msra.mxu0 0.0
  %3395 = vmatprep.subr.mxu0 0.0
  %3396 = vmatpush1.msra.mxu0 0.0
  %3397 = vmatprep.subr.mxu0 0.0
  %3398 = vmatpush1.msra.mxu0 0.0
  %3399 = vmatprep.subr.mxu0 0.0
  %3400 = vmatpush1.msra.mxu0 0.0
  %3401 = vmatprep.subr.mxu0 0.0
  %3402 = vmatpush1.msra.mxu0 0.0
  %3403 = vmatprep.subr.mxu0 0.0
  %3404 = vmatpush1.msra.mxu0 0.0
  %3405 = vmatprep.subr.mxu0 0.0
  %3406 = vmatpush1.msra.mxu0 0.0
  %3407 = vmatprep.subr.mxu0 0.0
  %3408 = vmatpush1.msra.mxu0 0.0
  %3409 = vmatprep.subr.mxu0 0.0
  %3410 = vmatpush1.msra.mxu0 0.0
  %3411 = vmatprep.subr.mxu0 0.0
  %3412 = vmatpush1.msra.mxu0 0.0
  %3413 = vmatprep.subr.mxu0 0.0
  %v3414 = vand.u32 %v2588, 4294901760
  %v3415 = vsub.f32 %v2588, %v3414
  %v3416 = vand.u32 %v3415, 4294901760
  %3417 = vmatpush1.msra.mxu0 %v3416
  %3418 = vmatprep.subr.mxu0 0.0
  %v3419 = vand.u32 %v2535, 4294901760
  %v3420 = vsub.f32 %v2535, %v3419
  %v3421 = vand.u32 %v3420, 4294901760
  %3422 = vmatpush1.msra.mxu0 %v3421
  %3423 = vmatprep.subr.mxu0 0.0
  %v3424 = vand.u32 %v2534, 4294901760
  %v3425 = vsub.f32 %v2534, %v3424
  %v3426 = vand.u32 %v3425, 4294901760
  %3427 = vmatpush1.msra.mxu0 %v3426
  %3428 = vmatprep.subr.mxu0 0.0
  %v3429 = vand.u32 %v2533, 4294901760
  %v3430 = vsub.f32 %v2533, %v3429
  %v3431 = vand.u32 %v3430, 4294901760
  %3432 = vmatpush1.msra.mxu0 %v3431
  %3433 = vmatprep.subr.mxu0 0.0
  %v3434 = vand.u32 %v2532, 4294901760
  %v3435 = vsub.f32 %v2532, %v3434
  %v3436 = vand.u32 %v3435, 4294901760
  %3437 = vmatpush1.msra.mxu0 %v3436
  %3438 = vmatprep.subr.mxu0 0.0
  %3439 = vmatpush2.msra.mxu0 0.0
  %3440 = vmatprep.subr.mxu0 0.0
  %3441 = vmatpush2.msra.mxu0 0.0
  %3442 = vmatprep.subr.mxu0 0.0
  %3443 = vmatpush2.msra.mxu0 0.0
  %3444 = vmatprep.subr.mxu0 0.0
  %3445 = vmatpush2.msra.mxu0 0.0
  %3446 = vmatprep.subr.mxu0 0.0
  %3447 = vmatpush2.msra.mxu0 0.0
  %3448 = vmatprep.subr.mxu0 0.0
  %3449 = vmatpush2.msra.mxu0 0.0
  %3450 = vmatprep.subr.mxu0 0.0
  %3451 = vmatpush2.msra.mxu0 0.0
  %3452 = vmatprep.subr.mxu0 0.0
  %3453 = vmatpush2.msra.mxu0 0.0
  %3454 = vmatprep.subr.mxu0 0.0
  %3455 = vmatpush2.msra.mxu0 0.0
  %3456 = vmatprep.subr.mxu0 0.0
  %3457 = vmatpush2.msra.mxu0 0.0
  %3458 = vmatprep.subr.mxu0 0.0
  %3459 = vmatpush2.msra.mxu0 0.0
  %3460 = vmatprep.subr.mxu0 0.0
  %3461 = vmatpush2.msra.mxu0 0.0
  %3462 = vmatprep.subr.mxu0 0.0
  %3463 = vmatpush2.msra.mxu0 0.0
  %3464 = vmatprep.subr.mxu0 0.0
  %3465 = vmatpush2.msra.mxu0 0.0
  %3466 = vmatprep.subr.mxu0 0.0
  %3467 = vmatpush2.msra.mxu0 0.0
  %3468 = vmatprep.subr.mxu0 0.0
  %3469 = vmatpush2.msra.mxu0 0.0
  %3470 = vmatprep.mubr.f32.mxu0 0.0
  %v3471 = vand.u32 %v2539, 4294901760
  %3472 = vmatmul.mubr.f32.gmra.mxu0 %v3471
  %v3473 = vpop.f32.mrf.mxu0
  %v3474 = vadd.f32 %v3268, %v3473
  %v3475 = vpop.f32.mrf.mxu0
  %3476 = vmatprep.mubr.f32.mxu0 0.0
  %v3477 = vand.u32 %v2542, 4294901760
  %3478 = vmatmul.mubr.f32.gmra.mxu0 %v3477
  %v3479 = vpop.f32.mrf.mxu0
  %v3480 = vadd.f32 %v3276, %v3479
  %v3481 = vpop.f32.mrf.mxu0
  %3482 = vmatprep.mubr.f32.mxu0 0.0
  %v3483 = vand.u32 %v2545, 4294901760
  %3484 = vmatmul.mubr.f32.gmra.mxu0 %v3483
  %v3485 = vpop.f32.mrf.mxu0
  %v3486 = vadd.f32 %v3284, %v3485
  %v3487 = vpop.f32.mrf.mxu0
  %3488 = vmatprep.mubr.f32.mxu0 0.0
  %v3489 = vand.u32 %v2548, 4294901760
  %3490 = vmatmul.mubr.f32.gmra.mxu0 %v3489
  %v3491 = vpop.f32.mrf.mxu0
  %v3492 = vadd.f32 %v3292, %v3491
  %v3493 = vpop.f32.mrf.mxu0
  %3494 = vmatprep.mubr.f32.mxu0 0.0
  %v3495 = vand.u32 %v2551, 4294901760
  %3496 = vmatmul.mubr.f32.gmra.mxu0 %v3495
  %v3497 = vpop.f32.mrf.mxu0
  %v3498 = vadd.f32 %v3300, %v3497
  %v3499 = vpop.f32.mrf.mxu0
  %3500 = vmatprep.mubr.f32.mxu0 0.0
  %v3501 = vand.u32 %v2554, 4294901760
  %3502 = vmatmul.mubr.f32.gmra.mxu0 %v3501
  %v3503 = vpop.f32.mrf.mxu0
  %v3504 = vadd.f32 %v3308, %v3503
  %v3505 = vpop.f32.mrf.mxu0
  %3506 = vmatprep.mubr.f32.mxu0 0.0
  %v3507 = vand.u32 %v2557, 4294901760
  %3508 = vmatmul.mubr.f32.gmra.mxu0 %v3507
  %v3509 = vpop.f32.mrf.mxu0
  %v3510 = vadd.f32 %v3316, %v3509
  %v3511 = vpop.f32.mrf.mxu0
  %3512 = vmatprep.mubr.f32.mxu0 0.0
  %v3513 = vand.u32 %v2560, 4294901760
  %3514 = vmatmul.mubr.f32.gmra.mxu0 %v3513
  %v3515 = vpop.f32.mrf.mxu0
  %v3516 = vadd.f32 %v3324, %v3515
  %v3517 = vpop.f32.mrf.mxu0
  %3518 = vmatprep.mubr.f32.mxu0 0.0
  %v3519 = vand.u32 %v2563, 4294901760
  %3520 = vmatmul.mubr.f32.gmra.mxu0 %v3519
  %v3521 = vpop.f32.mrf.mxu0
  %v3522 = vadd.f32 %v3332, %v3521
  %v3523 = vpop.f32.mrf.mxu0
  %3524 = vmatprep.mubr.f32.mxu0 0.0
  %v3525 = vand.u32 %v2566, 4294901760
  %3526 = vmatmul.mubr.f32.gmra.mxu0 %v3525
  %v3527 = vpop.f32.mrf.mxu0
  %v3528 = vadd.f32 %v3340, %v3527
  %v3529 = vpop.f32.mrf.mxu0
  %3530 = vmatprep.mubr.f32.mxu0 0.0
  %v3531 = vand.u32 %v2569, 4294901760
  %3532 = vmatmul.mubr.f32.gmra.mxu0 %v3531
  %v3533 = vpop.f32.mrf.mxu0
  %v3534 = vadd.f32 %v3348, %v3533
  %v3535 = vpop.f32.mrf.mxu0
  %3536 = vmatprep.mubr.f32.mxu0 0.0
  %v3537 = vand.u32 %v2572, 4294901760
  %3538 = vmatmul.mubr.f32.gmra.mxu0 %v3537
  %v3539 = vpop.f32.mrf.mxu0
  %v3540 = vadd.f32 %v3356, %v3539
  %v3541 = vpop.f32.mrf.mxu0
  %3542 = vmatprep.mubr.f32.mxu0 0.0
  %v3543 = vand.u32 %v2575, 4294901760
  %3544 = vmatmul.mubr.f32.gmra.mxu0 %v3543
  %v3545 = vpop.f32.mrf.mxu0
  %v3546 = vadd.f32 %v3364, %v3545
  %v3547 = vpop.f32.mrf.mxu0
  %3548 = vmatprep.mubr.f32.mxu0 0.0
  %v3549 = vand.u32 %v2578, 4294901760
  %3550 = vmatmul.mubr.f32.gmra.mxu0 %v3549
  %v3551 = vpop.f32.mrf.mxu0
  %v3552 = vadd.f32 %v3372, %v3551
  %v3553 = vpop.f32.mrf.mxu0
  %3554 = vmatprep.mubr.f32.mxu0 0.0
  %v3555 = vand.u32 %v2581, 4294901760
  %3556 = vmatmul.mubr.f32.gmra.mxu0 %v3555
  %v3557 = vpop.f32.mrf.mxu0
  %v3558 = vadd.f32 %v3380, %v3557
  %v3559 = vpop.f32.mrf.mxu0
  %3560 = vmatprep.mubr.f32.mxu0 0.0
  %v3561 = vand.u32 %v2584, 4294901760
  %3562 = vmatmul.mubr.f32.gmra.mxu0 %v3561
  %v3563 = vpop.f32.mrf.mxu0
  %v3564 = vadd.f32 %v3388, %v3563
  %v3565 = vpop.f32.mrf.mxu0
  %3566 = vdwg.mxu0
  %3567 = vmatprep.subr.mxu0 0.0
  %3568 = vmatpush1.msra.mxu0 0.0
  %3569 = vmatprep.subr.mxu0 0.0
  %3570 = vmatpush1.msra.mxu0 0.0
  %3571 = vmatprep.subr.mxu0 0.0
  %3572 = vmatpush1.msra.mxu0 0.0
  %3573 = vmatprep.subr.mxu0 0.0
  %3574 = vmatpush1.msra.mxu0 0.0
  %3575 = vmatprep.subr.mxu0 0.0
  %3576 = vmatpush1.msra.mxu0 0.0
  %3577 = vmatprep.subr.mxu0 0.0
  %3578 = vmatpush1.msra.mxu0 0.0
  %3579 = vmatprep.subr.mxu0 0.0
  %3580 = vmatpush1.msra.mxu0 0.0
  %3581 = vmatprep.subr.mxu0 0.0
  %3582 = vmatpush1.msra.mxu0 0.0
  %3583 = vmatprep.subr.mxu0 0.0
  %3584 = vmatpush1.msra.mxu0 0.0
  %3585 = vmatprep.subr.mxu0 0.0
  %3586 = vmatpush1.msra.mxu0 0.0
  %3587 = vmatprep.subr.mxu0 0.0
  %3588 = vmatpush1.msra.mxu0 0.0
  %3589 = vmatprep.subr.mxu0 0.0
  %v3590 = vand.u32 %v2588, 4294901760
  %3591 = vmatpush1.msra.mxu0 %v3590
  %3592 = vmatprep.subr.mxu0 0.0
  %v3593 = vand.u32 %v2535, 4294901760
  %3594 = vmatpush1.msra.mxu0 %v3593
  %3595 = vmatprep.subr.mxu0 0.0
  %v3596 = vand.u32 %v2534, 4294901760
  %3597 = vmatpush1.msra.mxu0 %v3596
  %3598 = vmatprep.subr.mxu0 0.0
  %v3599 = vand.u32 %v2533, 4294901760
  %3600 = vmatpush1.msra.mxu0 %v3599
  %3601 = vmatprep.subr.mxu0 0.0
  %v3602 = vand.u32 %v2532, 4294901760
  %3603 = vmatpush1.msra.mxu0 %v3602
  %3604 = vmatprep.subr.mxu0 0.0
  %3605 = vmatpush2.msra.mxu0 0.0
  %3606 = vmatprep.subr.mxu0 0.0
  %3607 = vmatpush2.msra.mxu0 0.0
  %3608 = vmatprep.subr.mxu0 0.0
  %3609 = vmatpush2.msra.mxu0 0.0
  %3610 = vmatprep.subr.mxu0 0.0
  %3611 = vmatpush2.msra.mxu0 0.0
  %3612 = vmatprep.subr.mxu0 0.0
  %3613 = vmatpush2.msra.mxu0 0.0
  %3614 = vmatprep.subr.mxu0 0.0
  %3615 = vmatpush2.msra.mxu0 0.0
  %3616 = vmatprep.subr.mxu0 0.0
  %3617 = vmatpush2.msra.mxu0 0.0
  %3618 = vmatprep.subr.mxu0 0.0
  %3619 = vmatpush2.msra.mxu0 0.0
  %3620 = vmatprep.subr.mxu0 0.0
  %3621 = vmatpush2.msra.mxu0 0.0
  %3622 = vmatprep.subr.mxu0 0.0
  %3623 = vmatpush2.msra.mxu0 0.0
  %3624 = vmatprep.subr.mxu0 0.0
  %3625 = vmatpush2.msra.mxu0 0.0
  %3626 = vmatprep.subr.mxu0 0.0
  %3627 = vmatpush2.msra.mxu0 0.0
  %3628 = vmatprep.subr.mxu0 0.0
  %3629 = vmatpush2.msra.mxu0 0.0
  %3630 = vmatprep.subr.mxu0 0.0
  %3631 = vmatpush2.msra.mxu0 0.0
  %3632 = vmatprep.subr.mxu0 0.0
  %3633 = vmatpush2.msra.mxu0 0.0
  %3634 = vmatprep.subr.mxu0 0.0
  %3635 = vmatpush2.msra.mxu0 0.0
  %3636 = vmatprep.mubr.f32.mxu0 0.0
  %v3637 = vand.u32 %v2539, 4294901760
  %3638 = vmatmul.mubr.f32.gmra.mxu0 %v3637
  %v3639 = vpop.f32.mrf.mxu0
  %v3640 = vadd.f32 %v3474, %v3639
  %v3641 = vpop.f32.mrf.mxu0
  %3642 = vmatprep.mubr.f32.mxu0 0.0
  %v3643 = vand.u32 %v2542, 4294901760
  %3644 = vmatmul.mubr.f32.gmra.mxu0 %v3643
  %v3645 = vpop.f32.mrf.mxu0
  %v3646 = vadd.f32 %v3480, %v3645
  %v3647 = vpop.f32.mrf.mxu0
  %3648 = vmatprep.mubr.f32.mxu0 0.0
  %v3649 = vand.u32 %v2545, 4294901760
  %3650 = vmatmul.mubr.f32.gmra.mxu0 %v3649
  %v3651 = vpop.f32.mrf.mxu0
  %v3652 = vadd.f32 %v3486, %v3651
  %v3653 = vpop.f32.mrf.mxu0
  %3654 = vmatprep.mubr.f32.mxu0 0.0
  %v3655 = vand.u32 %v2548, 4294901760
  %3656 = vmatmul.mubr.f32.gmra.mxu0 %v3655
  %v3657 = vpop.f32.mrf.mxu0
  %v3658 = vadd.f32 %v3492, %v3657
  %v3659 = vpop.f32.mrf.mxu0
  %3660 = vmatprep.mubr.f32.mxu0 0.0
  %v3661 = vand.u32 %v2551, 4294901760
  %3662 = vmatmul.mubr.f32.gmra.mxu0 %v3661
  %v3663 = vpop.f32.mrf.mxu0
  %v3664 = vadd.f32 %v3498, %v3663
  %v3665 = vpop.f32.mrf.mxu0
  %3666 = vmatprep.mubr.f32.mxu0 0.0
  %v3667 = vand.u32 %v2554, 4294901760
  %3668 = vmatmul.mubr.f32.gmra.mxu0 %v3667
  %v3669 = vpop.f32.mrf.mxu0
  %v3670 = vadd.f32 %v3504, %v3669
  %v3671 = vpop.f32.mrf.mxu0
  %3672 = vmatprep.mubr.f32.mxu0 0.0
  %v3673 = vand.u32 %v2557, 4294901760
  %3674 = vmatmul.mubr.f32.gmra.mxu0 %v3673
  %v3675 = vpop.f32.mrf.mxu0
  %v3676 = vadd.f32 %v3510, %v3675
  %v3677 = vpop.f32.mrf.mxu0
  %3678 = vmatprep.mubr.f32.mxu0 0.0
  %v3679 = vand.u32 %v2560, 4294901760
  %3680 = vmatmul.mubr.f32.gmra.mxu0 %v3679
  %v3681 = vpop.f32.mrf.mxu0
  %v3682 = vadd.f32 %v3516, %v3681
  %v3683 = vpop.f32.mrf.mxu0
  %3684 = vmatprep.mubr.f32.mxu0 0.0
  %v3685 = vand.u32 %v2563, 4294901760
  %3686 = vmatmul.mubr.f32.gmra.mxu0 %v3685
  %v3687 = vpop.f32.mrf.mxu0
  %v3688 = vadd.f32 %v3522, %v3687
  %v3689 = vpop.f32.mrf.mxu0
  %3690 = vmatprep.mubr.f32.mxu0 0.0
  %v3691 = vand.u32 %v2566, 4294901760
  %3692 = vmatmul.mubr.f32.gmra.mxu0 %v3691
  %v3693 = vpop.f32.mrf.mxu0
  %v3694 = vadd.f32 %v3528, %v3693
  %v3695 = vpop.f32.mrf.mxu0
  %3696 = vmatprep.mubr.f32.mxu0 0.0
  %v3697 = vand.u32 %v2569, 4294901760
  %3698 = vmatmul.mubr.f32.gmra.mxu0 %v3697
  %v3699 = vpop.f32.mrf.mxu0
  %v3700 = vadd.f32 %v3534, %v3699
  %v3701 = vpop.f32.mrf.mxu0
  %3702 = vmatprep.mubr.f32.mxu0 0.0
  %v3703 = vand.u32 %v2572, 4294901760
  %3704 = vmatmul.mubr.f32.gmra.mxu0 %v3703
  %v3705 = vpop.f32.mrf.mxu0
  %v3706 = vadd.f32 %v3540, %v3705
  %v3707 = vpop.f32.mrf.mxu0
  %3708 = vmatprep.mubr.f32.mxu0 0.0
  %v3709 = vand.u32 %v2575, 4294901760
  %3710 = vmatmul.mubr.f32.gmra.mxu0 %v3709
  %v3711 = vpop.f32.mrf.mxu0
  %v3712 = vadd.f32 %v3546, %v3711
  %v3713 = vpop.f32.mrf.mxu0
  %3714 = vmatprep.mubr.f32.mxu0 0.0
  %v3715 = vand.u32 %v2578, 4294901760
  %3716 = vmatmul.mubr.f32.gmra.mxu0 %v3715
  %v3717 = vpop.f32.mrf.mxu0
  %v3718 = vadd.f32 %v3552, %v3717
  %v3719 = vpop.f32.mrf.mxu0
  %3720 = vmatprep.mubr.f32.mxu0 0.0
  %v3721 = vand.u32 %v2581, 4294901760
  %3722 = vmatmul.mubr.f32.gmra.mxu0 %v3721
  %v3723 = vpop.f32.mrf.mxu0
  %v3724 = vadd.f32 %v3558, %v3723
  %v3725 = vpop.f32.mrf.mxu0
  %3726 = vmatprep.mubr.f32.mxu0 0.0
  %v3727 = vand.u32 %v2584, 4294901760
  %3728 = vmatmul.mubr.f32.gmra.mxu0 %v3727
  %v3729 = vpop.f32.mrf.mxu0
  %v3730 = vadd.f32 %v3564, %v3729
  %v3731 = vpop.f32.mrf.mxu0
  %3732 = vdwg.mxu0
  %v3733 = vld [vmem:[%s5] sm:$0xff]
  %v3734 = vld [vmem:[%s5 + $0x8] sm:$0xff]
  %v3735 = vld [vmem:[%s5 + $0x10] sm:$0xff]
  %v3736 = vld [vmem:[%s5 + $0x18] sm:$0xff]
  %v3737 = vld [vmem:[%s5 + $0x20] sm:$0x7]
  %v3739 = vsel %vm2586, %v3737, 0
  %3741 = vmatprep.subr.mxu0 0.0
  %3742 = vmatpush1.msra.mxu0 0.0
  %3743 = vmatprep.subr.mxu0 0.0
  %3744 = vmatpush1.msra.mxu0 0.0
  %3745 = vmatprep.subr.mxu0 0.0
  %3746 = vmatpush1.msra.mxu0 0.0
  %3747 = vmatprep.subr.mxu0 0.0
  %3748 = vmatpush1.msra.mxu0 0.0
  %3749 = vmatprep.subr.mxu0 0.0
  %3750 = vmatpush1.msra.mxu0 0.0
  %3751 = vmatprep.subr.mxu0 0.0
  %3752 = vmatpush1.msra.mxu0 0.0
  %3753 = vmatprep.subr.mxu0 0.0
  %3754 = vmatpush1.msra.mxu0 0.0
  %3755 = vmatprep.subr.mxu0 0.0
  %3756 = vmatpush1.msra.mxu0 0.0
  %3757 = vmatprep.subr.mxu0 0.0
  %3758 = vmatpush1.msra.mxu0 0.0
  %3759 = vmatprep.subr.mxu0 0.0
  %3760 = vmatpush1.msra.mxu0 0.0
  %3761 = vmatprep.subr.mxu0 0.0
  %3762 = vmatpush1.msra.mxu0 0.0
  %3763 = vmatprep.subr.mxu0 0.0
  %v3764 = vand.u32 %v3739, 4294901760
  %3765 = vmatpush1.msra.mxu0 %v3764
  %3766 = vmatprep.subr.mxu0 0.0
  %v3767 = vand.u32 %v3736, 4294901760
  %3768 = vmatpush1.msra.mxu0 %v3767
  %3769 = vmatprep.subr.mxu0 0.0
  %v3770 = vand.u32 %v3735, 4294901760
  %3771 = vmatpush1.msra.mxu0 %v3770
  %3772 = vmatprep.subr.mxu0 0.0
  %v3773 = vand.u32 %v3734, 4294901760
  %3774 = vmatpush1.msra.mxu0 %v3773
  %3775 = vmatprep.subr.mxu0 0.0
  %v3776 = vand.u32 %v3733, 4294901760
  %3777 = vmatpush1.msra.mxu0 %v3776
  %3778 = vmatprep.subr.mxu0 0.0
  %3779 = vmatpush2.msra.mxu0 0.0
  %3780 = vmatprep.subr.mxu0 0.0
  %3781 = vmatpush2.msra.mxu0 0.0
  %3782 = vmatprep.subr.mxu0 0.0
  %3783 = vmatpush2.msra.mxu0 0.0
  %3784 = vmatprep.subr.mxu0 0.0
  %3785 = vmatpush2.msra.mxu0 0.0
  %3786 = vmatprep.subr.mxu0 0.0
  %3787 = vmatpush2.msra.mxu0 0.0
  %3788 = vmatprep.subr.mxu0 0.0
  %3789 = vmatpush2.msra.mxu0 0.0
  %3790 = vmatprep.subr.mxu0 0.0
  %3791 = vmatpush2.msra.mxu0 0.0
  %3792 = vmatprep.subr.mxu0 0.0
  %3793 = vmatpush2.msra.mxu0 0.0
  %3794 = vmatprep.subr.mxu0 0.0
  %3795 = vmatpush2.msra.mxu0 0.0
  %3796 = vmatprep.subr.mxu0 0.0
  %3797 = vmatpush2.msra.mxu0 0.0
  %3798 = vmatprep.subr.mxu0 0.0
  %3799 = vmatpush2.msra.mxu0 0.0
  %3800 = vmatprep.subr.mxu0 0.0
  %3801 = vmatpush2.msra.mxu0 0.0
  %3802 = vmatprep.subr.mxu0 0.0
  %3803 = vmatpush2.msra.mxu0 0.0
  %3804 = vmatprep.subr.mxu0 0.0
  %3805 = vmatpush2.msra.mxu0 0.0
  %3806 = vmatprep.subr.mxu0 0.0
  %3807 = vmatpush2.msra.mxu0 0.0
  %3808 = vmatprep.subr.mxu0 0.0
  %3809 = vmatpush2.msra.mxu0 0.0
  %3810 = vmatprep.mubr.f32.mxu0 0.0
  %v3811 = vand.u32 %v2539, 4294901760
  %v3812 = vsub.f32 %v2539, %v3811
  %v3813 = vand.u32 %v3812, 4294901760
  %v3814 = vsub.f32 %v3812, %v3813
  %v3815 = vand.u32 %v3814, 4294901760
  %3816 = vmatmul.mubr.f32.gmra.mxu0 %v3815
  %v3817 = vpop.f32.mrf.mxu0
  %v3818 = vadd.f32 0.0, %v3817
  %v3819 = vpop.f32.mrf.mxu0
  %3820 = vmatprep.mubr.f32.mxu0 0.0
  %v3821 = vand.u32 %v2542, 4294901760
  %v3822 = vsub.f32 %v2542, %v3821
  %v3823 = vand.u32 %v3822, 4294901760
  %v3824 = vsub.f32 %v3822, %v3823
  %v3825 = vand.u32 %v3824, 4294901760
  %3826 = vmatmul.mubr.f32.gmra.mxu0 %v3825
  %v3827 = vpop.f32.mrf.mxu0
  %v3828 = vadd.f32 0.0, %v3827
  %v3829 = vpop.f32.mrf.mxu0
  %3830 = vmatprep.mubr.f32.mxu0 0.0
  %v3831 = vand.u32 %v2545, 4294901760
  %v3832 = vsub.f32 %v2545, %v3831
  %v3833 = vand.u32 %v3832, 4294901760
  %v3834 = vsub.f32 %v3832, %v3833
  %v3835 = vand.u32 %v3834, 4294901760
  %3836 = vmatmul.mubr.f32.gmra.mxu0 %v3835
  %v3837 = vpop.f32.mrf.mxu0
  %v3838 = vadd.f32 0.0, %v3837
  %v3839 = vpop.f32.mrf.mxu0
  %3840 = vmatprep.mubr.f32.mxu0 0.0
  %v3841 = vand.u32 %v2548, 4294901760
  %v3842 = vsub.f32 %v2548, %v3841
  %v3843 = vand.u32 %v3842, 4294901760
  %v3844 = vsub.f32 %v3842, %v3843
  %v3845 = vand.u32 %v3844, 4294901760
  %3846 = vmatmul.mubr.f32.gmra.mxu0 %v3845
  %v3847 = vpop.f32.mrf.mxu0
  %v3848 = vadd.f32 0.0, %v3847
  %v3849 = vpop.f32.mrf.mxu0
  %3850 = vmatprep.mubr.f32.mxu0 0.0
  %v3851 = vand.u32 %v2551, 4294901760
  %v3852 = vsub.f32 %v2551, %v3851
  %v3853 = vand.u32 %v3852, 4294901760
  %v3854 = vsub.f32 %v3852, %v3853
  %v3855 = vand.u32 %v3854, 4294901760
  %3856 = vmatmul.mubr.f32.gmra.mxu0 %v3855
  %v3857 = vpop.f32.mrf.mxu0
  %v3858 = vadd.f32 0.0, %v3857
  %v3859 = vpop.f32.mrf.mxu0
  %3860 = vmatprep.mubr.f32.mxu0 0.0
  %v3861 = vand.u32 %v2554, 4294901760
  %v3862 = vsub.f32 %v2554, %v3861
  %v3863 = vand.u32 %v3862, 4294901760
  %v3864 = vsub.f32 %v3862, %v3863
  %v3865 = vand.u32 %v3864, 4294901760
  %3866 = vmatmul.mubr.f32.gmra.mxu0 %v3865
  %v3867 = vpop.f32.mrf.mxu0
  %v3868 = vadd.f32 0.0, %v3867
  %v3869 = vpop.f32.mrf.mxu0
  %3870 = vmatprep.mubr.f32.mxu0 0.0
  %v3871 = vand.u32 %v2557, 4294901760
  %v3872 = vsub.f32 %v2557, %v3871
  %v3873 = vand.u32 %v3872, 4294901760
  %v3874 = vsub.f32 %v3872, %v3873
  %v3875 = vand.u32 %v3874, 4294901760
  %3876 = vmatmul.mubr.f32.gmra.mxu0 %v3875
  %v3877 = vpop.f32.mrf.mxu0
  %v3878 = vadd.f32 0.0, %v3877
  %v3879 = vpop.f32.mrf.mxu0
  %3880 = vmatprep.mubr.f32.mxu0 0.0
  %v3881 = vand.u32 %v2560, 4294901760
  %v3882 = vsub.f32 %v2560, %v3881
  %v3883 = vand.u32 %v3882, 4294901760
  %v3884 = vsub.f32 %v3882, %v3883
  %v3885 = vand.u32 %v3884, 4294901760
  %3886 = vmatmul.mubr.f32.gmra.mxu0 %v3885
  %v3887 = vpop.f32.mrf.mxu0
  %v3888 = vadd.f32 0.0, %v3887
  %v3889 = vpop.f32.mrf.mxu0
  %3890 = vmatprep.mubr.f32.mxu0 0.0
  %v3891 = vand.u32 %v2563, 4294901760
  %v3892 = vsub.f32 %v2563, %v3891
  %v3893 = vand.u32 %v3892, 4294901760
  %v3894 = vsub.f32 %v3892, %v3893
  %v3895 = vand.u32 %v3894, 4294901760
  %3896 = vmatmul.mubr.f32.gmra.mxu0 %v3895
  %v3897 = vpop.f32.mrf.mxu0
  %v3898 = vadd.f32 0.0, %v3897
  %v3899 = vpop.f32.mrf.mxu0
  %3900 = vmatprep.mubr.f32.mxu0 0.0
  %v3901 = vand.u32 %v2566, 4294901760
  %v3902 = vsub.f32 %v2566, %v3901
  %v3903 = vand.u32 %v3902, 4294901760
  %v3904 = vsub.f32 %v3902, %v3903
  %v3905 = vand.u32 %v3904, 4294901760
  %3906 = vmatmul.mubr.f32.gmra.mxu0 %v3905
  %v3907 = vpop.f32.mrf.mxu0
  %v3908 = vadd.f32 0.0, %v3907
  %v3909 = vpop.f32.mrf.mxu0
  %3910 = vmatprep.mubr.f32.mxu0 0.0
  %v3911 = vand.u32 %v2569, 4294901760
  %v3912 = vsub.f32 %v2569, %v3911
  %v3913 = vand.u32 %v3912, 4294901760
  %v3914 = vsub.f32 %v3912, %v3913
  %v3915 = vand.u32 %v3914, 4294901760
  %3916 = vmatmul.mubr.f32.gmra.mxu0 %v3915
  %v3917 = vpop.f32.mrf.mxu0
  %v3918 = vadd.f32 0.0, %v3917
  %v3919 = vpop.f32.mrf.mxu0
  %3920 = vmatprep.mubr.f32.mxu0 0.0
  %v3921 = vand.u32 %v2572, 4294901760
  %v3922 = vsub.f32 %v2572, %v3921
  %v3923 = vand.u32 %v3922, 4294901760
  %v3924 = vsub.f32 %v3922, %v3923
  %v3925 = vand.u32 %v3924, 4294901760
  %3926 = vmatmul.mubr.f32.gmra.mxu0 %v3925
  %v3927 = vpop.f32.mrf.mxu0
  %v3928 = vadd.f32 0.0, %v3927
  %v3929 = vpop.f32.mrf.mxu0
  %3930 = vmatprep.mubr.f32.mxu0 0.0
  %v3931 = vand.u32 %v2575, 4294901760
  %v3932 = vsub.f32 %v2575, %v3931
  %v3933 = vand.u32 %v3932, 4294901760
  %v3934 = vsub.f32 %v3932, %v3933
  %v3935 = vand.u32 %v3934, 4294901760
  %3936 = vmatmul.mubr.f32.gmra.mxu0 %v3935
  %v3937 = vpop.f32.mrf.mxu0
  %v3938 = vadd.f32 0.0, %v3937
  %v3939 = vpop.f32.mrf.mxu0
  %3940 = vmatprep.mubr.f32.mxu0 0.0
  %v3941 = vand.u32 %v2578, 4294901760
  %v3942 = vsub.f32 %v2578, %v3941
  %v3943 = vand.u32 %v3942, 4294901760
  %v3944 = vsub.f32 %v3942, %v3943
  %v3945 = vand.u32 %v3944, 4294901760
  %3946 = vmatmul.mubr.f32.gmra.mxu0 %v3945
  %v3947 = vpop.f32.mrf.mxu0
  %v3948 = vadd.f32 0.0, %v3947
  %v3949 = vpop.f32.mrf.mxu0
  %3950 = vmatprep.mubr.f32.mxu0 0.0
  %v3951 = vand.u32 %v2581, 4294901760
  %v3952 = vsub.f32 %v2581, %v3951
  %v3953 = vand.u32 %v3952, 4294901760
  %v3954 = vsub.f32 %v3952, %v3953
  %v3955 = vand.u32 %v3954, 4294901760
  %3956 = vmatmul.mubr.f32.gmra.mxu0 %v3955
  %v3957 = vpop.f32.mrf.mxu0
  %v3958 = vadd.f32 0.0, %v3957
  %v3959 = vpop.f32.mrf.mxu0
  %3960 = vmatprep.mubr.f32.mxu0 0.0
  %v3961 = vand.u32 %v2584, 4294901760
  %v3962 = vsub.f32 %v2584, %v3961
  %v3963 = vand.u32 %v3962, 4294901760
  %v3964 = vsub.f32 %v3962, %v3963
  %v3965 = vand.u32 %v3964, 4294901760
  %3966 = vmatmul.mubr.f32.gmra.mxu0 %v3965
  %v3967 = vpop.f32.mrf.mxu0
  %v3968 = vadd.f32 0.0, %v3967
  %v3969 = vpop.f32.mrf.mxu0
  %3970 = vdwg.mxu0
  %3971 = vmatprep.subr.mxu0 0.0
  %3972 = vmatpush1.msra.mxu0 0.0
  %3973 = vmatprep.subr.mxu0 0.0
  %3974 = vmatpush1.msra.mxu0 0.0
  %3975 = vmatprep.subr.mxu0 0.0
  %3976 = vmatpush1.msra.mxu0 0.0
  %3977 = vmatprep.subr.mxu0 0.0
  %3978 = vmatpush1.msra.mxu0 0.0
  %3979 = vmatprep.subr.mxu0 0.0
  %3980 = vmatpush1.msra.mxu0 0.0
  %3981 = vmatprep.subr.mxu0 0.0
  %3982 = vmatpush1.msra.mxu0 0.0
  %3983 = vmatprep.subr.mxu0 0.0
  %3984 = vmatpush1.msra.mxu0 0.0
  %3985 = vmatprep.subr.mxu0 0.0
  %3986 = vmatpush1.msra.mxu0 0.0
  %3987 = vmatprep.subr.mxu0 0.0
  %3988 = vmatpush1.msra.mxu0 0.0
  %3989 = vmatprep.subr.mxu0 0.0
  %3990 = vmatpush1.msra.mxu0 0.0
  %3991 = vmatprep.subr.mxu0 0.0
  %3992 = vmatpush1.msra.mxu0 0.0
  %3993 = vmatprep.subr.mxu0 0.0
  %v3994 = vand.u32 %v3739, 4294901760
  %v3995 = vsub.f32 %v3739, %v3994
  %v3996 = vand.u32 %v3995, 4294901760
  %v3997 = vsub.f32 %v3995, %v3996
  %v3998 = vand.u32 %v3997, 4294901760
  %3999 = vmatpush1.msra.mxu0 %v3998
  %4000 = vmatprep.subr.mxu0 0.0
  %v4001 = vand.u32 %v3736, 4294901760
  %v4002 = vsub.f32 %v3736, %v4001
  %v4003 = vand.u32 %v4002, 4294901760
  %v4004 = vsub.f32 %v4002, %v4003
  %v4005 = vand.u32 %v4004, 4294901760
  %4006 = vmatpush1.msra.mxu0 %v4005
  %4007 = vmatprep.subr.mxu0 0.0
  %v4008 = vand.u32 %v3735, 4294901760
  %v4009 = vsub.f32 %v3735, %v4008
  %v4010 = vand.u32 %v4009, 4294901760
  %v4011 = vsub.f32 %v4009, %v4010
  %v4012 = vand.u32 %v4011, 4294901760
  %4013 = vmatpush1.msra.mxu0 %v4012
  %4014 = vmatprep.subr.mxu0 0.0
  %v4015 = vand.u32 %v3734, 4294901760
  %v4016 = vsub.f32 %v3734, %v4015
  %v4017 = vand.u32 %v4016, 4294901760
  %v4018 = vsub.f32 %v4016, %v4017
  %v4019 = vand.u32 %v4018, 4294901760
  %4020 = vmatpush1.msra.mxu0 %v4019
  %4021 = vmatprep.subr.mxu0 0.0
  %v4022 = vand.u32 %v3733, 4294901760
  %v4023 = vsub.f32 %v3733, %v4022
  %v4024 = vand.u32 %v4023, 4294901760
  %v4025 = vsub.f32 %v4023, %v4024
  %v4026 = vand.u32 %v4025, 4294901760
  %4027 = vmatpush1.msra.mxu0 %v4026
  %4028 = vmatprep.subr.mxu0 0.0
  %4029 = vmatpush2.msra.mxu0 0.0
  %4030 = vmatprep.subr.mxu0 0.0
  %4031 = vmatpush2.msra.mxu0 0.0
  %4032 = vmatprep.subr.mxu0 0.0
  %4033 = vmatpush2.msra.mxu0 0.0
  %4034 = vmatprep.subr.mxu0 0.0
  %4035 = vmatpush2.msra.mxu0 0.0
  %4036 = vmatprep.subr.mxu0 0.0
  %4037 = vmatpush2.msra.mxu0 0.0
  %4038 = vmatprep.subr.mxu0 0.0
  %4039 = vmatpush2.msra.mxu0 0.0
  %4040 = vmatprep.subr.mxu0 0.0
  %4041 = vmatpush2.msra.mxu0 0.0
  %4042 = vmatprep.subr.mxu0 0.0
  %4043 = vmatpush2.msra.mxu0 0.0
  %4044 = vmatprep.subr.mxu0 0.0
  %4045 = vmatpush2.msra.mxu0 0.0
  %4046 = vmatprep.subr.mxu0 0.0
  %4047 = vmatpush2.msra.mxu0 0.0
  %4048 = vmatprep.subr.mxu0 0.0
  %4049 = vmatpush2.msra.mxu0 0.0
  %4050 = vmatprep.subr.mxu0 0.0
  %4051 = vmatpush2.msra.mxu0 0.0
  %4052 = vmatprep.subr.mxu0 0.0
  %4053 = vmatpush2.msra.mxu0 0.0
  %4054 = vmatprep.subr.mxu0 0.0
  %4055 = vmatpush2.msra.mxu0 0.0
  %4056 = vmatprep.subr.mxu0 0.0
  %4057 = vmatpush2.msra.mxu0 0.0
  %4058 = vmatprep.subr.mxu0 0.0
  %4059 = vmatpush2.msra.mxu0 0.0
  %4060 = vmatprep.mubr.f32.mxu0 0.0
  %v4061 = vand.u32 %v2539, 4294901760
  %4062 = vmatmul.mubr.f32.gmra.mxu0 %v4061
  %v4063 = vpop.f32.mrf.mxu0
  %v4064 = vadd.f32 %v3818, %v4063
  %v4065 = vpop.f32.mrf.mxu0
  %4066 = vmatprep.mubr.f32.mxu0 0.0
  %v4067 = vand.u32 %v2542, 4294901760
  %4068 = vmatmul.mubr.f32.gmra.mxu0 %v4067
  %v4069 = vpop.f32.mrf.mxu0
  %v4070 = vadd.f32 %v3828, %v4069
  %v4071 = vpop.f32.mrf.mxu0
  %4072 = vmatprep.mubr.f32.mxu0 0.0
  %v4073 = vand.u32 %v2545, 4294901760
  %4074 = vmatmul.mubr.f32.gmra.mxu0 %v4073
  %v4075 = vpop.f32.mrf.mxu0
  %v4076 = vadd.f32 %v3838, %v4075
  %v4077 = vpop.f32.mrf.mxu0
  %4078 = vmatprep.mubr.f32.mxu0 0.0
  %v4079 = vand.u32 %v2548, 4294901760
  %4080 = vmatmul.mubr.f32.gmra.mxu0 %v4079
  %v4081 = vpop.f32.mrf.mxu0
  %v4082 = vadd.f32 %v3848, %v4081
  %v4083 = vpop.f32.mrf.mxu0
  %4084 = vmatprep.mubr.f32.mxu0 0.0
  %v4085 = vand.u32 %v2551, 4294901760
  %4086 = vmatmul.mubr.f32.gmra.mxu0 %v4085
  %v4087 = vpop.f32.mrf.mxu0
  %v4088 = vadd.f32 %v3858, %v4087
  %v4089 = vpop.f32.mrf.mxu0
  %4090 = vmatprep.mubr.f32.mxu0 0.0
  %v4091 = vand.u32 %v2554, 4294901760
  %4092 = vmatmul.mubr.f32.gmra.mxu0 %v4091
  %v4093 = vpop.f32.mrf.mxu0
  %v4094 = vadd.f32 %v3868, %v4093
  %v4095 = vpop.f32.mrf.mxu0
  %4096 = vmatprep.mubr.f32.mxu0 0.0
  %v4097 = vand.u32 %v2557, 4294901760
  %4098 = vmatmul.mubr.f32.gmra.mxu0 %v4097
  %v4099 = vpop.f32.mrf.mxu0
  %v4100 = vadd.f32 %v3878, %v4099
  %v4101 = vpop.f32.mrf.mxu0
  %4102 = vmatprep.mubr.f32.mxu0 0.0
  %v4103 = vand.u32 %v2560, 4294901760
  %4104 = vmatmul.mubr.f32.gmra.mxu0 %v4103
  %v4105 = vpop.f32.mrf.mxu0
  %v4106 = vadd.f32 %v3888, %v4105
  %v4107 = vpop.f32.mrf.mxu0
  %4108 = vmatprep.mubr.f32.mxu0 0.0
  %v4109 = vand.u32 %v2563, 4294901760
  %4110 = vmatmul.mubr.f32.gmra.mxu0 %v4109
  %v4111 = vpop.f32.mrf.mxu0
  %v4112 = vadd.f32 %v3898, %v4111
  %v4113 = vpop.f32.mrf.mxu0
  %4114 = vmatprep.mubr.f32.mxu0 0.0
  %v4115 = vand.u32 %v2566, 4294901760
  %4116 = vmatmul.mubr.f32.gmra.mxu0 %v4115
  %v4117 = vpop.f32.mrf.mxu0
  %v4118 = vadd.f32 %v3908, %v4117
  %v4119 = vpop.f32.mrf.mxu0
  %4120 = vmatprep.mubr.f32.mxu0 0.0
  %v4121 = vand.u32 %v2569, 4294901760
  %4122 = vmatmul.mubr.f32.gmra.mxu0 %v4121
  %v4123 = vpop.f32.mrf.mxu0
  %v4124 = vadd.f32 %v3918, %v4123
  %v4125 = vpop.f32.mrf.mxu0
  %4126 = vmatprep.mubr.f32.mxu0 0.0
  %v4127 = vand.u32 %v2572, 4294901760
  %4128 = vmatmul.mubr.f32.gmra.mxu0 %v4127
  %v4129 = vpop.f32.mrf.mxu0
  %v4130 = vadd.f32 %v3928, %v4129
  %v4131 = vpop.f32.mrf.mxu0
  %4132 = vmatprep.mubr.f32.mxu0 0.0
  %v4133 = vand.u32 %v2575, 4294901760
  %4134 = vmatmul.mubr.f32.gmra.mxu0 %v4133
  %v4135 = vpop.f32.mrf.mxu0
  %v4136 = vadd.f32 %v3938, %v4135
  %v4137 = vpop.f32.mrf.mxu0
  %4138 = vmatprep.mubr.f32.mxu0 0.0
  %v4139 = vand.u32 %v2578, 4294901760
  %4140 = vmatmul.mubr.f32.gmra.mxu0 %v4139
  %v4141 = vpop.f32.mrf.mxu0
  %v4142 = vadd.f32 %v3948, %v4141
  %v4143 = vpop.f32.mrf.mxu0
  %4144 = vmatprep.mubr.f32.mxu0 0.0
  %v4145 = vand.u32 %v2581, 4294901760
  %4146 = vmatmul.mubr.f32.gmra.mxu0 %v4145
  %v4147 = vpop.f32.mrf.mxu0
  %v4148 = vadd.f32 %v3958, %v4147
  %v4149 = vpop.f32.mrf.mxu0
  %4150 = vmatprep.mubr.f32.mxu0 0.0
  %v4151 = vand.u32 %v2584, 4294901760
  %4152 = vmatmul.mubr.f32.gmra.mxu0 %v4151
  %v4153 = vpop.f32.mrf.mxu0
  %v4154 = vadd.f32 %v3968, %v4153
  %v4155 = vpop.f32.mrf.mxu0
  %4156 = vdwg.mxu0
  %4157 = vmatprep.subr.mxu0 0.0
  %4158 = vmatpush1.msra.mxu0 0.0
  %4159 = vmatprep.subr.mxu0 0.0
  %4160 = vmatpush1.msra.mxu0 0.0
  %4161 = vmatprep.subr.mxu0 0.0
  %4162 = vmatpush1.msra.mxu0 0.0
  %4163 = vmatprep.subr.mxu0 0.0
  %4164 = vmatpush1.msra.mxu0 0.0
  %4165 = vmatprep.subr.mxu0 0.0
  %4166 = vmatpush1.msra.mxu0 0.0
  %4167 = vmatprep.subr.mxu0 0.0
  %4168 = vmatpush1.msra.mxu0 0.0
  %4169 = vmatprep.subr.mxu0 0.0
  %4170 = vmatpush1.msra.mxu0 0.0
  %4171 = vmatprep.subr.mxu0 0.0
  %4172 = vmatpush1.msra.mxu0 0.0
  %4173 = vmatprep.subr.mxu0 0.0
  %4174 = vmatpush1.msra.mxu0 0.0
  %4175 = vmatprep.subr.mxu0 0.0
  %4176 = vmatpush1.msra.mxu0 0.0
  %4177 = vmatprep.subr.mxu0 0.0
  %4178 = vmatpush1.msra.mxu0 0.0
  %4179 = vmatprep.subr.mxu0 0.0
  %v4180 = vand.u32 %v3739, 4294901760
  %v4181 = vsub.f32 %v3739, %v4180
  %4182 = vmatpush1.msra.mxu0 %v4181
  %4183 = vmatprep.subr.mxu0 0.0
  %v4184 = vand.u32 %v3736, 4294901760
  %v4185 = vsub.f32 %v3736, %v4184
  %4186 = vmatpush1.msra.mxu0 %v4185
  %4187 = vmatprep.subr.mxu0 0.0
  %v4188 = vand.u32 %v3735, 4294901760
  %v4189 = vsub.f32 %v3735, %v4188
  %4190 = vmatpush1.msra.mxu0 %v4189
  %4191 = vmatprep.subr.mxu0 0.0
  %v4192 = vand.u32 %v3734, 4294901760
  %v4193 = vsub.f32 %v3734, %v4192
  %4194 = vmatpush1.msra.mxu0 %v4193
  %4195 = vmatprep.subr.mxu0 0.0
  %v4196 = vand.u32 %v3733, 4294901760
  %v4197 = vsub.f32 %v3733, %v4196
  %4198 = vmatpush1.msra.mxu0 %v4197
  %4199 = vmatprep.subr.mxu0 0.0
  %4200 = vmatpush2.msra.mxu0 0.0
  %4201 = vmatprep.subr.mxu0 0.0
  %4202 = vmatpush2.msra.mxu0 0.0
  %4203 = vmatprep.subr.mxu0 0.0
  %4204 = vmatpush2.msra.mxu0 0.0
  %4205 = vmatprep.subr.mxu0 0.0
  %4206 = vmatpush2.msra.mxu0 0.0
  %4207 = vmatprep.subr.mxu0 0.0
  %4208 = vmatpush2.msra.mxu0 0.0
  %4209 = vmatprep.subr.mxu0 0.0
  %4210 = vmatpush2.msra.mxu0 0.0
  %4211 = vmatprep.subr.mxu0 0.0
  %4212 = vmatpush2.msra.mxu0 0.0
  %4213 = vmatprep.subr.mxu0 0.0
  %4214 = vmatpush2.msra.mxu0 0.0
  %4215 = vmatprep.subr.mxu0 0.0
  %4216 = vmatpush2.msra.mxu0 0.0
  %4217 = vmatprep.subr.mxu0 0.0
  %4218 = vmatpush2.msra.mxu0 0.0
  %4219 = vmatprep.subr.mxu0 0.0
  %4220 = vmatpush2.msra.mxu0 0.0
  %4221 = vmatprep.subr.mxu0 0.0
  %4222 = vmatpush2.msra.mxu0 0.0
  %4223 = vmatprep.subr.mxu0 0.0
  %4224 = vmatpush2.msra.mxu0 0.0
  %4225 = vmatprep.subr.mxu0 0.0
  %4226 = vmatpush2.msra.mxu0 0.0
  %4227 = vmatprep.subr.mxu0 0.0
  %4228 = vmatpush2.msra.mxu0 0.0
  %4229 = vmatprep.subr.mxu0 0.0
  %4230 = vmatpush2.msra.mxu0 0.0
  %4231 = vmatprep.mubr.f32.mxu0 0.0
  %v4232 = vand.u32 %v2539, 4294901760
  %v4233 = vsub.f32 %v2539, %v4232
  %4234 = vmatmul.mubr.f32.gmra.mxu0 %v4233
  %v4235 = vpop.f32.mrf.mxu0
  %v4236 = vadd.f32 %v4064, %v4235
  %v4237 = vpop.f32.mrf.mxu0
  %4238 = vmatprep.mubr.f32.mxu0 0.0
  %v4239 = vand.u32 %v2542, 4294901760
  %v4240 = vsub.f32 %v2542, %v4239
  %4241 = vmatmul.mubr.f32.gmra.mxu0 %v4240
  %v4242 = vpop.f32.mrf.mxu0
  %v4243 = vadd.f32 %v4070, %v4242
  %v4244 = vpop.f32.mrf.mxu0
  %4245 = vmatprep.mubr.f32.mxu0 0.0
  %v4246 = vand.u32 %v2545, 4294901760
  %v4247 = vsub.f32 %v2545, %v4246
  %4248 = vmatmul.mubr.f32.gmra.mxu0 %v4247
  %v4249 = vpop.f32.mrf.mxu0
  %v4250 = vadd.f32 %v4076, %v4249
  %v4251 = vpop.f32.mrf.mxu0
  %4252 = vmatprep.mubr.f32.mxu0 0.0
  %v4253 = vand.u32 %v2548, 4294901760
  %v4254 = vsub.f32 %v2548, %v4253
  %4255 = vmatmul.mubr.f32.gmra.mxu0 %v4254
  %v4256 = vpop.f32.mrf.mxu0
  %v4257 = vadd.f32 %v4082, %v4256
  %v4258 = vpop.f32.mrf.mxu0
  %4259 = vmatprep.mubr.f32.mxu0 0.0
  %v4260 = vand.u32 %v2551, 4294901760
  %v4261 = vsub.f32 %v2551, %v4260
  %4262 = vmatmul.mubr.f32.gmra.mxu0 %v4261
  %v4263 = vpop.f32.mrf.mxu0
  %v4264 = vadd.f32 %v4088, %v4263
  %v4265 = vpop.f32.mrf.mxu0
  %4266 = vmatprep.mubr.f32.mxu0 0.0
  %v4267 = vand.u32 %v2554, 4294901760
  %v4268 = vsub.f32 %v2554, %v4267
  %4269 = vmatmul.mubr.f32.gmra.mxu0 %v4268
  %v4270 = vpop.f32.mrf.mxu0
  %v4271 = vadd.f32 %v4094, %v4270
  %v4272 = vpop.f32.mrf.mxu0
  %4273 = vmatprep.mubr.f32.mxu0 0.0
  %v4274 = vand.u32 %v2557, 4294901760
  %v4275 = vsub.f32 %v2557, %v4274
  %4276 = vmatmul.mubr.f32.gmra.mxu0 %v4275
  %v4277 = vpop.f32.mrf.mxu0
  %v4278 = vadd.f32 %v4100, %v4277
  %v4279 = vpop.f32.mrf.mxu0
  %4280 = vmatprep.mubr.f32.mxu0 0.0
  %v4281 = vand.u32 %v2560, 4294901760
  %v4282 = vsub.f32 %v2560, %v4281
  %4283 = vmatmul.mubr.f32.gmra.mxu0 %v4282
  %v4284 = vpop.f32.mrf.mxu0
  %v4285 = vadd.f32 %v4106, %v4284
  %v4286 = vpop.f32.mrf.mxu0
  %4287 = vmatprep.mubr.f32.mxu0 0.0
  %v4288 = vand.u32 %v2563, 4294901760
  %v4289 = vsub.f32 %v2563, %v4288
  %4290 = vmatmul.mubr.f32.gmra.mxu0 %v4289
  %v4291 = vpop.f32.mrf.mxu0
  %v4292 = vadd.f32 %v4112, %v4291
  %v4293 = vpop.f32.mrf.mxu0
  %4294 = vmatprep.mubr.f32.mxu0 0.0
  %v4295 = vand.u32 %v2566, 4294901760
  %v4296 = vsub.f32 %v2566, %v4295
  %4297 = vmatmul.mubr.f32.gmra.mxu0 %v4296
  %v4298 = vpop.f32.mrf.mxu0
  %v4299 = vadd.f32 %v4118, %v4298
  %v4300 = vpop.f32.mrf.mxu0
  %4301 = vmatprep.mubr.f32.mxu0 0.0
  %v4302 = vand.u32 %v2569, 4294901760
  %v4303 = vsub.f32 %v2569, %v4302
  %4304 = vmatmul.mubr.f32.gmra.mxu0 %v4303
  %v4305 = vpop.f32.mrf.mxu0
  %v4306 = vadd.f32 %v4124, %v4305
  %v4307 = vpop.f32.mrf.mxu0
  %4308 = vmatprep.mubr.f32.mxu0 0.0
  %v4309 = vand.u32 %v2572, 4294901760
  %v4310 = vsub.f32 %v2572, %v4309
  %4311 = vmatmul.mubr.f32.gmra.mxu0 %v4310
  %v4312 = vpop.f32.mrf.mxu0
  %v4313 = vadd.f32 %v4130, %v4312
  %v4314 = vpop.f32.mrf.mxu0
  %4315 = vmatprep.mubr.f32.mxu0 0.0
  %v4316 = vand.u32 %v2575, 4294901760
  %v4317 = vsub.f32 %v2575, %v4316
  %4318 = vmatmul.mubr.f32.gmra.mxu0 %v4317
  %v4319 = vpop.f32.mrf.mxu0
  %v4320 = vadd.f32 %v4136, %v4319
  %v4321 = vpop.f32.mrf.mxu0
  %4322 = vmatprep.mubr.f32.mxu0 0.0
  %v4323 = vand.u32 %v2578, 4294901760
  %v4324 = vsub.f32 %v2578, %v4323
  %4325 = vmatmul.mubr.f32.gmra.mxu0 %v4324
  %v4326 = vpop.f32.mrf.mxu0
  %v4327 = vadd.f32 %v4142, %v4326
  %v4328 = vpop.f32.mrf.mxu0
  %4329 = vmatprep.mubr.f32.mxu0 0.0
  %v4330 = vand.u32 %v2581, 4294901760
  %v4331 = vsub.f32 %v2581, %v4330
  %4332 = vmatmul.mubr.f32.gmra.mxu0 %v4331
  %v4333 = vpop.f32.mrf.mxu0
  %v4334 = vadd.f32 %v4148, %v4333
  %v4335 = vpop.f32.mrf.mxu0
  %4336 = vmatprep.mubr.f32.mxu0 0.0
  %v4337 = vand.u32 %v2584, 4294901760
  %v4338 = vsub.f32 %v2584, %v4337
  %4339 = vmatmul.mubr.f32.gmra.mxu0 %v4338
  %v4340 = vpop.f32.mrf.mxu0
  %v4341 = vadd.f32 %v4154, %v4340
  %v4342 = vpop.f32.mrf.mxu0
  %4343 = vdwg.mxu0
  %4344 = vmatprep.subr.mxu0 0.0
  %4345 = vmatpush1.msra.mxu0 0.0
  %4346 = vmatprep.subr.mxu0 0.0
  %4347 = vmatpush1.msra.mxu0 0.0
  %4348 = vmatprep.subr.mxu0 0.0
  %4349 = vmatpush1.msra.mxu0 0.0
  %4350 = vmatprep.subr.mxu0 0.0
  %4351 = vmatpush1.msra.mxu0 0.0
  %4352 = vmatprep.subr.mxu0 0.0
  %4353 = vmatpush1.msra.mxu0 0.0
  %4354 = vmatprep.subr.mxu0 0.0
  %4355 = vmatpush1.msra.mxu0 0.0
  %4356 = vmatprep.subr.mxu0 0.0
  %4357 = vmatpush1.msra.mxu0 0.0
  %4358 = vmatprep.subr.mxu0 0.0
  %4359 = vmatpush1.msra.mxu0 0.0
  %4360 = vmatprep.subr.mxu0 0.0
  %4361 = vmatpush1.msra.mxu0 0.0
  %4362 = vmatprep.subr.mxu0 0.0
  %4363 = vmatpush1.msra.mxu0 0.0
  %4364 = vmatprep.subr.mxu0 0.0
  %4365 = vmatpush1.msra.mxu0 0.0
  %4366 = vmatprep.subr.mxu0 0.0
  %v4367 = vand.u32 %v3739, 4294901760
  %4368 = vmatpush1.msra.mxu0 %v4367
  %4369 = vmatprep.subr.mxu0 0.0
  %v4370 = vand.u32 %v3736, 4294901760
  %4371 = vmatpush1.msra.mxu0 %v4370
  %4372 = vmatprep.subr.mxu0 0.0
  %v4373 = vand.u32 %v3735, 4294901760
  %4374 = vmatpush1.msra.mxu0 %v4373
  %4375 = vmatprep.subr.mxu0 0.0
  %v4376 = vand.u32 %v3734, 4294901760
  %4377 = vmatpush1.msra.mxu0 %v4376
  %4378 = vmatprep.subr.mxu0 0.0
  %v4379 = vand.u32 %v3733, 4294901760
  %4380 = vmatpush1.msra.mxu0 %v4379
  %4381 = vmatprep.subr.mxu0 0.0
  %4382 = vmatpush2.msra.mxu0 0.0
  %4383 = vmatprep.subr.mxu0 0.0
  %4384 = vmatpush2.msra.mxu0 0.0
  %4385 = vmatprep.subr.mxu0 0.0
  %4386 = vmatpush2.msra.mxu0 0.0
  %4387 = vmatprep.subr.mxu0 0.0
  %4388 = vmatpush2.msra.mxu0 0.0
  %4389 = vmatprep.subr.mxu0 0.0
  %4390 = vmatpush2.msra.mxu0 0.0
  %4391 = vmatprep.subr.mxu0 0.0
  %4392 = vmatpush2.msra.mxu0 0.0
  %4393 = vmatprep.subr.mxu0 0.0
  %4394 = vmatpush2.msra.mxu0 0.0
  %4395 = vmatprep.subr.mxu0 0.0
  %4396 = vmatpush2.msra.mxu0 0.0
  %4397 = vmatprep.subr.mxu0 0.0
  %4398 = vmatpush2.msra.mxu0 0.0
  %4399 = vmatprep.subr.mxu0 0.0
  %4400 = vmatpush2.msra.mxu0 0.0
  %4401 = vmatprep.subr.mxu0 0.0
  %4402 = vmatpush2.msra.mxu0 0.0
  %4403 = vmatprep.subr.mxu0 0.0
  %4404 = vmatpush2.msra.mxu0 0.0
  %4405 = vmatprep.subr.mxu0 0.0
  %4406 = vmatpush2.msra.mxu0 0.0
  %4407 = vmatprep.subr.mxu0 0.0
  %4408 = vmatpush2.msra.mxu0 0.0
  %4409 = vmatprep.subr.mxu0 0.0
  %4410 = vmatpush2.msra.mxu0 0.0
  %4411 = vmatprep.subr.mxu0 0.0
  %4412 = vmatpush2.msra.mxu0 0.0
  %4413 = vmatprep.mubr.f32.mxu0 0.0
  %v4414 = vand.u32 %v2539, 4294901760
  %v4415 = vsub.f32 %v2539, %v4414
  %v4416 = vand.u32 %v4415, 4294901760
  %4417 = vmatmul.mubr.f32.gmra.mxu0 %v4416
  %v4418 = vpop.f32.mrf.mxu0
  %v4419 = vadd.f32 %v4236, %v4418
  %v4420 = vpop.f32.mrf.mxu0
  %4421 = vmatprep.mubr.f32.mxu0 0.0
  %v4422 = vand.u32 %v2542, 4294901760
  %v4423 = vsub.f32 %v2542, %v4422
  %v4424 = vand.u32 %v4423, 4294901760
  %4425 = vmatmul.mubr.f32.gmra.mxu0 %v4424
  %v4426 = vpop.f32.mrf.mxu0
  %v4427 = vadd.f32 %v4243, %v4426
  %v4428 = vpop.f32.mrf.mxu0
  %4429 = vmatprep.mubr.f32.mxu0 0.0
  %v4430 = vand.u32 %v2545, 4294901760
  %v4431 = vsub.f32 %v2545, %v4430
  %v4432 = vand.u32 %v4431, 4294901760
  %4433 = vmatmul.mubr.f32.gmra.mxu0 %v4432
  %v4434 = vpop.f32.mrf.mxu0
  %v4435 = vadd.f32 %v4250, %v4434
  %v4436 = vpop.f32.mrf.mxu0
  %4437 = vmatprep.mubr.f32.mxu0 0.0
  %v4438 = vand.u32 %v2548, 4294901760
  %v4439 = vsub.f32 %v2548, %v4438
  %v4440 = vand.u32 %v4439, 4294901760
  %4441 = vmatmul.mubr.f32.gmra.mxu0 %v4440
  %v4442 = vpop.f32.mrf.mxu0
  %v4443 = vadd.f32 %v4257, %v4442
  %v4444 = vpop.f32.mrf.mxu0
  %4445 = vmatprep.mubr.f32.mxu0 0.0
  %v4446 = vand.u32 %v2551, 4294901760
  %v4447 = vsub.f32 %v2551, %v4446
  %v4448 = vand.u32 %v4447, 4294901760
  %4449 = vmatmul.mubr.f32.gmra.mxu0 %v4448
  %v4450 = vpop.f32.mrf.mxu0
  %v4451 = vadd.f32 %v4264, %v4450
  %v4452 = vpop.f32.mrf.mxu0
  %4453 = vmatprep.mubr.f32.mxu0 0.0
  %v4454 = vand.u32 %v2554, 4294901760
  %v4455 = vsub.f32 %v2554, %v4454
  %v4456 = vand.u32 %v4455, 4294901760
  %4457 = vmatmul.mubr.f32.gmra.mxu0 %v4456
  %v4458 = vpop.f32.mrf.mxu0
  %v4459 = vadd.f32 %v4271, %v4458
  %v4460 = vpop.f32.mrf.mxu0
  %4461 = vmatprep.mubr.f32.mxu0 0.0
  %v4462 = vand.u32 %v2557, 4294901760
  %v4463 = vsub.f32 %v2557, %v4462
  %v4464 = vand.u32 %v4463, 4294901760
  %4465 = vmatmul.mubr.f32.gmra.mxu0 %v4464
  %v4466 = vpop.f32.mrf.mxu0
  %v4467 = vadd.f32 %v4278, %v4466
  %v4468 = vpop.f32.mrf.mxu0
  %4469 = vmatprep.mubr.f32.mxu0 0.0
  %v4470 = vand.u32 %v2560, 4294901760
  %v4471 = vsub.f32 %v2560, %v4470
  %v4472 = vand.u32 %v4471, 4294901760
  %4473 = vmatmul.mubr.f32.gmra.mxu0 %v4472
  %v4474 = vpop.f32.mrf.mxu0
  %v4475 = vadd.f32 %v4285, %v4474
  %v4476 = vpop.f32.mrf.mxu0
  %4477 = vmatprep.mubr.f32.mxu0 0.0
  %v4478 = vand.u32 %v2563, 4294901760
  %v4479 = vsub.f32 %v2563, %v4478
  %v4480 = vand.u32 %v4479, 4294901760
  %4481 = vmatmul.mubr.f32.gmra.mxu0 %v4480
  %v4482 = vpop.f32.mrf.mxu0
  %v4483 = vadd.f32 %v4292, %v4482
  %v4484 = vpop.f32.mrf.mxu0
  %4485 = vmatprep.mubr.f32.mxu0 0.0
  %v4486 = vand.u32 %v2566, 4294901760
  %v4487 = vsub.f32 %v2566, %v4486
  %v4488 = vand.u32 %v4487, 4294901760
  %4489 = vmatmul.mubr.f32.gmra.mxu0 %v4488
  %v4490 = vpop.f32.mrf.mxu0
  %v4491 = vadd.f32 %v4299, %v4490
  %v4492 = vpop.f32.mrf.mxu0
  %4493 = vmatprep.mubr.f32.mxu0 0.0
  %v4494 = vand.u32 %v2569, 4294901760
  %v4495 = vsub.f32 %v2569, %v4494
  %v4496 = vand.u32 %v4495, 4294901760
  %4497 = vmatmul.mubr.f32.gmra.mxu0 %v4496
  %v4498 = vpop.f32.mrf.mxu0
  %v4499 = vadd.f32 %v4306, %v4498
  %v4500 = vpop.f32.mrf.mxu0
  %4501 = vmatprep.mubr.f32.mxu0 0.0
  %v4502 = vand.u32 %v2572, 4294901760
  %v4503 = vsub.f32 %v2572, %v4502
  %v4504 = vand.u32 %v4503, 4294901760
  %4505 = vmatmul.mubr.f32.gmra.mxu0 %v4504
  %v4506 = vpop.f32.mrf.mxu0
  %v4507 = vadd.f32 %v4313, %v4506
  %v4508 = vpop.f32.mrf.mxu0
  %4509 = vmatprep.mubr.f32.mxu0 0.0
  %v4510 = vand.u32 %v2575, 4294901760
  %v4511 = vsub.f32 %v2575, %v4510
  %v4512 = vand.u32 %v4511, 4294901760
  %4513 = vmatmul.mubr.f32.gmra.mxu0 %v4512
  %v4514 = vpop.f32.mrf.mxu0
  %v4515 = vadd.f32 %v4320, %v4514
  %v4516 = vpop.f32.mrf.mxu0
  %4517 = vmatprep.mubr.f32.mxu0 0.0
  %v4518 = vand.u32 %v2578, 4294901760
  %v4519 = vsub.f32 %v2578, %v4518
  %v4520 = vand.u32 %v4519, 4294901760
  %4521 = vmatmul.mubr.f32.gmra.mxu0 %v4520
  %v4522 = vpop.f32.mrf.mxu0
  %v4523 = vadd.f32 %v4327, %v4522
  %v4524 = vpop.f32.mrf.mxu0
  %4525 = vmatprep.mubr.f32.mxu0 0.0
  %v4526 = vand.u32 %v2581, 4294901760
  %v4527 = vsub.f32 %v2581, %v4526
  %v4528 = vand.u32 %v4527, 4294901760
  %4529 = vmatmul.mubr.f32.gmra.mxu0 %v4528
  %v4530 = vpop.f32.mrf.mxu0
  %v4531 = vadd.f32 %v4334, %v4530
  %v4532 = vpop.f32.mrf.mxu0
  %4533 = vmatprep.mubr.f32.mxu0 0.0
  %v4534 = vand.u32 %v2584, 4294901760
  %v4535 = vsub.f32 %v2584, %v4534
  %v4536 = vand.u32 %v4535, 4294901760
  %4537 = vmatmul.mubr.f32.gmra.mxu0 %v4536
  %v4538 = vpop.f32.mrf.mxu0
  %v4539 = vadd.f32 %v4341, %v4538
  %v4540 = vpop.f32.mrf.mxu0
  %4541 = vdwg.mxu0
  %4542 = vmatprep.subr.mxu0 0.0
  %4543 = vmatpush1.msra.mxu0 0.0
  %4544 = vmatprep.subr.mxu0 0.0
  %4545 = vmatpush1.msra.mxu0 0.0
  %4546 = vmatprep.subr.mxu0 0.0
  %4547 = vmatpush1.msra.mxu0 0.0
  %4548 = vmatprep.subr.mxu0 0.0
  %4549 = vmatpush1.msra.mxu0 0.0
  %4550 = vmatprep.subr.mxu0 0.0
  %4551 = vmatpush1.msra.mxu0 0.0
  %4552 = vmatprep.subr.mxu0 0.0
  %4553 = vmatpush1.msra.mxu0 0.0
  %4554 = vmatprep.subr.mxu0 0.0
  %4555 = vmatpush1.msra.mxu0 0.0
  %4556 = vmatprep.subr.mxu0 0.0
  %4557 = vmatpush1.msra.mxu0 0.0
  %4558 = vmatprep.subr.mxu0 0.0
  %4559 = vmatpush1.msra.mxu0 0.0
  %4560 = vmatprep.subr.mxu0 0.0
  %4561 = vmatpush1.msra.mxu0 0.0
  %4562 = vmatprep.subr.mxu0 0.0
  %4563 = vmatpush1.msra.mxu0 0.0
  %4564 = vmatprep.subr.mxu0 0.0
  %v4565 = vand.u32 %v3739, 4294901760
  %v4566 = vsub.f32 %v3739, %v4565
  %v4567 = vand.u32 %v4566, 4294901760
  %4568 = vmatpush1.msra.mxu0 %v4567
  %4569 = vmatprep.subr.mxu0 0.0
  %v4570 = vand.u32 %v3736, 4294901760
  %v4571 = vsub.f32 %v3736, %v4570
  %v4572 = vand.u32 %v4571, 4294901760
  %4573 = vmatpush1.msra.mxu0 %v4572
  %4574 = vmatprep.subr.mxu0 0.0
  %v4575 = vand.u32 %v3735, 4294901760
  %v4576 = vsub.f32 %v3735, %v4575
  %v4577 = vand.u32 %v4576, 4294901760
  %4578 = vmatpush1.msra.mxu0 %v4577
  %4579 = vmatprep.subr.mxu0 0.0
  %v4580 = vand.u32 %v3734, 4294901760
  %v4581 = vsub.f32 %v3734, %v4580
  %v4582 = vand.u32 %v4581, 4294901760
  %4583 = vmatpush1.msra.mxu0 %v4582
  %4584 = vmatprep.subr.mxu0 0.0
  %v4585 = vand.u32 %v3733, 4294901760
  %v4586 = vsub.f32 %v3733, %v4585
  %v4587 = vand.u32 %v4586, 4294901760
  %4588 = vmatpush1.msra.mxu0 %v4587
  %4589 = vmatprep.subr.mxu0 0.0
  %4590 = vmatpush2.msra.mxu0 0.0
  %4591 = vmatprep.subr.mxu0 0.0
  %4592 = vmatpush2.msra.mxu0 0.0
  %4593 = vmatprep.subr.mxu0 0.0
  %4594 = vmatpush2.msra.mxu0 0.0
  %4595 = vmatprep.subr.mxu0 0.0
  %4596 = vmatpush2.msra.mxu0 0.0
  %4597 = vmatprep.subr.mxu0 0.0
  %4598 = vmatpush2.msra.mxu0 0.0
  %4599 = vmatprep.subr.mxu0 0.0
  %4600 = vmatpush2.msra.mxu0 0.0
  %4601 = vmatprep.subr.mxu0 0.0
  %4602 = vmatpush2.msra.mxu0 0.0
  %4603 = vmatprep.subr.mxu0 0.0
  %4604 = vmatpush2.msra.mxu0 0.0
  %4605 = vmatprep.subr.mxu0 0.0
  %4606 = vmatpush2.msra.mxu0 0.0
  %4607 = vmatprep.subr.mxu0 0.0
  %4608 = vmatpush2.msra.mxu0 0.0
  %4609 = vmatprep.subr.mxu0 0.0
  %4610 = vmatpush2.msra.mxu0 0.0
  %4611 = vmatprep.subr.mxu0 0.0
  %4612 = vmatpush2.msra.mxu0 0.0
  %4613 = vmatprep.subr.mxu0 0.0
  %4614 = vmatpush2.msra.mxu0 0.0
  %4615 = vmatprep.subr.mxu0 0.0
  %4616 = vmatpush2.msra.mxu0 0.0
  %4617 = vmatprep.subr.mxu0 0.0
  %4618 = vmatpush2.msra.mxu0 0.0
  %4619 = vmatprep.subr.mxu0 0.0
  %4620 = vmatpush2.msra.mxu0 0.0
  %4621 = vmatprep.mubr.f32.mxu0 0.0
  %v4622 = vand.u32 %v2539, 4294901760
  %4623 = vmatmul.mubr.f32.gmra.mxu0 %v4622
  %v4624 = vpop.f32.mrf.mxu0
  %v4625 = vadd.f32 %v4419, %v4624
  %v4626 = vpop.f32.mrf.mxu0
  %4627 = vmatprep.mubr.f32.mxu0 0.0
  %v4628 = vand.u32 %v2542, 4294901760
  %4629 = vmatmul.mubr.f32.gmra.mxu0 %v4628
  %v4630 = vpop.f32.mrf.mxu0
  %v4631 = vadd.f32 %v4427, %v4630
  %v4632 = vpop.f32.mrf.mxu0
  %4633 = vmatprep.mubr.f32.mxu0 0.0
  %v4634 = vand.u32 %v2545, 4294901760
  %4635 = vmatmul.mubr.f32.gmra.mxu0 %v4634
  %v4636 = vpop.f32.mrf.mxu0
  %v4637 = vadd.f32 %v4435, %v4636
  %v4638 = vpop.f32.mrf.mxu0
  %4639 = vmatprep.mubr.f32.mxu0 0.0
  %v4640 = vand.u32 %v2548, 4294901760
  %4641 = vmatmul.mubr.f32.gmra.mxu0 %v4640
  %v4642 = vpop.f32.mrf.mxu0
  %v4643 = vadd.f32 %v4443, %v4642
  %v4644 = vpop.f32.mrf.mxu0
  %4645 = vmatprep.mubr.f32.mxu0 0.0
  %v4646 = vand.u32 %v2551, 4294901760
  %4647 = vmatmul.mubr.f32.gmra.mxu0 %v4646
  %v4648 = vpop.f32.mrf.mxu0
  %v4649 = vadd.f32 %v4451, %v4648
  %v4650 = vpop.f32.mrf.mxu0
  %4651 = vmatprep.mubr.f32.mxu0 0.0
  %v4652 = vand.u32 %v2554, 4294901760
  %4653 = vmatmul.mubr.f32.gmra.mxu0 %v4652
  %v4654 = vpop.f32.mrf.mxu0
  %v4655 = vadd.f32 %v4459, %v4654
  %v4656 = vpop.f32.mrf.mxu0
  %4657 = vmatprep.mubr.f32.mxu0 0.0
  %v4658 = vand.u32 %v2557, 4294901760
  %4659 = vmatmul.mubr.f32.gmra.mxu0 %v4658
  %v4660 = vpop.f32.mrf.mxu0
  %v4661 = vadd.f32 %v4467, %v4660
  %v4662 = vpop.f32.mrf.mxu0
  %4663 = vmatprep.mubr.f32.mxu0 0.0
  %v4664 = vand.u32 %v2560, 4294901760
  %4665 = vmatmul.mubr.f32.gmra.mxu0 %v4664
  %v4666 = vpop.f32.mrf.mxu0
  %v4667 = vadd.f32 %v4475, %v4666
  %v4668 = vpop.f32.mrf.mxu0
  %4669 = vmatprep.mubr.f32.mxu0 0.0
  %v4670 = vand.u32 %v2563, 4294901760
  %4671 = vmatmul.mubr.f32.gmra.mxu0 %v4670
  %v4672 = vpop.f32.mrf.mxu0
  %v4673 = vadd.f32 %v4483, %v4672
  %v4674 = vpop.f32.mrf.mxu0
  %4675 = vmatprep.mubr.f32.mxu0 0.0
  %v4676 = vand.u32 %v2566, 4294901760
  %4677 = vmatmul.mubr.f32.gmra.mxu0 %v4676
  %v4678 = vpop.f32.mrf.mxu0
  %v4679 = vadd.f32 %v4491, %v4678
  %v4680 = vpop.f32.mrf.mxu0
  %4681 = vmatprep.mubr.f32.mxu0 0.0
  %v4682 = vand.u32 %v2569, 4294901760
  %4683 = vmatmul.mubr.f32.gmra.mxu0 %v4682
  %v4684 = vpop.f32.mrf.mxu0
  %v4685 = vadd.f32 %v4499, %v4684
  %v4686 = vpop.f32.mrf.mxu0
  %4687 = vmatprep.mubr.f32.mxu0 0.0
  %v4688 = vand.u32 %v2572, 4294901760
  %4689 = vmatmul.mubr.f32.gmra.mxu0 %v4688
  %v4690 = vpop.f32.mrf.mxu0
  %v4691 = vadd.f32 %v4507, %v4690
  %v4692 = vpop.f32.mrf.mxu0
  %4693 = vmatprep.mubr.f32.mxu0 0.0
  %v4694 = vand.u32 %v2575, 4294901760
  %4695 = vmatmul.mubr.f32.gmra.mxu0 %v4694
  %v4696 = vpop.f32.mrf.mxu0
  %v4697 = vadd.f32 %v4515, %v4696
  %v4698 = vpop.f32.mrf.mxu0
  %4699 = vmatprep.mubr.f32.mxu0 0.0
  %v4700 = vand.u32 %v2578, 4294901760
  %4701 = vmatmul.mubr.f32.gmra.mxu0 %v4700
  %v4702 = vpop.f32.mrf.mxu0
  %v4703 = vadd.f32 %v4523, %v4702
  %v4704 = vpop.f32.mrf.mxu0
  %4705 = vmatprep.mubr.f32.mxu0 0.0
  %v4706 = vand.u32 %v2581, 4294901760
  %4707 = vmatmul.mubr.f32.gmra.mxu0 %v4706
  %v4708 = vpop.f32.mrf.mxu0
  %v4709 = vadd.f32 %v4531, %v4708
  %v4710 = vpop.f32.mrf.mxu0
  %4711 = vmatprep.mubr.f32.mxu0 0.0
  %v4712 = vand.u32 %v2584, 4294901760
  %4713 = vmatmul.mubr.f32.gmra.mxu0 %v4712
  %v4714 = vpop.f32.mrf.mxu0
  %v4715 = vadd.f32 %v4539, %v4714
  %v4716 = vpop.f32.mrf.mxu0
  %4717 = vdwg.mxu0
  %4718 = vmatprep.subr.mxu0 0.0
  %4719 = vmatpush1.msra.mxu0 0.0
  %4720 = vmatprep.subr.mxu0 0.0
  %4721 = vmatpush1.msra.mxu0 0.0
  %4722 = vmatprep.subr.mxu0 0.0
  %4723 = vmatpush1.msra.mxu0 0.0
  %4724 = vmatprep.subr.mxu0 0.0
  %4725 = vmatpush1.msra.mxu0 0.0
  %4726 = vmatprep.subr.mxu0 0.0
  %4727 = vmatpush1.msra.mxu0 0.0
  %4728 = vmatprep.subr.mxu0 0.0
  %4729 = vmatpush1.msra.mxu0 0.0
  %4730 = vmatprep.subr.mxu0 0.0
  %4731 = vmatpush1.msra.mxu0 0.0
  %4732 = vmatprep.subr.mxu0 0.0
  %4733 = vmatpush1.msra.mxu0 0.0
  %4734 = vmatprep.subr.mxu0 0.0
  %4735 = vmatpush1.msra.mxu0 0.0
  %4736 = vmatprep.subr.mxu0 0.0
  %4737 = vmatpush1.msra.mxu0 0.0
  %4738 = vmatprep.subr.mxu0 0.0
  %4739 = vmatpush1.msra.mxu0 0.0
  %4740 = vmatprep.subr.mxu0 0.0
  %v4741 = vand.u32 %v3739, 4294901760
  %4742 = vmatpush1.msra.mxu0 %v4741
  %4743 = vmatprep.subr.mxu0 0.0
  %v4744 = vand.u32 %v3736, 4294901760
  %4745 = vmatpush1.msra.mxu0 %v4744
  %4746 = vmatprep.subr.mxu0 0.0
  %v4747 = vand.u32 %v3735, 4294901760
  %4748 = vmatpush1.msra.mxu0 %v4747
  %4749 = vmatprep.subr.mxu0 0.0
  %v4750 = vand.u32 %v3734, 4294901760
  %4751 = vmatpush1.msra.mxu0 %v4750
  %4752 = vmatprep.subr.mxu0 0.0
  %v4753 = vand.u32 %v3733, 4294901760
  %4754 = vmatpush1.msra.mxu0 %v4753
  %4755 = vmatprep.subr.mxu0 0.0
  %4756 = vmatpush2.msra.mxu0 0.0
  %4757 = vmatprep.subr.mxu0 0.0
  %4758 = vmatpush2.msra.mxu0 0.0
  %4759 = vmatprep.subr.mxu0 0.0
  %4760 = vmatpush2.msra.mxu0 0.0
  %4761 = vmatprep.subr.mxu0 0.0
  %4762 = vmatpush2.msra.mxu0 0.0
  %4763 = vmatprep.subr.mxu0 0.0
  %4764 = vmatpush2.msra.mxu0 0.0
  %4765 = vmatprep.subr.mxu0 0.0
  %4766 = vmatpush2.msra.mxu0 0.0
  %4767 = vmatprep.subr.mxu0 0.0
  %4768 = vmatpush2.msra.mxu0 0.0
  %4769 = vmatprep.subr.mxu0 0.0
  %4770 = vmatpush2.msra.mxu0 0.0
  %4771 = vmatprep.subr.mxu0 0.0
  %4772 = vmatpush2.msra.mxu0 0.0
  %4773 = vmatprep.subr.mxu0 0.0
  %4774 = vmatpush2.msra.mxu0 0.0
  %4775 = vmatprep.subr.mxu0 0.0
  %4776 = vmatpush2.msra.mxu0 0.0
  %4777 = vmatprep.subr.mxu0 0.0
  %4778 = vmatpush2.msra.mxu0 0.0
  %4779 = vmatprep.subr.mxu0 0.0
  %4780 = vmatpush2.msra.mxu0 0.0
  %4781 = vmatprep.subr.mxu0 0.0
  %4782 = vmatpush2.msra.mxu0 0.0
  %4783 = vmatprep.subr.mxu0 0.0
  %4784 = vmatpush2.msra.mxu0 0.0
  %4785 = vmatprep.subr.mxu0 0.0
  %4786 = vmatpush2.msra.mxu0 0.0
  %4787 = vmatprep.mubr.f32.mxu0 0.0
  %v4788 = vand.u32 %v2539, 4294901760
  %4789 = vmatmul.mubr.f32.gmra.mxu0 %v4788
  %v4790 = vpop.f32.mrf.mxu0
  %v4791 = vadd.f32 %v4625, %v4790
  %v4792 = vpop.f32.mrf.mxu0
  %4793 = vmatprep.mubr.f32.mxu0 0.0
  %v4794 = vand.u32 %v2542, 4294901760
  %4795 = vmatmul.mubr.f32.gmra.mxu0 %v4794
  %v4796 = vpop.f32.mrf.mxu0
  %v4797 = vadd.f32 %v4631, %v4796
  %v4798 = vpop.f32.mrf.mxu0
  %4799 = vmatprep.mubr.f32.mxu0 0.0
  %v4800 = vand.u32 %v2545, 4294901760
  %4801 = vmatmul.mubr.f32.gmra.mxu0 %v4800
  %v4802 = vpop.f32.mrf.mxu0
  %v4803 = vadd.f32 %v4637, %v4802
  %v4804 = vpop.f32.mrf.mxu0
  %4805 = vmatprep.mubr.f32.mxu0 0.0
  %v4806 = vand.u32 %v2548, 4294901760
  %4807 = vmatmul.mubr.f32.gmra.mxu0 %v4806
  %v4808 = vpop.f32.mrf.mxu0
  %v4809 = vadd.f32 %v4643, %v4808
  %v4810 = vpop.f32.mrf.mxu0
  %4811 = vmatprep.mubr.f32.mxu0 0.0
  %v4812 = vand.u32 %v2551, 4294901760
  %4813 = vmatmul.mubr.f32.gmra.mxu0 %v4812
  %v4814 = vpop.f32.mrf.mxu0
  %v4815 = vadd.f32 %v4649, %v4814
  %v4816 = vpop.f32.mrf.mxu0
  %4817 = vmatprep.mubr.f32.mxu0 0.0
  %v4818 = vand.u32 %v2554, 4294901760
  %4819 = vmatmul.mubr.f32.gmra.mxu0 %v4818
  %v4820 = vpop.f32.mrf.mxu0
  %v4821 = vadd.f32 %v4655, %v4820
  %v4822 = vpop.f32.mrf.mxu0
  %4823 = vmatprep.mubr.f32.mxu0 0.0
  %v4824 = vand.u32 %v2557, 4294901760
  %4825 = vmatmul.mubr.f32.gmra.mxu0 %v4824
  %v4826 = vpop.f32.mrf.mxu0
  %v4827 = vadd.f32 %v4661, %v4826
  %v4828 = vpop.f32.mrf.mxu0
  %4829 = vmatprep.mubr.f32.mxu0 0.0
  %v4830 = vand.u32 %v2560, 4294901760
  %4831 = vmatmul.mubr.f32.gmra.mxu0 %v4830
  %v4832 = vpop.f32.mrf.mxu0
  %v4833 = vadd.f32 %v4667, %v4832
  %v4834 = vpop.f32.mrf.mxu0
  %4835 = vmatprep.mubr.f32.mxu0 0.0
  %v4836 = vand.u32 %v2563, 4294901760
  %4837 = vmatmul.mubr.f32.gmra.mxu0 %v4836
  %v4838 = vpop.f32.mrf.mxu0
  %v4839 = vadd.f32 %v4673, %v4838
  %v4840 = vpop.f32.mrf.mxu0
  %4841 = vmatprep.mubr.f32.mxu0 0.0
  %v4842 = vand.u32 %v2566, 4294901760
  %4843 = vmatmul.mubr.f32.gmra.mxu0 %v4842
  %v4844 = vpop.f32.mrf.mxu0
  %v4845 = vadd.f32 %v4679, %v4844
  %v4846 = vpop.f32.mrf.mxu0
  %4847 = vmatprep.mubr.f32.mxu0 0.0
  %v4848 = vand.u32 %v2569, 4294901760
  %4849 = vmatmul.mubr.f32.gmra.mxu0 %v4848
  %v4850 = vpop.f32.mrf.mxu0
  %v4851 = vadd.f32 %v4685, %v4850
  %v4852 = vpop.f32.mrf.mxu0
  %4853 = vmatprep.mubr.f32.mxu0 0.0
  %v4854 = vand.u32 %v2572, 4294901760
  %4855 = vmatmul.mubr.f32.gmra.mxu0 %v4854
  %v4856 = vpop.f32.mrf.mxu0
  %v4857 = vadd.f32 %v4691, %v4856
  %v4858 = vpop.f32.mrf.mxu0
  %4859 = vmatprep.mubr.f32.mxu0 0.0
  %v4860 = vand.u32 %v2575, 4294901760
  %4861 = vmatmul.mubr.f32.gmra.mxu0 %v4860
  %v4862 = vpop.f32.mrf.mxu0
  %v4863 = vadd.f32 %v4697, %v4862
  %v4864 = vpop.f32.mrf.mxu0
  %4865 = vmatprep.mubr.f32.mxu0 0.0
  %v4866 = vand.u32 %v2578, 4294901760
  %4867 = vmatmul.mubr.f32.gmra.mxu0 %v4866
  %v4868 = vpop.f32.mrf.mxu0
  %v4869 = vadd.f32 %v4703, %v4868
  %v4870 = vpop.f32.mrf.mxu0
  %4871 = vmatprep.mubr.f32.mxu0 0.0
  %v4872 = vand.u32 %v2581, 4294901760
  %4873 = vmatmul.mubr.f32.gmra.mxu0 %v4872
  %v4874 = vpop.f32.mrf.mxu0
  %v4875 = vadd.f32 %v4709, %v4874
  %v4876 = vpop.f32.mrf.mxu0
  %4877 = vmatprep.mubr.f32.mxu0 0.0
  %v4878 = vand.u32 %v2584, 4294901760
  %4879 = vmatmul.mubr.f32.gmra.mxu0 %v4878
  %v4880 = vpop.f32.mrf.mxu0
  %v4881 = vadd.f32 %v4715, %v4880
  %v4882 = vpop.f32.mrf.mxu0
  %4883 = vdwg.mxu0
  %v4884 = vmax.f32 %v3640, %v4791
  %v4885 = vmax.f32 %v3646, %v4797
  %v4886 = vmax.f32 %v3652, %v4803
  %v4887 = vmax.f32 %v3658, %v4809
  %v4888 = vmax.f32 %v3664, %v4815
  %v4889 = vmax.f32 %v3670, %v4821
  %v4890 = vmax.f32 %v3676, %v4827
  %v4891 = vmax.f32 %v3682, %v4833
  %v4892 = vmax.f32 %v3688, %v4839
  %v4893 = vmax.f32 %v3694, %v4845
  %v4894 = vmax.f32 %v3700, %v4851
  %v4895 = vmax.f32 %v3706, %v4857
  %v4896 = vmax.f32 %v3712, %v4863
  %v4897 = vmax.f32 %v3718, %v4869
  %v4898 = vmax.f32 %v3724, %v4875
  %v4899 = vmax.f32 %v3730, %v4881
  %v4900 = vld [vmem:[%s6] sm:$0x1]
  %v4902 = vlaneseq
  %v4903 = vshrl.u32 %v4902, 7
  %v4904 = vsub.s32 0, %v4903
  %v4905 = vrot.slane %v4900, %v4904
  %v4907 = vadd.f32 %v4884, %v4905
  %v4908 = vadd.f32 %v4885, %v4905
  %v4909 = vadd.f32 %v4886, %v4905
  %v4910 = vadd.f32 %v4887, %v4905
  %v4911 = vadd.f32 %v4888, %v4905
  %v4912 = vadd.f32 %v4889, %v4905
  %v4913 = vadd.f32 %v4890, %v4905
  %v4914 = vadd.f32 %v4891, %v4905
  %v4915 = vadd.f32 %v4892, %v4905
  %v4916 = vadd.f32 %v4893, %v4905
  %v4917 = vadd.f32 %v4894, %v4905
  %v4918 = vadd.f32 %v4895, %v4905
  %v4919 = vadd.f32 %v4896, %v4905
  %v4920 = vadd.f32 %v4897, %v4905
  %v4921 = vadd.f32 %v4898, %v4905
  %v4922 = vadd.f32 %v4899, %v4905
  %v4923 = vtanh.pop %v4907
  %v4924 = vtanh.pop %v4908
  %v4925 = vtanh.pop %v4909
  %v4926 = vtanh.pop %v4910
  %v4927 = vtanh.pop %v4911
  %v4928 = vtanh.pop %v4912
  %v4929 = vtanh.pop %v4913
  %v4930 = vtanh.pop %v4914
  %v4931 = vtanh.pop %v4915
  %v4932 = vtanh.pop %v4916
  %v4933 = vtanh.pop %v4917
  %v4934 = vtanh.pop %v4918
  %v4935 = vtanh.pop %v4919
  %v4936 = vtanh.pop %v4920
  %v4937 = vtanh.pop %v4921
  %v4938 = vtanh.pop %v4922
  %v4939 = vld [vmem:[%s7] sm:$0xff]
  %v4940 = vld [vmem:[%s7 + $0x8] sm:$0x3]
  %v4941 = vld [vmem:[%s8] sm:$0x1]
  %v4943 = vlaneseq
  %v4944 = vshrl.u32 %v4943, 7
  %v4945 = vsub.s32 0, %v4944
  %v4946 = vrot.slane %v4941, %v4945
  %vm4948 = vcmask 80896
  %v4950 = vsel %vm4948, %v4923, 0
  %v4953 = vsel %vm4948, %v4924, 0
  %v4956 = vsel %vm4948, %v4925, 0
  %v4959 = vsel %vm4948, %v4926, 0
  %v4962 = vsel %vm4948, %v4927, 0
  %v4965 = vsel %vm4948, %v4928, 0
  %v4968 = vsel %vm4948, %v4929, 0
  %v4971 = vsel %vm4948, %v4930, 0
  %v4974 = vsel %vm4948, %v4931, 0
  %v4977 = vsel %vm4948, %v4932, 0
  %v4980 = vsel %vm4948, %v4933, 0
  %v4983 = vsel %vm4948, %v4934, 0
  %v4986 = vsel %vm4948, %v4935, 0
  %v4989 = vsel %vm4948, %v4936, 0
  %v4992 = vsel %vm4948, %v4937, 0
  %v4995 = vsel %vm4948, %v4938, 0
  %vm4997 = vcmask 1041408
  %v4999 = vsel %vm4997, %v4940, 0
  %5001 = vmatprep.subr.mxu0 0.0
  %5002 = vmatpush1.msra.mxu0 0.0
  %5003 = vmatprep.subr.mxu0 0.0
  %5004 = vmatpush1.msra.mxu0 0.0
  %5005 = vmatprep.subr.mxu0 0.0
  %5006 = vmatpush1.msra.mxu0 0.0
  %5007 = vmatprep.subr.mxu0 0.0
  %5008 = vmatpush1.msra.mxu0 0.0
  %5009 = vmatprep.subr.mxu0 0.0
  %5010 = vmatpush1.msra.mxu0 0.0
  %5011 = vmatprep.subr.mxu0 0.0
  %5012 = vmatpush1.msra.mxu0 0.0
  %5013 = vmatprep.subr.mxu0 0.0
  %5014 = vmatpush1.msra.mxu0 0.0
  %5015 = vmatprep.subr.mxu0 0.0
  %5016 = vmatpush1.msra.mxu0 0.0
  %5017 = vmatprep.subr.mxu0 0.0
  %5018 = vmatpush1.msra.mxu0 0.0
  %5019 = vmatprep.subr.mxu0 0.0
  %5020 = vmatpush1.msra.mxu0 0.0
  %5021 = vmatprep.subr.mxu0 0.0
  %5022 = vmatpush1.msra.mxu0 0.0
  %5023 = vmatprep.subr.mxu0 0.0
  %5024 = vmatpush1.msra.mxu0 0.0
  %5025 = vmatprep.subr.mxu0 0.0
  %5026 = vmatpush1.msra.mxu0 0.0
  %5027 = vmatprep.subr.mxu0 0.0
  %5028 = vmatpush1.msra.mxu0 0.0
  %5029 = vmatprep.subr.mxu0 0.0
  %v5030 = vand.u32 %v4999, 4294901760
  %5031 = vmatpush1.msra.mxu0 %v5030
  %5032 = vmatprep.subr.mxu0 0.0
  %v5033 = vand.u32 %v4939, 4294901760
  %5034 = vmatpush1.msra.mxu0 %v5033
  %5035 = vmatprep.subr.mxu0 0.0
  %5036 = vmatpush2.msra.mxu0 0.0
  %5037 = vmatprep.subr.mxu0 0.0
  %5038 = vmatpush2.msra.mxu0 0.0
  %5039 = vmatprep.subr.mxu0 0.0
  %5040 = vmatpush2.msra.mxu0 0.0
  %5041 = vmatprep.subr.mxu0 0.0
  %5042 = vmatpush2.msra.mxu0 0.0
  %5043 = vmatprep.subr.mxu0 0.0
  %5044 = vmatpush2.msra.mxu0 0.0
  %5045 = vmatprep.subr.mxu0 0.0
  %5046 = vmatpush2.msra.mxu0 0.0
  %5047 = vmatprep.subr.mxu0 0.0
  %5048 = vmatpush2.msra.mxu0 0.0
  %5049 = vmatprep.subr.mxu0 0.0
  %5050 = vmatpush2.msra.mxu0 0.0
  %5051 = vmatprep.subr.mxu0 0.0
  %5052 = vmatpush2.msra.mxu0 0.0
  %5053 = vmatprep.subr.mxu0 0.0
  %5054 = vmatpush2.msra.mxu0 0.0
  %5055 = vmatprep.subr.mxu0 0.0
  %5056 = vmatpush2.msra.mxu0 0.0
  %5057 = vmatprep.subr.mxu0 0.0
  %5058 = vmatpush2.msra.mxu0 0.0
  %5059 = vmatprep.subr.mxu0 0.0
  %5060 = vmatpush2.msra.mxu0 0.0
  %5061 = vmatprep.subr.mxu0 0.0
  %5062 = vmatpush2.msra.mxu0 0.0
  %5063 = vmatprep.subr.mxu0 0.0
  %5064 = vmatpush2.msra.mxu0 0.0
  %5065 = vmatprep.subr.mxu0 0.0
  %5066 = vmatpush2.msra.mxu0 0.0
  %5067 = vmatprep.mubr.f32.mxu0 0.0
  %v5068 = vand.u32 %v4950, 4294901760
  %v5069 = vsub.f32 %v4950, %v5068
  %v5070 = vand.u32 %v5069, 4294901760
  %v5071 = vsub.f32 %v5069, %v5070
  %v5072 = vand.u32 %v5071, 4294901760
  %5073 = vmatmul.mubr.f32.gmra.mxu0 %v5072
  %v5074 = vpop.f32.mrf.mxu0
  %v5075 = vadd.f32 %v4946, %v5074
  %v5076 = vpop.f32.mrf.mxu0
  %5077 = vmatprep.mubr.f32.mxu0 0.0
  %v5078 = vand.u32 %v4953, 4294901760
  %v5079 = vsub.f32 %v4953, %v5078
  %v5080 = vand.u32 %v5079, 4294901760
  %v5081 = vsub.f32 %v5079, %v5080
  %v5082 = vand.u32 %v5081, 4294901760
  %5083 = vmatmul.mubr.f32.gmra.mxu0 %v5082
  %v5084 = vpop.f32.mrf.mxu0
  %v5085 = vadd.f32 %v4946, %v5084
  %v5086 = vpop.f32.mrf.mxu0
  %5087 = vmatprep.mubr.f32.mxu0 0.0
  %v5088 = vand.u32 %v4956, 4294901760
  %v5089 = vsub.f32 %v4956, %v5088
  %v5090 = vand.u32 %v5089, 4294901760
  %v5091 = vsub.f32 %v5089, %v5090
  %v5092 = vand.u32 %v5091, 4294901760
  %5093 = vmatmul.mubr.f32.gmra.mxu0 %v5092
  %v5094 = vpop.f32.mrf.mxu0
  %v5095 = vadd.f32 %v4946, %v5094
  %v5096 = vpop.f32.mrf.mxu0
  %5097 = vmatprep.mubr.f32.mxu0 0.0
  %v5098 = vand.u32 %v4959, 4294901760
  %v5099 = vsub.f32 %v4959, %v5098
  %v5100 = vand.u32 %v5099, 4294901760
  %v5101 = vsub.f32 %v5099, %v5100
  %v5102 = vand.u32 %v5101, 4294901760
  %5103 = vmatmul.mubr.f32.gmra.mxu0 %v5102
  %v5104 = vpop.f32.mrf.mxu0
  %v5105 = vadd.f32 %v4946, %v5104
  %v5106 = vpop.f32.mrf.mxu0
  %5107 = vmatprep.mubr.f32.mxu0 0.0
  %v5108 = vand.u32 %v4962, 4294901760
  %v5109 = vsub.f32 %v4962, %v5108
  %v5110 = vand.u32 %v5109, 4294901760
  %v5111 = vsub.f32 %v5109, %v5110
  %v5112 = vand.u32 %v5111, 4294901760
  %5113 = vmatmul.mubr.f32.gmra.mxu0 %v5112
  %v5114 = vpop.f32.mrf.mxu0
  %v5115 = vadd.f32 %v4946, %v5114
  %v5116 = vpop.f32.mrf.mxu0
  %5117 = vmatprep.mubr.f32.mxu0 0.0
  %v5118 = vand.u32 %v4965, 4294901760
  %v5119 = vsub.f32 %v4965, %v5118
  %v5120 = vand.u32 %v5119, 4294901760
  %v5121 = vsub.f32 %v5119, %v5120
  %v5122 = vand.u32 %v5121, 4294901760
  %5123 = vmatmul.mubr.f32.gmra.mxu0 %v5122
  %v5124 = vpop.f32.mrf.mxu0
  %v5125 = vadd.f32 %v4946, %v5124
  %v5126 = vpop.f32.mrf.mxu0
  %5127 = vmatprep.mubr.f32.mxu0 0.0
  %v5128 = vand.u32 %v4968, 4294901760
  %v5129 = vsub.f32 %v4968, %v5128
  %v5130 = vand.u32 %v5129, 4294901760
  %v5131 = vsub.f32 %v5129, %v5130
  %v5132 = vand.u32 %v5131, 4294901760
  %5133 = vmatmul.mubr.f32.gmra.mxu0 %v5132
  %v5134 = vpop.f32.mrf.mxu0
  %v5135 = vadd.f32 %v4946, %v5134
  %v5136 = vpop.f32.mrf.mxu0
  %5137 = vmatprep.mubr.f32.mxu0 0.0
  %v5138 = vand.u32 %v4971, 4294901760
  %v5139 = vsub.f32 %v4971, %v5138
  %v5140 = vand.u32 %v5139, 4294901760
  %v5141 = vsub.f32 %v5139, %v5140
  %v5142 = vand.u32 %v5141, 4294901760
  %5143 = vmatmul.mubr.f32.gmra.mxu0 %v5142
  %v5144 = vpop.f32.mrf.mxu0
  %v5145 = vadd.f32 %v4946, %v5144
  %v5146 = vpop.f32.mrf.mxu0
  %5147 = vmatprep.mubr.f32.mxu0 0.0
  %v5148 = vand.u32 %v4974, 4294901760
  %v5149 = vsub.f32 %v4974, %v5148
  %v5150 = vand.u32 %v5149, 4294901760
  %v5151 = vsub.f32 %v5149, %v5150
  %v5152 = vand.u32 %v5151, 4294901760
  %5153 = vmatmul.mubr.f32.gmra.mxu0 %v5152
  %v5154 = vpop.f32.mrf.mxu0
  %v5155 = vadd.f32 %v4946, %v5154
  %v5156 = vpop.f32.mrf.mxu0
  %5157 = vmatprep.mubr.f32.mxu0 0.0
  %v5158 = vand.u32 %v4977, 4294901760
  %v5159 = vsub.f32 %v4977, %v5158
  %v5160 = vand.u32 %v5159, 4294901760
  %v5161 = vsub.f32 %v5159, %v5160
  %v5162 = vand.u32 %v5161, 4294901760
  %5163 = vmatmul.mubr.f32.gmra.mxu0 %v5162
  %v5164 = vpop.f32.mrf.mxu0
  %v5165 = vadd.f32 %v4946, %v5164
  %v5166 = vpop.f32.mrf.mxu0
  %5167 = vmatprep.mubr.f32.mxu0 0.0
  %v5168 = vand.u32 %v4980, 4294901760
  %v5169 = vsub.f32 %v4980, %v5168
  %v5170 = vand.u32 %v5169, 4294901760
  %v5171 = vsub.f32 %v5169, %v5170
  %v5172 = vand.u32 %v5171, 4294901760
  %5173 = vmatmul.mubr.f32.gmra.mxu0 %v5172
  %v5174 = vpop.f32.mrf.mxu0
  %v5175 = vadd.f32 %v4946, %v5174
  %v5176 = vpop.f32.mrf.mxu0
  %5177 = vmatprep.mubr.f32.mxu0 0.0
  %v5178 = vand.u32 %v4983, 4294901760
  %v5179 = vsub.f32 %v4983, %v5178
  %v5180 = vand.u32 %v5179, 4294901760
  %v5181 = vsub.f32 %v5179, %v5180
  %v5182 = vand.u32 %v5181, 4294901760
  %5183 = vmatmul.mubr.f32.gmra.mxu0 %v5182
  %v5184 = vpop.f32.mrf.mxu0
  %v5185 = vadd.f32 %v4946, %v5184
  %v5186 = vpop.f32.mrf.mxu0
  %5187 = vmatprep.mubr.f32.mxu0 0.0
  %v5188 = vand.u32 %v4986, 4294901760
  %v5189 = vsub.f32 %v4986, %v5188
  %v5190 = vand.u32 %v5189, 4294901760
  %v5191 = vsub.f32 %v5189, %v5190
  %v5192 = vand.u32 %v5191, 4294901760
  %5193 = vmatmul.mubr.f32.gmra.mxu0 %v5192
  %v5194 = vpop.f32.mrf.mxu0
  %v5195 = vadd.f32 %v4946, %v5194
  %v5196 = vpop.f32.mrf.mxu0
  %5197 = vmatprep.mubr.f32.mxu0 0.0
  %v5198 = vand.u32 %v4989, 4294901760
  %v5199 = vsub.f32 %v4989, %v5198
  %v5200 = vand.u32 %v5199, 4294901760
  %v5201 = vsub.f32 %v5199, %v5200
  %v5202 = vand.u32 %v5201, 4294901760
  %5203 = vmatmul.mubr.f32.gmra.mxu0 %v5202
  %v5204 = vpop.f32.mrf.mxu0
  %v5205 = vadd.f32 %v4946, %v5204
  %v5206 = vpop.f32.mrf.mxu0
  %5207 = vmatprep.mubr.f32.mxu0 0.0
  %v5208 = vand.u32 %v4992, 4294901760
  %v5209 = vsub.f32 %v4992, %v5208
  %v5210 = vand.u32 %v5209, 4294901760
  %v5211 = vsub.f32 %v5209, %v5210
  %v5212 = vand.u32 %v5211, 4294901760
  %5213 = vmatmul.mubr.f32.gmra.mxu0 %v5212
  %v5214 = vpop.f32.mrf.mxu0
  %v5215 = vadd.f32 %v4946, %v5214
  %v5216 = vpop.f32.mrf.mxu0
  %5217 = vmatprep.mubr.f32.mxu0 0.0
  %v5218 = vand.u32 %v4995, 4294901760
  %v5219 = vsub.f32 %v4995, %v5218
  %v5220 = vand.u32 %v5219, 4294901760
  %v5221 = vsub.f32 %v5219, %v5220
  %v5222 = vand.u32 %v5221, 4294901760
  %5223 = vmatmul.mubr.f32.gmra.mxu0 %v5222
  %v5224 = vpop.f32.mrf.mxu0
  %v5225 = vadd.f32 %v4946, %v5224
  %v5226 = vpop.f32.mrf.mxu0
  %5227 = vdwg.mxu0
  %5228 = vmatprep.subr.mxu0 0.0
  %5229 = vmatpush1.msra.mxu0 0.0
  %5230 = vmatprep.subr.mxu0 0.0
  %5231 = vmatpush1.msra.mxu0 0.0
  %5232 = vmatprep.subr.mxu0 0.0
  %5233 = vmatpush1.msra.mxu0 0.0
  %5234 = vmatprep.subr.mxu0 0.0
  %5235 = vmatpush1.msra.mxu0 0.0
  %5236 = vmatprep.subr.mxu0 0.0
  %5237 = vmatpush1.msra.mxu0 0.0
  %5238 = vmatprep.subr.mxu0 0.0
  %5239 = vmatpush1.msra.mxu0 0.0
  %5240 = vmatprep.subr.mxu0 0.0
  %5241 = vmatpush1.msra.mxu0 0.0
  %5242 = vmatprep.subr.mxu0 0.0
  %5243 = vmatpush1.msra.mxu0 0.0
  %5244 = vmatprep.subr.mxu0 0.0
  %5245 = vmatpush1.msra.mxu0 0.0
  %5246 = vmatprep.subr.mxu0 0.0
  %5247 = vmatpush1.msra.mxu0 0.0
  %5248 = vmatprep.subr.mxu0 0.0
  %5249 = vmatpush1.msra.mxu0 0.0
  %5250 = vmatprep.subr.mxu0 0.0
  %5251 = vmatpush1.msra.mxu0 0.0
  %5252 = vmatprep.subr.mxu0 0.0
  %5253 = vmatpush1.msra.mxu0 0.0
  %5254 = vmatprep.subr.mxu0 0.0
  %5255 = vmatpush1.msra.mxu0 0.0
  %5256 = vmatprep.subr.mxu0 0.0
  %v5257 = vand.u32 %v4999, 4294901760
  %v5258 = vsub.f32 %v4999, %v5257
  %v5259 = vand.u32 %v5258, 4294901760
  %v5260 = vsub.f32 %v5258, %v5259
  %v5261 = vand.u32 %v5260, 4294901760
  %5262 = vmatpush1.msra.mxu0 %v5261
  %5263 = vmatprep.subr.mxu0 0.0
  %v5264 = vand.u32 %v4939, 4294901760
  %v5265 = vsub.f32 %v4939, %v5264
  %v5266 = vand.u32 %v5265, 4294901760
  %v5267 = vsub.f32 %v5265, %v5266
  %v5268 = vand.u32 %v5267, 4294901760
  %5269 = vmatpush1.msra.mxu0 %v5268
  %5270 = vmatprep.subr.mxu0 0.0
  %5271 = vmatpush2.msra.mxu0 0.0
  %5272 = vmatprep.subr.mxu0 0.0
  %5273 = vmatpush2.msra.mxu0 0.0
  %5274 = vmatprep.subr.mxu0 0.0
  %5275 = vmatpush2.msra.mxu0 0.0
  %5276 = vmatprep.subr.mxu0 0.0
  %5277 = vmatpush2.msra.mxu0 0.0
  %5278 = vmatprep.subr.mxu0 0.0
  %5279 = vmatpush2.msra.mxu0 0.0
  %5280 = vmatprep.subr.mxu0 0.0
  %5281 = vmatpush2.msra.mxu0 0.0
  %5282 = vmatprep.subr.mxu0 0.0
  %5283 = vmatpush2.msra.mxu0 0.0
  %5284 = vmatprep.subr.mxu0 0.0
  %5285 = vmatpush2.msra.mxu0 0.0
  %5286 = vmatprep.subr.mxu0 0.0
  %5287 = vmatpush2.msra.mxu0 0.0
  %5288 = vmatprep.subr.mxu0 0.0
  %5289 = vmatpush2.msra.mxu0 0.0
  %5290 = vmatprep.subr.mxu0 0.0
  %5291 = vmatpush2.msra.mxu0 0.0
  %5292 = vmatprep.subr.mxu0 0.0
  %5293 = vmatpush2.msra.mxu0 0.0
  %5294 = vmatprep.subr.mxu0 0.0
  %5295 = vmatpush2.msra.mxu0 0.0
  %5296 = vmatprep.subr.mxu0 0.0
  %5297 = vmatpush2.msra.mxu0 0.0
  %5298 = vmatprep.subr.mxu0 0.0
  %5299 = vmatpush2.msra.mxu0 0.0
  %5300 = vmatprep.subr.mxu0 0.0
  %5301 = vmatpush2.msra.mxu0 0.0
  %5302 = vmatprep.mubr.f32.mxu0 0.0
  %v5303 = vand.u32 %v4950, 4294901760
  %5304 = vmatmul.mubr.f32.gmra.mxu0 %v5303
  %v5305 = vpop.f32.mrf.mxu0
  %v5306 = vadd.f32 %v5075, %v5305
  %v5307 = vpop.f32.mrf.mxu0
  %5308 = vmatprep.mubr.f32.mxu0 0.0
  %v5309 = vand.u32 %v4953, 4294901760
  %5310 = vmatmul.mubr.f32.gmra.mxu0 %v5309
  %v5311 = vpop.f32.mrf.mxu0
  %v5312 = vadd.f32 %v5085, %v5311
  %v5313 = vpop.f32.mrf.mxu0
  %5314 = vmatprep.mubr.f32.mxu0 0.0
  %v5315 = vand.u32 %v4956, 4294901760
  %5316 = vmatmul.mubr.f32.gmra.mxu0 %v5315
  %v5317 = vpop.f32.mrf.mxu0
  %v5318 = vadd.f32 %v5095, %v5317
  %v5319 = vpop.f32.mrf.mxu0
  %5320 = vmatprep.mubr.f32.mxu0 0.0
  %v5321 = vand.u32 %v4959, 4294901760
  %5322 = vmatmul.mubr.f32.gmra.mxu0 %v5321
  %v5323 = vpop.f32.mrf.mxu0
  %v5324 = vadd.f32 %v5105, %v5323
  %v5325 = vpop.f32.mrf.mxu0
  %5326 = vmatprep.mubr.f32.mxu0 0.0
  %v5327 = vand.u32 %v4962, 4294901760
  %5328 = vmatmul.mubr.f32.gmra.mxu0 %v5327
  %v5329 = vpop.f32.mrf.mxu0
  %v5330 = vadd.f32 %v5115, %v5329
  %v5331 = vpop.f32.mrf.mxu0
  %5332 = vmatprep.mubr.f32.mxu0 0.0
  %v5333 = vand.u32 %v4965, 4294901760
  %5334 = vmatmul.mubr.f32.gmra.mxu0 %v5333
  %v5335 = vpop.f32.mrf.mxu0
  %v5336 = vadd.f32 %v5125, %v5335
  %v5337 = vpop.f32.mrf.mxu0
  %5338 = vmatprep.mubr.f32.mxu0 0.0
  %v5339 = vand.u32 %v4968, 4294901760
  %5340 = vmatmul.mubr.f32.gmra.mxu0 %v5339
  %v5341 = vpop.f32.mrf.mxu0
  %v5342 = vadd.f32 %v5135, %v5341
  %v5343 = vpop.f32.mrf.mxu0
  %5344 = vmatprep.mubr.f32.mxu0 0.0
  %v5345 = vand.u32 %v4971, 4294901760
  %5346 = vmatmul.mubr.f32.gmra.mxu0 %v5345
  %v5347 = vpop.f32.mrf.mxu0
  %v5348 = vadd.f32 %v5145, %v5347
  %v5349 = vpop.f32.mrf.mxu0
  %5350 = vmatprep.mubr.f32.mxu0 0.0
  %v5351 = vand.u32 %v4974, 4294901760
  %5352 = vmatmul.mubr.f32.gmra.mxu0 %v5351
  %v5353 = vpop.f32.mrf.mxu0
  %v5354 = vadd.f32 %v5155, %v5353
  %v5355 = vpop.f32.mrf.mxu0
  %5356 = vmatprep.mubr.f32.mxu0 0.0
  %v5357 = vand.u32 %v4977, 4294901760
  %5358 = vmatmul.mubr.f32.gmra.mxu0 %v5357
  %v5359 = vpop.f32.mrf.mxu0
  %v5360 = vadd.f32 %v5165, %v5359
  %v5361 = vpop.f32.mrf.mxu0
  %5362 = vmatprep.mubr.f32.mxu0 0.0
  %v5363 = vand.u32 %v4980, 4294901760
  %5364 = vmatmul.mubr.f32.gmra.mxu0 %v5363
  %v5365 = vpop.f32.mrf.mxu0
  %v5366 = vadd.f32 %v5175, %v5365
  %v5367 = vpop.f32.mrf.mxu0
  %5368 = vmatprep.mubr.f32.mxu0 0.0
  %v5369 = vand.u32 %v4983, 4294901760
  %5370 = vmatmul.mubr.f32.gmra.mxu0 %v5369
  %v5371 = vpop.f32.mrf.mxu0
  %v5372 = vadd.f32 %v5185, %v5371
  %v5373 = vpop.f32.mrf.mxu0
  %5374 = vmatprep.mubr.f32.mxu0 0.0
  %v5375 = vand.u32 %v4986, 4294901760
  %5376 = vmatmul.mubr.f32.gmra.mxu0 %v5375
  %v5377 = vpop.f32.mrf.mxu0
  %v5378 = vadd.f32 %v5195, %v5377
  %v5379 = vpop.f32.mrf.mxu0
  %5380 = vmatprep.mubr.f32.mxu0 0.0
  %v5381 = vand.u32 %v4989, 4294901760
  %5382 = vmatmul.mubr.f32.gmra.mxu0 %v5381
  %v5383 = vpop.f32.mrf.mxu0
  %v5384 = vadd.f32 %v5205, %v5383
  %v5385 = vpop.f32.mrf.mxu0
  %5386 = vmatprep.mubr.f32.mxu0 0.0
  %v5387 = vand.u32 %v4992, 4294901760
  %5388 = vmatmul.mubr.f32.gmra.mxu0 %v5387
  %v5389 = vpop.f32.mrf.mxu0
  %v5390 = vadd.f32 %v5215, %v5389
  %v5391 = vpop.f32.mrf.mxu0
  %5392 = vmatprep.mubr.f32.mxu0 0.0
  %v5393 = vand.u32 %v4995, 4294901760
  %5394 = vmatmul.mubr.f32.gmra.mxu0 %v5393
  %v5395 = vpop.f32.mrf.mxu0
  %v5396 = vadd.f32 %v5225, %v5395
  %v5397 = vpop.f32.mrf.mxu0
  %5398 = vdwg.mxu0
  %5399 = vmatprep.subr.mxu0 0.0
  %5400 = vmatpush1.msra.mxu0 0.0
  %5401 = vmatprep.subr.mxu0 0.0
  %5402 = vmatpush1.msra.mxu0 0.0
  %5403 = vmatprep.subr.mxu0 0.0
  %5404 = vmatpush1.msra.mxu0 0.0
  %5405 = vmatprep.subr.mxu0 0.0
  %5406 = vmatpush1.msra.mxu0 0.0
  %5407 = vmatprep.subr.mxu0 0.0
  %5408 = vmatpush1.msra.mxu0 0.0
  %5409 = vmatprep.subr.mxu0 0.0
  %5410 = vmatpush1.msra.mxu0 0.0
  %5411 = vmatprep.subr.mxu0 0.0
  %5412 = vmatpush1.msra.mxu0 0.0
  %5413 = vmatprep.subr.mxu0 0.0
  %5414 = vmatpush1.msra.mxu0 0.0
  %5415 = vmatprep.subr.mxu0 0.0
  %5416 = vmatpush1.msra.mxu0 0.0
  %5417 = vmatprep.subr.mxu0 0.0
  %5418 = vmatpush1.msra.mxu0 0.0
  %5419 = vmatprep.subr.mxu0 0.0
  %5420 = vmatpush1.msra.mxu0 0.0
  %5421 = vmatprep.subr.mxu0 0.0
  %5422 = vmatpush1.msra.mxu0 0.0
  %5423 = vmatprep.subr.mxu0 0.0
  %5424 = vmatpush1.msra.mxu0 0.0
  %5425 = vmatprep.subr.mxu0 0.0
  %5426 = vmatpush1.msra.mxu0 0.0
  %5427 = vmatprep.subr.mxu0 0.0
  %v5428 = vand.u32 %v4999, 4294901760
  %v5429 = vsub.f32 %v4999, %v5428
  %5430 = vmatpush1.msra.mxu0 %v5429
  %5431 = vmatprep.subr.mxu0 0.0
  %v5432 = vand.u32 %v4939, 4294901760
  %v5433 = vsub.f32 %v4939, %v5432
  %5434 = vmatpush1.msra.mxu0 %v5433
  %5435 = vmatprep.subr.mxu0 0.0
  %5436 = vmatpush2.msra.mxu0 0.0
  %5437 = vmatprep.subr.mxu0 0.0
  %5438 = vmatpush2.msra.mxu0 0.0
  %5439 = vmatprep.subr.mxu0 0.0
  %5440 = vmatpush2.msra.mxu0 0.0
  %5441 = vmatprep.subr.mxu0 0.0
  %5442 = vmatpush2.msra.mxu0 0.0
  %5443 = vmatprep.subr.mxu0 0.0
  %5444 = vmatpush2.msra.mxu0 0.0
  %5445 = vmatprep.subr.mxu0 0.0
  %5446 = vmatpush2.msra.mxu0 0.0
  %5447 = vmatprep.subr.mxu0 0.0
  %5448 = vmatpush2.msra.mxu0 0.0
  %5449 = vmatprep.subr.mxu0 0.0
  %5450 = vmatpush2.msra.mxu0 0.0
  %5451 = vmatprep.subr.mxu0 0.0
  %5452 = vmatpush2.msra.mxu0 0.0
  %5453 = vmatprep.subr.mxu0 0.0
  %5454 = vmatpush2.msra.mxu0 0.0
  %5455 = vmatprep.subr.mxu0 0.0
  %5456 = vmatpush2.msra.mxu0 0.0
  %5457 = vmatprep.subr.mxu0 0.0
  %5458 = vmatpush2.msra.mxu0 0.0
  %5459 = vmatprep.subr.mxu0 0.0
  %5460 = vmatpush2.msra.mxu0 0.0
  %5461 = vmatprep.subr.mxu0 0.0
  %5462 = vmatpush2.msra.mxu0 0.0
  %5463 = vmatprep.subr.mxu0 0.0
  %5464 = vmatpush2.msra.mxu0 0.0
  %5465 = vmatprep.subr.mxu0 0.0
  %5466 = vmatpush2.msra.mxu0 0.0
  %5467 = vmatprep.mubr.f32.mxu0 0.0
  %v5468 = vand.u32 %v4950, 4294901760
  %v5469 = vsub.f32 %v4950, %v5468
  %5470 = vmatmul.mubr.f32.gmra.mxu0 %v5469
  %v5471 = vpop.f32.mrf.mxu0
  %v5472 = vadd.f32 %v5306, %v5471
  %v5473 = vpop.f32.mrf.mxu0
  %5474 = vmatprep.mubr.f32.mxu0 0.0
  %v5475 = vand.u32 %v4953, 4294901760
  %v5476 = vsub.f32 %v4953, %v5475
  %5477 = vmatmul.mubr.f32.gmra.mxu0 %v5476
  %v5478 = vpop.f32.mrf.mxu0
  %v5479 = vadd.f32 %v5312, %v5478
  %v5480 = vpop.f32.mrf.mxu0
  %5481 = vmatprep.mubr.f32.mxu0 0.0
  %v5482 = vand.u32 %v4956, 4294901760
  %v5483 = vsub.f32 %v4956, %v5482
  %5484 = vmatmul.mubr.f32.gmra.mxu0 %v5483
  %v5485 = vpop.f32.mrf.mxu0
  %v5486 = vadd.f32 %v5318, %v5485
  %v5487 = vpop.f32.mrf.mxu0
  %5488 = vmatprep.mubr.f32.mxu0 0.0
  %v5489 = vand.u32 %v4959, 4294901760
  %v5490 = vsub.f32 %v4959, %v5489
  %5491 = vmatmul.mubr.f32.gmra.mxu0 %v5490
  %v5492 = vpop.f32.mrf.mxu0
  %v5493 = vadd.f32 %v5324, %v5492
  %v5494 = vpop.f32.mrf.mxu0
  %5495 = vmatprep.mubr.f32.mxu0 0.0
  %v5496 = vand.u32 %v4962, 4294901760
  %v5497 = vsub.f32 %v4962, %v5496
  %5498 = vmatmul.mubr.f32.gmra.mxu0 %v5497
  %v5499 = vpop.f32.mrf.mxu0
  %v5500 = vadd.f32 %v5330, %v5499
  %v5501 = vpop.f32.mrf.mxu0
  %5502 = vmatprep.mubr.f32.mxu0 0.0
  %v5503 = vand.u32 %v4965, 4294901760
  %v5504 = vsub.f32 %v4965, %v5503
  %5505 = vmatmul.mubr.f32.gmra.mxu0 %v5504
  %v5506 = vpop.f32.mrf.mxu0
  %v5507 = vadd.f32 %v5336, %v5506
  %v5508 = vpop.f32.mrf.mxu0
  %5509 = vmatprep.mubr.f32.mxu0 0.0
  %v5510 = vand.u32 %v4968, 4294901760
  %v5511 = vsub.f32 %v4968, %v5510
  %5512 = vmatmul.mubr.f32.gmra.mxu0 %v5511
  %v5513 = vpop.f32.mrf.mxu0
  %v5514 = vadd.f32 %v5342, %v5513
  %v5515 = vpop.f32.mrf.mxu0
  %5516 = vmatprep.mubr.f32.mxu0 0.0
  %v5517 = vand.u32 %v4971, 4294901760
  %v5518 = vsub.f32 %v4971, %v5517
  %5519 = vmatmul.mubr.f32.gmra.mxu0 %v5518
  %v5520 = vpop.f32.mrf.mxu0
  %v5521 = vadd.f32 %v5348, %v5520
  %v5522 = vpop.f32.mrf.mxu0
  %5523 = vmatprep.mubr.f32.mxu0 0.0
  %v5524 = vand.u32 %v4974, 4294901760
  %v5525 = vsub.f32 %v4974, %v5524
  %5526 = vmatmul.mubr.f32.gmra.mxu0 %v5525
  %v5527 = vpop.f32.mrf.mxu0
  %v5528 = vadd.f32 %v5354, %v5527
  %v5529 = vpop.f32.mrf.mxu0
  %5530 = vmatprep.mubr.f32.mxu0 0.0
  %v5531 = vand.u32 %v4977, 4294901760
  %v5532 = vsub.f32 %v4977, %v5531
  %5533 = vmatmul.mubr.f32.gmra.mxu0 %v5532
  %v5534 = vpop.f32.mrf.mxu0
  %v5535 = vadd.f32 %v5360, %v5534
  %v5536 = vpop.f32.mrf.mxu0
  %5537 = vmatprep.mubr.f32.mxu0 0.0
  %v5538 = vand.u32 %v4980, 4294901760
  %v5539 = vsub.f32 %v4980, %v5538
  %5540 = vmatmul.mubr.f32.gmra.mxu0 %v5539
  %v5541 = vpop.f32.mrf.mxu0
  %v5542 = vadd.f32 %v5366, %v5541
  %v5543 = vpop.f32.mrf.mxu0
  %5544 = vmatprep.mubr.f32.mxu0 0.0
  %v5545 = vand.u32 %v4983, 4294901760
  %v5546 = vsub.f32 %v4983, %v5545
  %5547 = vmatmul.mubr.f32.gmra.mxu0 %v5546
  %v5548 = vpop.f32.mrf.mxu0
  %v5549 = vadd.f32 %v5372, %v5548
  %v5550 = vpop.f32.mrf.mxu0
  %5551 = vmatprep.mubr.f32.mxu0 0.0
  %v5552 = vand.u32 %v4986, 4294901760
  %v5553 = vsub.f32 %v4986, %v5552
  %5554 = vmatmul.mubr.f32.gmra.mxu0 %v5553
  %v5555 = vpop.f32.mrf.mxu0
  %v5556 = vadd.f32 %v5378, %v5555
  %v5557 = vpop.f32.mrf.mxu0
  %5558 = vmatprep.mubr.f32.mxu0 0.0
  %v5559 = vand.u32 %v4989, 4294901760
  %v5560 = vsub.f32 %v4989, %v5559
  %5561 = vmatmul.mubr.f32.gmra.mxu0 %v5560
  %v5562 = vpop.f32.mrf.mxu0
  %v5563 = vadd.f32 %v5384, %v5562
  %v5564 = vpop.f32.mrf.mxu0
  %5565 = vmatprep.mubr.f32.mxu0 0.0
  %v5566 = vand.u32 %v4992, 4294901760
  %v5567 = vsub.f32 %v4992, %v5566
  %5568 = vmatmul.mubr.f32.gmra.mxu0 %v5567
  %v5569 = vpop.f32.mrf.mxu0
  %v5570 = vadd.f32 %v5390, %v5569
  %v5571 = vpop.f32.mrf.mxu0
  %5572 = vmatprep.mubr.f32.mxu0 0.0
  %v5573 = vand.u32 %v4995, 4294901760
  %v5574 = vsub.f32 %v4995, %v5573
  %5575 = vmatmul.mubr.f32.gmra.mxu0 %v5574
  %v5576 = vpop.f32.mrf.mxu0
  %v5577 = vadd.f32 %v5396, %v5576
  %v5578 = vpop.f32.mrf.mxu0
  %5579 = vdwg.mxu0
  %5580 = vmatprep.subr.mxu0 0.0
  %5581 = vmatpush1.msra.mxu0 0.0
  %5582 = vmatprep.subr.mxu0 0.0
  %5583 = vmatpush1.msra.mxu0 0.0
  %5584 = vmatprep.subr.mxu0 0.0
  %5585 = vmatpush1.msra.mxu0 0.0
  %5586 = vmatprep.subr.mxu0 0.0
  %5587 = vmatpush1.msra.mxu0 0.0
  %5588 = vmatprep.subr.mxu0 0.0
  %5589 = vmatpush1.msra.mxu0 0.0
  %5590 = vmatprep.subr.mxu0 0.0
  %5591 = vmatpush1.msra.mxu0 0.0
  %5592 = vmatprep.subr.mxu0 0.0
  %5593 = vmatpush1.msra.mxu0 0.0
  %5594 = vmatprep.subr.mxu0 0.0
  %5595 = vmatpush1.msra.mxu0 0.0
  %5596 = vmatprep.subr.mxu0 0.0
  %5597 = vmatpush1.msra.mxu0 0.0
  %5598 = vmatprep.subr.mxu0 0.0
  %5599 = vmatpush1.msra.mxu0 0.0
  %5600 = vmatprep.subr.mxu0 0.0
  %5601 = vmatpush1.msra.mxu0 0.0
  %5602 = vmatprep.subr.mxu0 0.0
  %5603 = vmatpush1.msra.mxu0 0.0
  %5604 = vmatprep.subr.mxu0 0.0
  %5605 = vmatpush1.msra.mxu0 0.0
  %5606 = vmatprep.subr.mxu0 0.0
  %5607 = vmatpush1.msra.mxu0 0.0
  %5608 = vmatprep.subr.mxu0 0.0
  %v5609 = vand.u32 %v4999, 4294901760
  %5610 = vmatpush1.msra.mxu0 %v5609
  %5611 = vmatprep.subr.mxu0 0.0
  %v5612 = vand.u32 %v4939, 4294901760
  %5613 = vmatpush1.msra.mxu0 %v5612
  %5614 = vmatprep.subr.mxu0 0.0
  %5615 = vmatpush2.msra.mxu0 0.0
  %5616 = vmatprep.subr.mxu0 0.0
  %5617 = vmatpush2.msra.mxu0 0.0
  %5618 = vmatprep.subr.mxu0 0.0
  %5619 = vmatpush2.msra.mxu0 0.0
  %5620 = vmatprep.subr.mxu0 0.0
  %5621 = vmatpush2.msra.mxu0 0.0
  %5622 = vmatprep.subr.mxu0 0.0
  %5623 = vmatpush2.msra.mxu0 0.0
  %5624 = vmatprep.subr.mxu0 0.0
  %5625 = vmatpush2.msra.mxu0 0.0
  %5626 = vmatprep.subr.mxu0 0.0
  %5627 = vmatpush2.msra.mxu0 0.0
  %5628 = vmatprep.subr.mxu0 0.0
  %5629 = vmatpush2.msra.mxu0 0.0
  %5630 = vmatprep.subr.mxu0 0.0
  %5631 = vmatpush2.msra.mxu0 0.0
  %5632 = vmatprep.subr.mxu0 0.0
  %5633 = vmatpush2.msra.mxu0 0.0
  %5634 = vmatprep.subr.mxu0 0.0
  %5635 = vmatpush2.msra.mxu0 0.0
  %5636 = vmatprep.subr.mxu0 0.0
  %5637 = vmatpush2.msra.mxu0 0.0
  %5638 = vmatprep.subr.mxu0 0.0
  %5639 = vmatpush2.msra.mxu0 0.0
  %5640 = vmatprep.subr.mxu0 0.0
  %5641 = vmatpush2.msra.mxu0 0.0
  %5642 = vmatprep.subr.mxu0 0.0
  %5643 = vmatpush2.msra.mxu0 0.0
  %5644 = vmatprep.subr.mxu0 0.0
  %5645 = vmatpush2.msra.mxu0 0.0
  %5646 = vmatprep.mubr.f32.mxu0 0.0
  %v5647 = vand.u32 %v4950, 4294901760
  %v5648 = vsub.f32 %v4950, %v5647
  %v5649 = vand.u32 %v5648, 4294901760
  %5650 = vmatmul.mubr.f32.gmra.mxu0 %v5649
  %v5651 = vpop.f32.mrf.mxu0
  %v5652 = vadd.f32 %v5472, %v5651
  %v5653 = vpop.f32.mrf.mxu0
  %5654 = vmatprep.mubr.f32.mxu0 0.0
  %v5655 = vand.u32 %v4953, 4294901760
  %v5656 = vsub.f32 %v4953, %v5655
  %v5657 = vand.u32 %v5656, 4294901760
  %5658 = vmatmul.mubr.f32.gmra.mxu0 %v5657
  %v5659 = vpop.f32.mrf.mxu0
  %v5660 = vadd.f32 %v5479, %v5659
  %v5661 = vpop.f32.mrf.mxu0
  %5662 = vmatprep.mubr.f32.mxu0 0.0
  %v5663 = vand.u32 %v4956, 4294901760
  %v5664 = vsub.f32 %v4956, %v5663
  %v5665 = vand.u32 %v5664, 4294901760
  %5666 = vmatmul.mubr.f32.gmra.mxu0 %v5665
  %v5667 = vpop.f32.mrf.mxu0
  %v5668 = vadd.f32 %v5486, %v5667
  %v5669 = vpop.f32.mrf.mxu0
  %5670 = vmatprep.mubr.f32.mxu0 0.0
  %v5671 = vand.u32 %v4959, 4294901760
  %v5672 = vsub.f32 %v4959, %v5671
  %v5673 = vand.u32 %v5672, 4294901760
  %5674 = vmatmul.mubr.f32.gmra.mxu0 %v5673
  %v5675 = vpop.f32.mrf.mxu0
  %v5676 = vadd.f32 %v5493, %v5675
  %v5677 = vpop.f32.mrf.mxu0
  %5678 = vmatprep.mubr.f32.mxu0 0.0
  %v5679 = vand.u32 %v4962, 4294901760
  %v5680 = vsub.f32 %v4962, %v5679
  %v5681 = vand.u32 %v5680, 4294901760
  %5682 = vmatmul.mubr.f32.gmra.mxu0 %v5681
  %v5683 = vpop.f32.mrf.mxu0
  %v5684 = vadd.f32 %v5500, %v5683
  %v5685 = vpop.f32.mrf.mxu0
  %5686 = vmatprep.mubr.f32.mxu0 0.0
  %v5687 = vand.u32 %v4965, 4294901760
  %v5688 = vsub.f32 %v4965, %v5687
  %v5689 = vand.u32 %v5688, 4294901760
  %5690 = vmatmul.mubr.f32.gmra.mxu0 %v5689
  %v5691 = vpop.f32.mrf.mxu0
  %v5692 = vadd.f32 %v5507, %v5691
  %v5693 = vpop.f32.mrf.mxu0
  %5694 = vmatprep.mubr.f32.mxu0 0.0
  %v5695 = vand.u32 %v4968, 4294901760
  %v5696 = vsub.f32 %v4968, %v5695
  %v5697 = vand.u32 %v5696, 4294901760
  %5698 = vmatmul.mubr.f32.gmra.mxu0 %v5697
  %v5699 = vpop.f32.mrf.mxu0
  %v5700 = vadd.f32 %v5514, %v5699
  %v5701 = vpop.f32.mrf.mxu0
  %5702 = vmatprep.mubr.f32.mxu0 0.0
  %v5703 = vand.u32 %v4971, 4294901760
  %v5704 = vsub.f32 %v4971, %v5703
  %v5705 = vand.u32 %v5704, 4294901760
  %5706 = vmatmul.mubr.f32.gmra.mxu0 %v5705
  %v5707 = vpop.f32.mrf.mxu0
  %v5708 = vadd.f32 %v5521, %v5707
  %v5709 = vpop.f32.mrf.mxu0
  %5710 = vmatprep.mubr.f32.mxu0 0.0
  %v5711 = vand.u32 %v4974, 4294901760
  %v5712 = vsub.f32 %v4974, %v5711
  %v5713 = vand.u32 %v5712, 4294901760
  %5714 = vmatmul.mubr.f32.gmra.mxu0 %v5713
  %v5715 = vpop.f32.mrf.mxu0
  %v5716 = vadd.f32 %v5528, %v5715
  %v5717 = vpop.f32.mrf.mxu0
  %5718 = vmatprep.mubr.f32.mxu0 0.0
  %v5719 = vand.u32 %v4977, 4294901760
  %v5720 = vsub.f32 %v4977, %v5719
  %v5721 = vand.u32 %v5720, 4294901760
  %5722 = vmatmul.mubr.f32.gmra.mxu0 %v5721
  %v5723 = vpop.f32.mrf.mxu0
  %v5724 = vadd.f32 %v5535, %v5723
  %v5725 = vpop.f32.mrf.mxu0
  %5726 = vmatprep.mubr.f32.mxu0 0.0
  %v5727 = vand.u32 %v4980, 4294901760
  %v5728 = vsub.f32 %v4980, %v5727
  %v5729 = vand.u32 %v5728, 4294901760
  %5730 = vmatmul.mubr.f32.gmra.mxu0 %v5729
  %v5731 = vpop.f32.mrf.mxu0
  %v5732 = vadd.f32 %v5542, %v5731
  %v5733 = vpop.f32.mrf.mxu0
  %5734 = vmatprep.mubr.f32.mxu0 0.0
  %v5735 = vand.u32 %v4983, 4294901760
  %v5736 = vsub.f32 %v4983, %v5735
  %v5737 = vand.u32 %v5736, 4294901760
  %5738 = vmatmul.mubr.f32.gmra.mxu0 %v5737
  %v5739 = vpop.f32.mrf.mxu0
  %v5740 = vadd.f32 %v5549, %v5739
  %v5741 = vpop.f32.mrf.mxu0
  %5742 = vmatprep.mubr.f32.mxu0 0.0
  %v5743 = vand.u32 %v4986, 4294901760
  %v5744 = vsub.f32 %v4986, %v5743
  %v5745 = vand.u32 %v5744, 4294901760
  %5746 = vmatmul.mubr.f32.gmra.mxu0 %v5745
  %v5747 = vpop.f32.mrf.mxu0
  %v5748 = vadd.f32 %v5556, %v5747
  %v5749 = vpop.f32.mrf.mxu0
  %5750 = vmatprep.mubr.f32.mxu0 0.0
  %v5751 = vand.u32 %v4989, 4294901760
  %v5752 = vsub.f32 %v4989, %v5751
  %v5753 = vand.u32 %v5752, 4294901760
  %5754 = vmatmul.mubr.f32.gmra.mxu0 %v5753
  %v5755 = vpop.f32.mrf.mxu0
  %v5756 = vadd.f32 %v5563, %v5755
  %v5757 = vpop.f32.mrf.mxu0
  %5758 = vmatprep.mubr.f32.mxu0 0.0
  %v5759 = vand.u32 %v4992, 4294901760
  %v5760 = vsub.f32 %v4992, %v5759
  %v5761 = vand.u32 %v5760, 4294901760
  %5762 = vmatmul.mubr.f32.gmra.mxu0 %v5761
  %v5763 = vpop.f32.mrf.mxu0
  %v5764 = vadd.f32 %v5570, %v5763
  %v5765 = vpop.f32.mrf.mxu0
  %5766 = vmatprep.mubr.f32.mxu0 0.0
  %v5767 = vand.u32 %v4995, 4294901760
  %v5768 = vsub.f32 %v4995, %v5767
  %v5769 = vand.u32 %v5768, 4294901760
  %5770 = vmatmul.mubr.f32.gmra.mxu0 %v5769
  %v5771 = vpop.f32.mrf.mxu0
  %v5772 = vadd.f32 %v5577, %v5771
  %v5773 = vpop.f32.mrf.mxu0
  %5774 = vdwg.mxu0
  %5775 = vmatprep.subr.mxu0 0.0
  %5776 = vmatpush1.msra.mxu0 0.0
  %5777 = vmatprep.subr.mxu0 0.0
  %5778 = vmatpush1.msra.mxu0 0.0
  %5779 = vmatprep.subr.mxu0 0.0
  %5780 = vmatpush1.msra.mxu0 0.0
  %5781 = vmatprep.subr.mxu0 0.0
  %5782 = vmatpush1.msra.mxu0 0.0
  %5783 = vmatprep.subr.mxu0 0.0
  %5784 = vmatpush1.msra.mxu0 0.0
  %5785 = vmatprep.subr.mxu0 0.0
  %5786 = vmatpush1.msra.mxu0 0.0
  %5787 = vmatprep.subr.mxu0 0.0
  %5788 = vmatpush1.msra.mxu0 0.0
  %5789 = vmatprep.subr.mxu0 0.0
  %5790 = vmatpush1.msra.mxu0 0.0
  %5791 = vmatprep.subr.mxu0 0.0
  %5792 = vmatpush1.msra.mxu0 0.0
  %5793 = vmatprep.subr.mxu0 0.0
  %5794 = vmatpush1.msra.mxu0 0.0
  %5795 = vmatprep.subr.mxu0 0.0
  %5796 = vmatpush1.msra.mxu0 0.0
  %5797 = vmatprep.subr.mxu0 0.0
  %5798 = vmatpush1.msra.mxu0 0.0
  %5799 = vmatprep.subr.mxu0 0.0
  %5800 = vmatpush1.msra.mxu0 0.0
  %5801 = vmatprep.subr.mxu0 0.0
  %5802 = vmatpush1.msra.mxu0 0.0
  %5803 = vmatprep.subr.mxu0 0.0
  %v5804 = vand.u32 %v4999, 4294901760
  %v5805 = vsub.f32 %v4999, %v5804
  %v5806 = vand.u32 %v5805, 4294901760
  %5807 = vmatpush1.msra.mxu0 %v5806
  %5808 = vmatprep.subr.mxu0 0.0
  %v5809 = vand.u32 %v4939, 4294901760
  %v5810 = vsub.f32 %v4939, %v5809
  %v5811 = vand.u32 %v5810, 4294901760
  %5812 = vmatpush1.msra.mxu0 %v5811
  %5813 = vmatprep.subr.mxu0 0.0
  %5814 = vmatpush2.msra.mxu0 0.0
  %5815 = vmatprep.subr.mxu0 0.0
  %5816 = vmatpush2.msra.mxu0 0.0
  %5817 = vmatprep.subr.mxu0 0.0
  %5818 = vmatpush2.msra.mxu0 0.0
  %5819 = vmatprep.subr.mxu0 0.0
  %5820 = vmatpush2.msra.mxu0 0.0
  %5821 = vmatprep.subr.mxu0 0.0
  %5822 = vmatpush2.msra.mxu0 0.0
  %5823 = vmatprep.subr.mxu0 0.0
  %5824 = vmatpush2.msra.mxu0 0.0
  %5825 = vmatprep.subr.mxu0 0.0
  %5826 = vmatpush2.msra.mxu0 0.0
  %5827 = vmatprep.subr.mxu0 0.0
  %5828 = vmatpush2.msra.mxu0 0.0
  %5829 = vmatprep.subr.mxu0 0.0
  %5830 = vmatpush2.msra.mxu0 0.0
  %5831 = vmatprep.subr.mxu0 0.0
  %5832 = vmatpush2.msra.mxu0 0.0
  %5833 = vmatprep.subr.mxu0 0.0
  %5834 = vmatpush2.msra.mxu0 0.0
  %5835 = vmatprep.subr.mxu0 0.0
  %5836 = vmatpush2.msra.mxu0 0.0
  %5837 = vmatprep.subr.mxu0 0.0
  %5838 = vmatpush2.msra.mxu0 0.0
  %5839 = vmatprep.subr.mxu0 0.0
  %5840 = vmatpush2.msra.mxu0 0.0
  %5841 = vmatprep.subr.mxu0 0.0
  %5842 = vmatpush2.msra.mxu0 0.0
  %5843 = vmatprep.subr.mxu0 0.0
  %5844 = vmatpush2.msra.mxu0 0.0
  %5845 = vmatprep.mubr.f32.mxu0 0.0
  %v5846 = vand.u32 %v4950, 4294901760
  %5847 = vmatmul.mubr.f32.gmra.mxu0 %v5846
  %v5848 = vpop.f32.mrf.mxu0
  %v5849 = vadd.f32 %v5652, %v5848
  %v5850 = vpop.f32.mrf.mxu0
  %5851 = vmatprep.mubr.f32.mxu0 0.0
  %v5852 = vand.u32 %v4953, 4294901760
  %5853 = vmatmul.mubr.f32.gmra.mxu0 %v5852
  %v5854 = vpop.f32.mrf.mxu0
  %v5855 = vadd.f32 %v5660, %v5854
  %v5856 = vpop.f32.mrf.mxu0
  %5857 = vmatprep.mubr.f32.mxu0 0.0
  %v5858 = vand.u32 %v4956, 4294901760
  %5859 = vmatmul.mubr.f32.gmra.mxu0 %v5858
  %v5860 = vpop.f32.mrf.mxu0
  %v5861 = vadd.f32 %v5668, %v5860
  %v5862 = vpop.f32.mrf.mxu0
  %5863 = vmatprep.mubr.f32.mxu0 0.0
  %v5864 = vand.u32 %v4959, 4294901760
  %5865 = vmatmul.mubr.f32.gmra.mxu0 %v5864
  %v5866 = vpop.f32.mrf.mxu0
  %v5867 = vadd.f32 %v5676, %v5866
  %v5868 = vpop.f32.mrf.mxu0
  %5869 = vmatprep.mubr.f32.mxu0 0.0
  %v5870 = vand.u32 %v4962, 4294901760
  %5871 = vmatmul.mubr.f32.gmra.mxu0 %v5870
  %v5872 = vpop.f32.mrf.mxu0
  %v5873 = vadd.f32 %v5684, %v5872
  %v5874 = vpop.f32.mrf.mxu0
  %5875 = vmatprep.mubr.f32.mxu0 0.0
  %v5876 = vand.u32 %v4965, 4294901760
  %5877 = vmatmul.mubr.f32.gmra.mxu0 %v5876
  %v5878 = vpop.f32.mrf.mxu0
  %v5879 = vadd.f32 %v5692, %v5878
  %v5880 = vpop.f32.mrf.mxu0
  %5881 = vmatprep.mubr.f32.mxu0 0.0
  %v5882 = vand.u32 %v4968, 4294901760
  %5883 = vmatmul.mubr.f32.gmra.mxu0 %v5882
  %v5884 = vpop.f32.mrf.mxu0
  %v5885 = vadd.f32 %v5700, %v5884
  %v5886 = vpop.f32.mrf.mxu0
  %5887 = vmatprep.mubr.f32.mxu0 0.0
  %v5888 = vand.u32 %v4971, 4294901760
  %5889 = vmatmul.mubr.f32.gmra.mxu0 %v5888
  %v5890 = vpop.f32.mrf.mxu0
  %v5891 = vadd.f32 %v5708, %v5890
  %v5892 = vpop.f32.mrf.mxu0
  %5893 = vmatprep.mubr.f32.mxu0 0.0
  %v5894 = vand.u32 %v4974, 4294901760
  %5895 = vmatmul.mubr.f32.gmra.mxu0 %v5894
  %v5896 = vpop.f32.mrf.mxu0
  %v5897 = vadd.f32 %v5716, %v5896
  %v5898 = vpop.f32.mrf.mxu0
  %5899 = vmatprep.mubr.f32.mxu0 0.0
  %v5900 = vand.u32 %v4977, 4294901760
  %5901 = vmatmul.mubr.f32.gmra.mxu0 %v5900
  %v5902 = vpop.f32.mrf.mxu0
  %v5903 = vadd.f32 %v5724, %v5902
  %v5904 = vpop.f32.mrf.mxu0
  %5905 = vmatprep.mubr.f32.mxu0 0.0
  %v5906 = vand.u32 %v4980, 4294901760
  %5907 = vmatmul.mubr.f32.gmra.mxu0 %v5906
  %v5908 = vpop.f32.mrf.mxu0
  %v5909 = vadd.f32 %v5732, %v5908
  %v5910 = vpop.f32.mrf.mxu0
  %5911 = vmatprep.mubr.f32.mxu0 0.0
  %v5912 = vand.u32 %v4983, 4294901760
  %5913 = vmatmul.mubr.f32.gmra.mxu0 %v5912
  %v5914 = vpop.f32.mrf.mxu0
  %v5915 = vadd.f32 %v5740, %v5914
  %v5916 = vpop.f32.mrf.mxu0
  %5917 = vmatprep.mubr.f32.mxu0 0.0
  %v5918 = vand.u32 %v4986, 4294901760
  %5919 = vmatmul.mubr.f32.gmra.mxu0 %v5918
  %v5920 = vpop.f32.mrf.mxu0
  %v5921 = vadd.f32 %v5748, %v5920
  %v5922 = vpop.f32.mrf.mxu0
  %5923 = vmatprep.mubr.f32.mxu0 0.0
  %v5924 = vand.u32 %v4989, 4294901760
  %5925 = vmatmul.mubr.f32.gmra.mxu0 %v5924
  %v5926 = vpop.f32.mrf.mxu0
  %v5927 = vadd.f32 %v5756, %v5926
  %v5928 = vpop.f32.mrf.mxu0
  %5929 = vmatprep.mubr.f32.mxu0 0.0
  %v5930 = vand.u32 %v4992, 4294901760
  %5931 = vmatmul.mubr.f32.gmra.mxu0 %v5930
  %v5932 = vpop.f32.mrf.mxu0
  %v5933 = vadd.f32 %v5764, %v5932
  %v5934 = vpop.f32.mrf.mxu0
  %5935 = vmatprep.mubr.f32.mxu0 0.0
  %v5936 = vand.u32 %v4995, 4294901760
  %5937 = vmatmul.mubr.f32.gmra.mxu0 %v5936
  %v5938 = vpop.f32.mrf.mxu0
  %v5939 = vadd.f32 %v5772, %v5938
  %v5940 = vpop.f32.mrf.mxu0
  %5941 = vdwg.mxu0
  %5942 = vmatprep.subr.mxu0 0.0
  %5943 = vmatpush1.msra.mxu0 0.0
  %5944 = vmatprep.subr.mxu0 0.0
  %5945 = vmatpush1.msra.mxu0 0.0
  %5946 = vmatprep.subr.mxu0 0.0
  %5947 = vmatpush1.msra.mxu0 0.0
  %5948 = vmatprep.subr.mxu0 0.0
  %5949 = vmatpush1.msra.mxu0 0.0
  %5950 = vmatprep.subr.mxu0 0.0
  %5951 = vmatpush1.msra.mxu0 0.0
  %5952 = vmatprep.subr.mxu0 0.0
  %5953 = vmatpush1.msra.mxu0 0.0
  %5954 = vmatprep.subr.mxu0 0.0
  %5955 = vmatpush1.msra.mxu0 0.0
  %5956 = vmatprep.subr.mxu0 0.0
  %5957 = vmatpush1.msra.mxu0 0.0
  %5958 = vmatprep.subr.mxu0 0.0
  %5959 = vmatpush1.msra.mxu0 0.0
  %5960 = vmatprep.subr.mxu0 0.0
  %5961 = vmatpush1.msra.mxu0 0.0
  %5962 = vmatprep.subr.mxu0 0.0
  %5963 = vmatpush1.msra.mxu0 0.0
  %5964 = vmatprep.subr.mxu0 0.0
  %5965 = vmatpush1.msra.mxu0 0.0
  %5966 = vmatprep.subr.mxu0 0.0
  %5967 = vmatpush1.msra.mxu0 0.0
  %5968 = vmatprep.subr.mxu0 0.0
  %5969 = vmatpush1.msra.mxu0 0.0
  %5970 = vmatprep.subr.mxu0 0.0
  %v5971 = vand.u32 %v4999, 4294901760
  %5972 = vmatpush1.msra.mxu0 %v5971
  %5973 = vmatprep.subr.mxu0 0.0
  %v5974 = vand.u32 %v4939, 4294901760
  %5975 = vmatpush1.msra.mxu0 %v5974
  %5976 = vmatprep.subr.mxu0 0.0
  %5977 = vmatpush2.msra.mxu0 0.0
  %5978 = vmatprep.subr.mxu0 0.0
  %5979 = vmatpush2.msra.mxu0 0.0
  %5980 = vmatprep.subr.mxu0 0.0
  %5981 = vmatpush2.msra.mxu0 0.0
  %5982 = vmatprep.subr.mxu0 0.0
  %5983 = vmatpush2.msra.mxu0 0.0
  %5984 = vmatprep.subr.mxu0 0.0
  %5985 = vmatpush2.msra.mxu0 0.0
  %5986 = vmatprep.subr.mxu0 0.0
  %5987 = vmatpush2.msra.mxu0 0.0
  %5988 = vmatprep.subr.mxu0 0.0
  %5989 = vmatpush2.msra.mxu0 0.0
  %5990 = vmatprep.subr.mxu0 0.0
  %5991 = vmatpush2.msra.mxu0 0.0
  %5992 = vmatprep.subr.mxu0 0.0
  %5993 = vmatpush2.msra.mxu0 0.0
  %5994 = vmatprep.subr.mxu0 0.0
  %5995 = vmatpush2.msra.mxu0 0.0
  %5996 = vmatprep.subr.mxu0 0.0
  %5997 = vmatpush2.msra.mxu0 0.0
  %5998 = vmatprep.subr.mxu0 0.0
  %5999 = vmatpush2.msra.mxu0 0.0
  %6000 = vmatprep.subr.mxu0 0.0
  %6001 = vmatpush2.msra.mxu0 0.0
  %6002 = vmatprep.subr.mxu0 0.0
  %6003 = vmatpush2.msra.mxu0 0.0
  %6004 = vmatprep.subr.mxu0 0.0
  %6005 = vmatpush2.msra.mxu0 0.0
  %6006 = vmatprep.subr.mxu0 0.0
  %6007 = vmatpush2.msra.mxu0 0.0
  %6008 = vmatprep.mubr.f32.mxu0 0.0
  %v6009 = vand.u32 %v4950, 4294901760
  %6010 = vmatmul.mubr.f32.gmra.mxu0 %v6009
  %v6011 = vpop.f32.mrf.mxu0
  %v6012 = vadd.f32 %v5849, %v6011
  %v6013 = vpop.f32.mrf.mxu0
  %6014 = vmatprep.mubr.f32.mxu0 0.0
  %v6015 = vand.u32 %v4953, 4294901760
  %6016 = vmatmul.mubr.f32.gmra.mxu0 %v6015
  %v6017 = vpop.f32.mrf.mxu0
  %v6018 = vadd.f32 %v5855, %v6017
  %v6019 = vpop.f32.mrf.mxu0
  %6020 = vmatprep.mubr.f32.mxu0 0.0
  %v6021 = vand.u32 %v4956, 4294901760
  %6022 = vmatmul.mubr.f32.gmra.mxu0 %v6021
  %v6023 = vpop.f32.mrf.mxu0
  %v6024 = vadd.f32 %v5861, %v6023
  %v6025 = vpop.f32.mrf.mxu0
  %6026 = vmatprep.mubr.f32.mxu0 0.0
  %v6027 = vand.u32 %v4959, 4294901760
  %6028 = vmatmul.mubr.f32.gmra.mxu0 %v6027
  %v6029 = vpop.f32.mrf.mxu0
  %v6030 = vadd.f32 %v5867, %v6029
  %v6031 = vpop.f32.mrf.mxu0
  %6032 = vmatprep.mubr.f32.mxu0 0.0
  %v6033 = vand.u32 %v4962, 4294901760
  %6034 = vmatmul.mubr.f32.gmra.mxu0 %v6033
  %v6035 = vpop.f32.mrf.mxu0
  %v6036 = vadd.f32 %v5873, %v6035
  %v6037 = vpop.f32.mrf.mxu0
  %6038 = vmatprep.mubr.f32.mxu0 0.0
  %v6039 = vand.u32 %v4965, 4294901760
  %6040 = vmatmul.mubr.f32.gmra.mxu0 %v6039
  %v6041 = vpop.f32.mrf.mxu0
  %v6042 = vadd.f32 %v5879, %v6041
  %v6043 = vpop.f32.mrf.mxu0
  %6044 = vmatprep.mubr.f32.mxu0 0.0
  %v6045 = vand.u32 %v4968, 4294901760
  %6046 = vmatmul.mubr.f32.gmra.mxu0 %v6045
  %v6047 = vpop.f32.mrf.mxu0
  %v6048 = vadd.f32 %v5885, %v6047
  %v6049 = vpop.f32.mrf.mxu0
  %6050 = vmatprep.mubr.f32.mxu0 0.0
  %v6051 = vand.u32 %v4971, 4294901760
  %6052 = vmatmul.mubr.f32.gmra.mxu0 %v6051
  %v6053 = vpop.f32.mrf.mxu0
  %v6054 = vadd.f32 %v5891, %v6053
  %v6055 = vpop.f32.mrf.mxu0
  %6056 = vmatprep.mubr.f32.mxu0 0.0
  %v6057 = vand.u32 %v4974, 4294901760
  %6058 = vmatmul.mubr.f32.gmra.mxu0 %v6057
  %v6059 = vpop.f32.mrf.mxu0
  %v6060 = vadd.f32 %v5897, %v6059
  %v6061 = vpop.f32.mrf.mxu0
  %6062 = vmatprep.mubr.f32.mxu0 0.0
  %v6063 = vand.u32 %v4977, 4294901760
  %6064 = vmatmul.mubr.f32.gmra.mxu0 %v6063
  %v6065 = vpop.f32.mrf.mxu0
  %v6066 = vadd.f32 %v5903, %v6065
  %v6067 = vpop.f32.mrf.mxu0
  %6068 = vmatprep.mubr.f32.mxu0 0.0
  %v6069 = vand.u32 %v4980, 4294901760
  %6070 = vmatmul.mubr.f32.gmra.mxu0 %v6069
  %v6071 = vpop.f32.mrf.mxu0
  %v6072 = vadd.f32 %v5909, %v6071
  %v6073 = vpop.f32.mrf.mxu0
  %6074 = vmatprep.mubr.f32.mxu0 0.0
  %v6075 = vand.u32 %v4983, 4294901760
  %6076 = vmatmul.mubr.f32.gmra.mxu0 %v6075
  %v6077 = vpop.f32.mrf.mxu0
  %v6078 = vadd.f32 %v5915, %v6077
  %v6079 = vpop.f32.mrf.mxu0
  %6080 = vmatprep.mubr.f32.mxu0 0.0
  %v6081 = vand.u32 %v4986, 4294901760
  %6082 = vmatmul.mubr.f32.gmra.mxu0 %v6081
  %v6083 = vpop.f32.mrf.mxu0
  %v6084 = vadd.f32 %v5921, %v6083
  %v6085 = vpop.f32.mrf.mxu0
  %6086 = vmatprep.mubr.f32.mxu0 0.0
  %v6087 = vand.u32 %v4989, 4294901760
  %6088 = vmatmul.mubr.f32.gmra.mxu0 %v6087
  %v6089 = vpop.f32.mrf.mxu0
  %v6090 = vadd.f32 %v5927, %v6089
  %v6091 = vpop.f32.mrf.mxu0
  %6092 = vmatprep.mubr.f32.mxu0 0.0
  %v6093 = vand.u32 %v4992, 4294901760
  %6094 = vmatmul.mubr.f32.gmra.mxu0 %v6093
  %v6095 = vpop.f32.mrf.mxu0
  %v6096 = vadd.f32 %v5933, %v6095
  %v6097 = vpop.f32.mrf.mxu0
  %6098 = vmatprep.mubr.f32.mxu0 0.0
  %v6099 = vand.u32 %v4995, 4294901760
  %6100 = vmatmul.mubr.f32.gmra.mxu0 %v6099
  %v6101 = vpop.f32.mrf.mxu0
  %v6102 = vadd.f32 %v5939, %v6101
  %v6103 = vpop.f32.mrf.mxu0
  %6104 = vdwg.mxu0
  %vm6105 = vcmask 15360
  %6106 = vst.msk [vmem:[%s9] sm:$0xff] %vm6105, %v6012
  %6107 = vst.msk [vmem:[%s9 + $0x8] sm:$0xff] %vm6105, %v6018
  %6108 = vst.msk [vmem:[%s9 + $0x10] sm:$0xff] %vm6105, %v6024
  %6109 = vst.msk [vmem:[%s9 + $0x18] sm:$0xff] %vm6105, %v6030
  %6110 = vst.msk [vmem:[%s9 + $0x20] sm:$0xff] %vm6105, %v6036
  %6111 = vst.msk [vmem:[%s9 + $0x28] sm:$0xff] %vm6105, %v6042
  %6112 = vst.msk [vmem:[%s9 + $0x30] sm:$0xff] %vm6105, %v6048
  %6113 = vst.msk [vmem:[%s9 + $0x38] sm:$0xff] %vm6105, %v6054
  %6114 = vst.msk [vmem:[%s9 + $0x40] sm:$0xff] %vm6105, %v6060
  %6115 = vst.msk [vmem:[%s9 + $0x48] sm:$0xff] %vm6105, %v6066
  %6116 = vst.msk [vmem:[%s9 + $0x50] sm:$0xff] %vm6105, %v6072
  %6117 = vst.msk [vmem:[%s9 + $0x58] sm:$0xff] %vm6105, %v6078
  %6118 = vst.msk [vmem:[%s9 + $0x60] sm:$0xff] %vm6105, %v6084
  %6119 = vst.msk [vmem:[%s9 + $0x68] sm:$0xff] %vm6105, %v6090
  %6120 = vst.msk [vmem:[%s9 + $0x70] sm:$0xff] %vm6105, %v6096
  %6121 = vst.msk [vmem:[%s9 + $0x78] sm:$0xff] %vm6105, %v6102
  // Predicated region
  $region38: #{tpu_custom_call.1} parent=0 // pred_check
    _
  $region39: #{tpu_custom_call.1} parent=0 // pred_check_branch
    %6123 = sbr.rel (0) target = $region41
  $region40: #{tpu_custom_call.1} parent=0 // pred_region
    _
  $region41: #{tpu_custom_call.1} parent=0 // pred_fallthru
    _
  // Predicated region
  $region42: #{tpu_custom_call.1} parent=0 // pred_check
    _
  $region43: #{tpu_custom_call.1} parent=0 // pred_check_branch
    %6125 = sbr.rel (0) target = $region45
  $region44: #{tpu_custom_call.1} parent=0 // pred_region
    _
  $region45: #{tpu_custom_call.1} parent=0 // pred_fallthru
    _

</llo_original>
